<compile_context>
chip_gen: v7x
topology: tpu7x:2x2x1
jax: 0.10.0
libtpu: 0.0.40
codegen_flags: <defaults>
</compile_context>

<pallas_src>
import functools

import jax
import jax.numpy as jnp
from jax import lax
from jax.experimental import pallas as pl
from jax.experimental.pallas import tpu as pltpu


# ---------------------------------------------------------------------------
# Kernel
# ---------------------------------------------------------------------------
def _predictive_mimo_kernel(x_ref, keep_ref, w_in_ref, b_in_ref, wb_ref, bb_ref,
                            o_ref, xsrc_ref, src_ref, h_ref,
                            *, H, W, Cin, nf, n_blocks, M):
    """Fused conv_in + n_blocks x (conv1 + LeakyReLU + conv2 + residual add).

    Layout ("padded-flat"): the spatially zero-padded image (H+2, W+2) is
    flattened to P positions on the lane axis; channels sit on sublanes.
    A 3x3 tap (dy, dx) is then just a static lane shift by (dy-1)*(W+2)+(dx-1),
    realized as a slice of a margined VMEM scratch.

    x_ref   : (1, Cin, P)  f32   zero-padded, flattened input (one batch elem)
    keep_ref: (1, P)       f32   1.0 on real pixels, 0.0 on the pad ring
    w_in_ref: (nf, 9*Cin)  bf16  conv_in weights, [co, tap*Cin + ci]
    b_in_ref: (nf, 1)      f32
    wb_ref  : (2*n_blocks, nf, 9*nf) bf16  stacked block weights
    bb_ref  : (2*n_blocks, nf, 1)    f32   stacked block biases
    o_ref   : (1, nf, P)   f32
    xsrc_ref: (Cin, 2*M+P) bf16  margined conv_in source scratch
    src_ref : (nf,  2*M+P) bf16  margined block-conv source scratch
    h_ref   : (nf, P)      f32   running residual state
    """
    Wp = W + 2
    P = (H + 2) * Wp
    keep = keep_ref[...]                                   # (1, P)

    # Clear only the scratch margins (cheap; interiors are always rewritten and
    # margins are never read when producing valid output columns).
    xsrc_ref[:, :M] = jnp.zeros((Cin, M), jnp.bfloat16)
    xsrc_ref[:, M + P:] = jnp.zeros((Cin, M), jnp.bfloat16)
    src_ref[:, :M] = jnp.zeros((nf, M), jnp.bfloat16)
    src_ref[:, M + P:] = jnp.zeros((nf, M), jnp.bfloat16)

    def conv3x3(src, w_slab, b_col, cin):
        """9 per-tap MXU matmuls on lane-shifted slices of the margined source.
        src: (cin, 2*M+P) bf16 scratch ref; w_slab: (nf, 9*cin) bf16 value;
        b_col: (nf, 1) f32.  Returns (nf, P) f32 (pad columns = don't-care)."""
        acc = jnp.zeros((nf, P), jnp.float32)
        for k in range(9):
            dy, dx = k // 3, k % 3
            off = (dy - 1) * Wp + (dx - 1)
            shifted = src[:, M + off: M + off + P]          # (cin, P) bf16
            w_k = w_slab[:, k * cin:(k + 1) * cin]          # (nf, cin) bf16
            acc = acc + jnp.dot(w_k, shifted,
                                preferred_element_type=jnp.float32)
        return acc + b_col

    # conv_in (Cin is tiny, so the 9 small K=Cin matmuls are negligible work).
    xsrc_ref[:, M:M + P] = x_ref[0].astype(jnp.bfloat16)
    h0 = conv3x3(xsrc_ref, w_in_ref[...], b_in_ref[...], Cin)
    h_ref[...] = h0 * keep                                  # zero pad columns

    # Residual blocks: rolled loop, weights indexed dynamically, everything
    # stays VMEM-resident.
    def block_body(i, carry):
        h = h_ref[...]                                      # (nf, P) f32
        src_ref[:, M:M + P] = h.astype(jnp.bfloat16)
        t = conv3x3(src_ref, wb_ref[2 * i], bb_ref[2 * i], nf)
        t = jnp.maximum(t, 0.2 * t)                         # LeakyReLU(0.2), f32
        src_ref[:, M:M + P] = (t * keep).astype(jnp.bfloat16)
        out = conv3x3(src_ref, wb_ref[2 * i + 1], bb_ref[2 * i + 1], nf)
        h_ref[...] = (h + out) * keep                       # aligned residual add
        return carry

    lax.fori_loop(0, n_blocks, block_body, 0)

    o_ref[0] = h_ref[...].astype(o_ref.dtype)


# ---------------------------------------------------------------------------
# Wrapper
# ---------------------------------------------------------------------------
def _padded_bytes(shape, dtype):
    """Rough VMEM footprint of a buffer after (sublane, 128-lane) tiling."""
    item = jnp.dtype(dtype).itemsize
    sub_tile = 8 * (4 // item)          # f32 -> 8, bf16 -> 16
    s = (1,) * max(0, 2 - len(shape)) + tuple(int(d) for d in shape)
    lead = 1
    for d in s[:-2]:
        lead *= d
    sub = -(-s[-2] // sub_tile) * sub_tile
    lane = -(-s[-1] // 128) * 128
    return lead * sub * lane * item


def predictive_module_mimo(x, params):
    """x: (N, H, W, channel_in) NHWC float32.  Returns (N, H, W, nf) float32."""
    N, H, W, Cin = x.shape
    w_in = params["conv_in_w"]                        # (3, 3, Cin, nf) HWIO
    nf = int(w_in.shape[-1])
    blocks = params["blocks"]
    n_blocks = len(blocks)
    assert n_blocks >= 1

    Hp, Wp = H + 2, W + 2
    P = Hp * Wp
    M = ((W + 3 + 127) // 128) * 128                  # scratch margin >= max shift

    def to_slab(w):                                   # HWIO (3,3,ci,co) -> (co, 9*ci)
        ci, co = int(w.shape[2]), int(w.shape[3])
        return (jnp.transpose(w, (3, 0, 1, 2))
                .reshape(co, 9 * ci).astype(jnp.bfloat16))

    w_in_s = to_slab(w_in)                                            # (nf, 9*Cin)
    b_in = params["conv_in_b"].reshape(nf, 1).astype(jnp.float32)     # (nf, 1)
    wb = jnp.stack([to_slab(w) for (w1, _, w2, _) in blocks for w in (w1, w2)])
    bb = jnp.stack([b.reshape(nf, 1) for (_, b1, _, b2) in blocks
                    for b in (b1, b2)]).astype(jnp.float32)

    # NHWC -> channels-major, zero-pad the spatial border by 1 and flatten the
    # padded spatial grid ("padded-flat" layout: P on the lane axis).
    x_p = jnp.pad(jnp.transpose(x, (0, 3, 1, 2)).astype(jnp.float32),
                  ((0, 0), (0, 0), (1, 1), (1, 1))).reshape(N, Cin, P)
    keep = (jnp.zeros((Hp, Wp), jnp.float32)
            .at[1:H + 1, 1:W + 1].set(1.0).reshape(1, P))

    kernel = functools.partial(_predictive_mimo_kernel, H=H, W=W, Cin=Cin,
                               nf=nf, n_blocks=n_blocks, M=M)

    # VMEM budget derived from the actual (tile-padded) buffer sizes.
    buf_bytes = (
        2 * _padded_bytes((1, Cin, P), jnp.float32)         # x block (2 buffers)
        + 2 * _padded_bytes((1, P), jnp.float32)            # keep mask
        + 2 * _padded_bytes((nf, 9 * Cin), jnp.bfloat16)    # conv_in weights
        + 2 * _padded_bytes((nf, 1), jnp.float32)
        + 2 * _padded_bytes((2 * n_blocks, nf, 9 * nf), jnp.bfloat16)
        + 2 * _padded_bytes((2 * n_blocks, nf, 1), jnp.float32)
        + 2 * _padded_bytes((1, nf, P), jnp.float32)        # output block
        + _padded_bytes((Cin, 2 * M + P), jnp.bfloat16)     # scratches
        + _padded_bytes((nf, 2 * M + P), jnp.bfloat16)
        + _padded_bytes((nf, P), jnp.float32))
    vmem_limit = max(32 * 1024 * 1024,
                     min(100 * 1024 * 1024, int(1.5 * buf_bytes) + (4 << 20)))

    flops = 2 * N * P * 9 * (Cin * nf + 2 * n_blocks * nf * nf)
    # Weights counted once (advisory; the (N,) grid logically revisits them).
    bytes_accessed = (N * Cin * P * 4 + P * 4 + N * nf * P * 4
                      + (nf * 9 * Cin + 2 * n_blocks * nf * 9 * nf) * 2
                      + (nf + 2 * n_blocks * nf) * 4)

    out_p = pl.pallas_call(
        kernel,
        out_shape=jax.ShapeDtypeStruct((N, nf, P), jnp.float32),
        grid=(N,),
        in_specs=[
            pl.BlockSpec((1, Cin, P), lambda n: (n, 0, 0)),
            pl.BlockSpec((1, P), lambda n: (0, 0)),
            pl.BlockSpec((nf, 9 * Cin), lambda n: (0, 0)),
            pl.BlockSpec((nf, 1), lambda n: (0, 0)),
            pl.BlockSpec((2 * n_blocks, nf, 9 * nf), lambda n: (0, 0, 0)),
            pl.BlockSpec((2 * n_blocks, nf, 1), lambda n: (0, 0, 0)),
        ],
        out_specs=pl.BlockSpec((1, nf, P), lambda n: (n, 0, 0)),
        scratch_shapes=[
            pltpu.VMEM((Cin, 2 * M + P), jnp.bfloat16),   # margined conv_in source
            pltpu.VMEM((nf, 2 * M + P), jnp.bfloat16),    # margined block-conv source
            pltpu.VMEM((nf, P), jnp.float32),             # running residual state h
        ],
        compiler_params=pltpu.CompilerParams(
            dimension_semantics=("parallel",),
            vmem_limit_bytes=vmem_limit,
        ),
        cost_estimate=pl.CostEstimate(flops=flops, transcendentals=0,
                                      bytes_accessed=bytes_accessed),
    )(x_p, keep, w_in_s, b_in, wb, bb)

    out = out_p.reshape(N, nf, Hp, Wp)[:, :, 1:H + 1, 1:W + 1]
    return jnp.transpose(out, (0, 2, 3, 1))               # back to NHWC


# ---------------------------------------------------------------------------
# Parameter init (Xavier scaled by 0.1 for the residual blocks, as in PyTorch)
# ---------------------------------------------------------------------------
def init_params(key, channel_in, nf, block_num_rbm):
    def xavier(k, cin, cout, scale):
        fan_in, fan_out = cin * 9, cout * 9
        std = (2.0 / (fan_in + fan_out)) ** 0.5
        w = scale * std * jax.random.normal(k, (3, 3, cin, cout), jnp.float32)
        return w.astype(jnp.bfloat16).astype(jnp.float32)   # bf16-representable

    keys = jax.random.split(key, 2 + 4 * block_num_rbm)
    params = {
        "conv_in_w": xavier(keys[0], channel_in, nf, 1.0),
        "conv_in_b": 0.01 * jax.random.normal(keys[1], (nf,), jnp.float32),
        "blocks": [],
    }
    idx = 2
    for _ in range(block_num_rbm):
        w1 = xavier(keys[idx], nf, nf, 0.1)
        b1 = 0.01 * jax.random.normal(keys[idx + 1], (nf,), jnp.float32)
        w2 = xavier(keys[idx + 2], nf, nf, 0.1)
        b2 = 0.01 * jax.random.normal(keys[idx + 3], (nf,), jnp.float32)
        idx += 4
        params["blocks"].append((w1, b1, w2, b2))
    return params


# ---------------------------------------------------------------------------
# Pure-JAX reference (for correctness check)
# ---------------------------------------------------------------------------
def _conv_ref(x, w, b):
    y = lax.conv_general_dilated(
        x, w, (1, 1), "SAME",
        dimension_numbers=("NHWC", "HWIO", "NHWC"),
        precision=lax.Precision.HIGHEST)
    return y + b


def _forward_ref(x, params):
    h = _conv_ref(x, params["conv_in_w"], params["conv_in_b"])
    for (w1, b1, w2, b2) in params["blocks"]:
        t = _conv_ref(h, w1, b1)
        t = jnp.where(t >= 0, t, 0.2 * t)
        h = h + _conv_ref(t, w2, b2)
    return h


if __name__ == "__main__":
    # Small spatial/batch shapes; block_num_rbm=13 matches the module default
    # (the rolled block loop keeps the program small regardless of depth).
    N, H, W = 2, 16, 16
    channel_in, nf, block_num_rbm = 4, 32, 13

    key = jax.random.PRNGKey(0)
    kx, kp = jax.random.split(key)
    x = jax.random.normal(kx, (N, H, W, channel_in), jnp.float32)
    x = x.astype(jnp.bfloat16).astype(jnp.float32)   # bf16-representable inputs
    params = init_params(kp, channel_in, nf, block_num_rbm)

    out = predictive_module_mimo(x, params)
    out = jax.block_until_ready(out)
    assert out.shape == (N, H, W, nf)

    ref = _forward_ref(x, params)
    max_err = float(jnp.max(jnp.abs(out - ref)))
    assert jnp.allclose(out, ref, atol=2e-2, rtol=2e-2), (
        f"mismatch vs reference (max abs err = {max_err})")
    print("KERNEL_OK")
</pallas_src>

<mosaic_0001>
module attributes {stable_mosaic.version = 11 : i64} {
  func.func @_predictive_mimo_kernel(%arg0: i32, %arg1: memref<1x4x324xf32, #tpu.memory_space<vmem>>, %arg2: memref<1x324xf32, #tpu.memory_space<vmem>>, %arg3: memref<32x36xbf16, #tpu.memory_space<vmem>>, %arg4: memref<32x1xf32, #tpu.memory_space<vmem>>, %arg5: memref<26x32x288xbf16, #tpu.memory_space<vmem>>, %arg6: memref<26x32x1xf32, #tpu.memory_space<vmem>>, %arg7: memref<1x32x324xf32, #tpu.memory_space<vmem>>, %arg8: memref<4x580xbf16, #tpu.memory_space<vmem>>, %arg9: memref<32x580xbf16, #tpu.memory_space<vmem>>, %arg10: memref<32x324xf32, #tpu.memory_space<vmem>>) attributes {dimension_semantics = [#tpu.dimension_semantics<parallel>], iteration_bounds = array<i64: 2>, scalar_prefetch = 0 : i64, scratch_operands = 3 : i64, tpu.core_type = #tpu.core_type<tc>, window_params = [{transform_indices = @transform_0, window_bounds = array<i64: 1, 4, 324>}, {pipeline_mode = #tpu.pipeline_mode<synchronous>, transform_indices = @transform_1, window_bounds = array<i64: 1, 324>}, {pipeline_mode = #tpu.pipeline_mode<synchronous>, transform_indices = @transform_2, window_bounds = array<i64: 32, 36>}, {pipeline_mode = #tpu.pipeline_mode<synchronous>, transform_indices = @transform_3, window_bounds = array<i64: 32, 1>}, {pipeline_mode = #tpu.pipeline_mode<synchronous>, transform_indices = @transform_4, window_bounds = array<i64: 26, 32, 288>}, {pipeline_mode = #tpu.pipeline_mode<synchronous>, transform_indices = @transform_5, window_bounds = array<i64: 26, 32, 1>}, {transform_indices = @transform_6, window_bounds = array<i64: 1, 32, 324>}]} {
    %c0 = arith.constant 0 : index
    %c0_0 = arith.constant 0 : index
    %0 = vector.load %arg2[%c0, %c0_0] : memref<1x324xf32, #tpu.memory_space<vmem>>, vector<1x324xf32>
    %cst = arith.constant 0.000000e+00 : bf16
    %1 = vector.broadcast %cst : bf16 to vector<4x128xbf16>
    %c0_1 = arith.constant 0 : index
    %c0_2 = arith.constant 0 : index
    %2 = vector.load %arg8[%c0_1, %c0_2] : memref<4x580xbf16, #tpu.memory_space<vmem>>, vector<4x128xbf16>
    tpu.vector_store %arg8[%c0_1, %c0_2], %1 {strides = array<i32>} : memref<4x580xbf16, #tpu.memory_space<vmem>>, vector<4x128xbf16>,
    %cst_3 = arith.constant 0.000000e+00 : bf16
    %3 = vector.broadcast %cst_3 : bf16 to vector<4x128xbf16>
    %c0_4 = arith.constant 0 : index
    %c452 = arith.constant 452 : index
    %4 = vector.load %arg8[%c0_4, %c452] : memref<4x580xbf16, #tpu.memory_space<vmem>>, vector<4x128xbf16>
    tpu.vector_store %arg8[%c0_4, %c452], %3 {strides = array<i32>} : memref<4x580xbf16, #tpu.memory_space<vmem>>, vector<4x128xbf16>,
    %cst_5 = arith.constant 0.000000e+00 : bf16
    %5 = vector.broadcast %cst_5 : bf16 to vector<32x128xbf16>
    %c0_6 = arith.constant 0 : index
    %c0_7 = arith.constant 0 : index
    %6 = vector.load %arg9[%c0_6, %c0_7] : memref<32x580xbf16, #tpu.memory_space<vmem>>, vector<32x128xbf16>
    tpu.vector_store %arg9[%c0_6, %c0_7], %5 {strides = array<i32>} : memref<32x580xbf16, #tpu.memory_space<vmem>>, vector<32x128xbf16>,
    %cst_8 = arith.constant 0.000000e+00 : bf16
    %7 = vector.broadcast %cst_8 : bf16 to vector<32x128xbf16>
    %c0_9 = arith.constant 0 : index
    %c452_10 = arith.constant 452 : index
    %8 = vector.load %arg9[%c0_9, %c452_10] : memref<32x580xbf16, #tpu.memory_space<vmem>>, vector<32x128xbf16>
    tpu.vector_store %arg9[%c0_9, %c452_10], %7 {strides = array<i32>} : memref<32x580xbf16, #tpu.memory_space<vmem>>, vector<32x128xbf16>,
    %c0_11 = arith.constant 0 : index
    %c0_12 = arith.constant 0 : index
    %c0_13 = arith.constant 0 : index
    %9 = vector.load %arg1[%c0_11, %c0_12, %c0_13] : memref<1x4x324xf32, #tpu.memory_space<vmem>>, vector<1x4x324xf32>
    %10 = vector.shape_cast %9 : vector<1x4x324xf32> to vector<4x324xf32>
    %11 = arith.truncf %10 : vector<4x324xf32> to vector<4x324xbf16>
    %c0_14 = arith.constant 0 : index
    %c128 = arith.constant 128 : index
    %12 = vector.load %arg8[%c0_14, %c128] : memref<4x580xbf16, #tpu.memory_space<vmem>>, vector<4x324xbf16>
    tpu.vector_store %arg8[%c0_14, %c128], %11 {strides = array<i32>} : memref<4x580xbf16, #tpu.memory_space<vmem>>, vector<4x324xbf16>,
    %c0_15 = arith.constant 0 : index
    %c0_16 = arith.constant 0 : index
    %13 = vector.load %arg3[%c0_15, %c0_16] : memref<32x36xbf16, #tpu.memory_space<vmem>>, vector<32x36xbf16>
    %c0_17 = arith.constant 0 : index
    %c0_18 = arith.constant 0 : index
    %14 = vector.load %arg4[%c0_17, %c0_18] : memref<32x1xf32, #tpu.memory_space<vmem>>, vector<32x1xf32>
    %cst_19 = arith.constant 0.000000e+00 : f32
    %15 = vector.broadcast %cst_19 : f32 to vector<32x324xf32>
    %c0_20 = arith.constant 0 : index
    %c109 = arith.constant 109 : index
    %16 = vector.load %arg8[%c0_20, %c109] : memref<4x580xbf16, #tpu.memory_space<vmem>>, vector<4x324xbf16>
    %17 = vector.extract_strided_slice %13 {offsets = [0, 0], sizes = [32, 4], strides = [1, 1]} : vector<32x36xbf16> to vector<32x4xbf16>
    %cst_21 = arith.constant dense<0.000000e+00> : vector<32x324xf32>
    %18 = tpu.matmul %17, %16, %cst_21 {dimension_numbers = #tpu.dot_dimension_numbers<[1], [0], [0], [1], [0, 0, 1, 1], [], []>} : vector<32x4xbf16>, vector<4x324xbf16>, vector<32x324xf32> -> vector<32x324xf32>
    %19 = arith.addf %15, %18 : vector<32x324xf32>
    %c0_22 = arith.constant 0 : index
    %c110 = arith.constant 110 : index
    %20 = vector.load %arg8[%c0_22, %c110] : memref<4x580xbf16, #tpu.memory_space<vmem>>, vector<4x324xbf16>
    %21 = vector.extract_strided_slice %13 {offsets = [0, 4], sizes = [32, 4], strides = [1, 1]} : vector<32x36xbf16> to vector<32x4xbf16>
    %cst_23 = arith.constant dense<0.000000e+00> : vector<32x324xf32>
    %22 = tpu.matmul %21, %20, %cst_23 {dimension_numbers = #tpu.dot_dimension_numbers<[1], [0], [0], [1], [0, 0, 1, 1], [], []>} : vector<32x4xbf16>, vector<4x324xbf16>, vector<32x324xf32> -> vector<32x324xf32>
    %23 = arith.addf %19, %22 : vector<32x324xf32>
    %c0_24 = arith.constant 0 : index
    %c111 = arith.constant 111 : index
    %24 = vector.load %arg8[%c0_24, %c111] : memref<4x580xbf16, #tpu.memory_space<vmem>>, vector<4x324xbf16>
    %25 = vector.extract_strided_slice %13 {offsets = [0, 8], sizes = [32, 4], strides = [1, 1]} : vector<32x36xbf16> to vector<32x4xbf16>
    %cst_25 = arith.constant dense<0.000000e+00> : vector<32x324xf32>
    %26 = tpu.matmul %25, %24, %cst_25 {dimension_numbers = #tpu.dot_dimension_numbers<[1], [0], [0], [1], [0, 0, 1, 1], [], []>} : vector<32x4xbf16>, vector<4x324xbf16>, vector<32x324xf32> -> vector<32x324xf32>
    %27 = arith.addf %23, %26 : vector<32x324xf32>
    %c0_26 = arith.constant 0 : index
    %c127 = arith.constant 127 : index
    %28 = vector.load %arg8[%c0_26, %c127] : memref<4x580xbf16, #tpu.memory_space<vmem>>, vector<4x324xbf16>
    %29 = vector.extract_strided_slice %13 {offsets = [0, 12], sizes = [32, 4], strides = [1, 1]} : vector<32x36xbf16> to vector<32x4xbf16>
    %cst_27 = arith.constant dense<0.000000e+00> : vector<32x324xf32>
    %30 = tpu.matmul %29, %28, %cst_27 {dimension_numbers = #tpu.dot_dimension_numbers<[1], [0], [0], [1], [0, 0, 1, 1], [], []>} : vector<32x4xbf16>, vector<4x324xbf16>, vector<32x324xf32> -> vector<32x324xf32>
    %31 = arith.addf %27, %30 : vector<32x324xf32>
    %c0_28 = arith.constant 0 : index
    %c128_29 = arith.constant 128 : index
    %32 = vector.load %arg8[%c0_28, %c128_29] : memref<4x580xbf16, #tpu.memory_space<vmem>>, vector<4x324xbf16>
    %33 = vector.extract_strided_slice %13 {offsets = [0, 16], sizes = [32, 4], strides = [1, 1]} : vector<32x36xbf16> to vector<32x4xbf16>
    %cst_30 = arith.constant dense<0.000000e+00> : vector<32x324xf32>
    %34 = tpu.matmul %33, %32, %cst_30 {dimension_numbers = #tpu.dot_dimension_numbers<[1], [0], [0], [1], [0, 0, 1, 1], [], []>} : vector<32x4xbf16>, vector<4x324xbf16>, vector<32x324xf32> -> vector<32x324xf32>
    %35 = arith.addf %31, %34 : vector<32x324xf32>
    %c0_31 = arith.constant 0 : index
    %c129 = arith.constant 129 : index
    %36 = vector.load %arg8[%c0_31, %c129] : memref<4x580xbf16, #tpu.memory_space<vmem>>, vector<4x324xbf16>
    %37 = vector.extract_strided_slice %13 {offsets = [0, 20], sizes = [32, 4], strides = [1, 1]} : vector<32x36xbf16> to vector<32x4xbf16>
    %cst_32 = arith.constant dense<0.000000e+00> : vector<32x324xf32>
    %38 = tpu.matmul %37, %36, %cst_32 {dimension_numbers = #tpu.dot_dimension_numbers<[1], [0], [0], [1], [0, 0, 1, 1], [], []>} : vector<32x4xbf16>, vector<4x324xbf16>, vector<32x324xf32> -> vector<32x324xf32>
    %39 = arith.addf %35, %38 : vector<32x324xf32>
    %c0_33 = arith.constant 0 : index
    %c145 = arith.constant 145 : index
    %40 = vector.load %arg8[%c0_33, %c145] : memref<4x580xbf16, #tpu.memory_space<vmem>>, vector<4x324xbf16>
    %41 = vector.extract_strided_slice %13 {offsets = [0, 24], sizes = [32, 4], strides = [1, 1]} : vector<32x36xbf16> to vector<32x4xbf16>
    %cst_34 = arith.constant dense<0.000000e+00> : vector<32x324xf32>
    %42 = tpu.matmul %41, %40, %cst_34 {dimension_numbers = #tpu.dot_dimension_numbers<[1], [0], [0], [1], [0, 0, 1, 1], [], []>} : vector<32x4xbf16>, vector<4x324xbf16>, vector<32x324xf32> -> vector<32x324xf32>
    %43 = arith.addf %39, %42 : vector<32x324xf32>
    %c0_35 = arith.constant 0 : index
    %c146 = arith.constant 146 : index
    %44 = vector.load %arg8[%c0_35, %c146] : memref<4x580xbf16, #tpu.memory_space<vmem>>, vector<4x324xbf16>
    %45 = vector.extract_strided_slice %13 {offsets = [0, 28], sizes = [32, 4], strides = [1, 1]} : vector<32x36xbf16> to vector<32x4xbf16>
    %cst_36 = arith.constant dense<0.000000e+00> : vector<32x324xf32>
    %46 = tpu.matmul %45, %44, %cst_36 {dimension_numbers = #tpu.dot_dimension_numbers<[1], [0], [0], [1], [0, 0, 1, 1], [], []>} : vector<32x4xbf16>, vector<4x324xbf16>, vector<32x324xf32> -> vector<32x324xf32>
    %47 = arith.addf %43, %46 : vector<32x324xf32>
    %c0_37 = arith.constant 0 : index
    %c147 = arith.constant 147 : index
    %48 = vector.load %arg8[%c0_37, %c147] : memref<4x580xbf16, #tpu.memory_space<vmem>>, vector<4x324xbf16>
    %49 = vector.extract_strided_slice %13 {offsets = [0, 32], sizes = [32, 4], strides = [1, 1]} : vector<32x36xbf16> to vector<32x4xbf16>
    %cst_38 = arith.constant dense<0.000000e+00> : vector<32x324xf32>
    %50 = tpu.matmul %49, %48, %cst_38 {dimension_numbers = #tpu.dot_dimension_numbers<[1], [0], [0], [1], [0, 0, 1, 1], [], []>} : vector<32x4xbf16>, vector<4x324xbf16>, vector<32x324xf32> -> vector<32x324xf32>
    %51 = arith.addf %47, %50 : vector<32x324xf32>
    %52 = vector.broadcast %14 : vector<32x1xf32> to vector<32x324xf32>
    %53 = arith.addf %51, %52 : vector<32x324xf32>
    %54 = vector.broadcast %0 : vector<1x324xf32> to vector<32x324xf32>
    %55 = arith.mulf %53, %54 : vector<32x324xf32>
    %c0_39 = arith.constant 0 : index
    %c0_40 = arith.constant 0 : index
    %56 = vector.load %arg10[%c0_39, %c0_40] : memref<32x324xf32, #tpu.memory_space<vmem>>, vector<32x324xf32>
    tpu.vector_store %arg10[%c0_39, %c0_40], %55 {strides = array<i32>} : memref<32x324xf32, #tpu.memory_space<vmem>>, vector<32x324xf32>,
    %c0_i32 = arith.constant 0 : i32
    %c13_i32 = arith.constant 13 : i32
    %57 = arith.addi %c0_i32, %c13_i32 : i32
    %c1_i32 = arith.constant 1 : i32
    scf.for %arg11 = %c0_i32 to %57 step %c1_i32  : i32 {
      %c0_47 = arith.constant 0 : index
      %c0_48 = arith.constant 0 : index
      %62 = vector.load %arg10[%c0_47, %c0_48] : memref<32x324xf32, #tpu.memory_space<vmem>>, vector<32x324xf32>
      %63 = arith.truncf %62 : vector<32x324xf32> to vector<32x324xbf16>
      %c0_49 = arith.constant 0 : index
      %c128_50 = arith.constant 128 : index
      %64 = vector.load %arg9[%c0_49, %c128_50] : memref<32x580xbf16, #tpu.memory_space<vmem>>, vector<32x324xbf16>
      tpu.vector_store %arg9[%c0_49, %c128_50], %63 {strides = array<i32>} : memref<32x580xbf16, #tpu.memory_space<vmem>>, vector<32x324xbf16>,
      %c2_i32 = arith.constant 2 : i32
      %65 = arith.muli %c2_i32, %arg11 : i32
      %66 = arith.index_cast %65 : i32 to index
      %c0_51 = arith.constant 0 : index
      %c0_52 = arith.constant 0 : index
      %67 = vector.load %arg5[%66, %c0_51, %c0_52] : memref<26x32x288xbf16, #tpu.memory_space<vmem>>, vector<1x32x288xbf16>
      %68 = vector.shape_cast %67 : vector<1x32x288xbf16> to vector<32x288xbf16>
      %c2_i32_53 = arith.constant 2 : i32
      %69 = arith.muli %c2_i32_53, %arg11 : i32
      %70 = arith.index_cast %69 : i32 to index
      %c0_54 = arith.constant 0 : index
      %c0_55 = arith.constant 0 : index
      %71 = vector.load %arg6[%70, %c0_54, %c0_55] : memref<26x32x1xf32, #tpu.memory_space<vmem>>, vector<1x32x1xf32>
      %72 = vector.shape_cast %71 : vector<1x32x1xf32> to vector<32x1xf32>
      %cst_56 = arith.constant 0.000000e+00 : f32
      %73 = vector.broadcast %cst_56 : f32 to vector<32x324xf32>
      %c0_57 = arith.constant 0 : index
      %c109_58 = arith.constant 109 : index
      %74 = vector.load %arg9[%c0_57, %c109_58] : memref<32x580xbf16, #tpu.memory_space<vmem>>, vector<32x324xbf16>
      %75 = vector.extract_strided_slice %68 {offsets = [0, 0], sizes = [32, 32], strides = [1, 1]} : vector<32x288xbf16> to vector<32x32xbf16>
      %cst_59 = arith.constant dense<0.000000e+00> : vector<32x324xf32>
      %76 = tpu.matmul %75, %74, %cst_59 {dimension_numbers = #tpu.dot_dimension_numbers<[1], [0], [0], [1], [0, 0, 1, 1], [], []>} : vector<32x32xbf16>, vector<32x324xbf16>, vector<32x324xf32> -> vector<32x324xf32>
      %77 = arith.addf %73, %76 : vector<32x324xf32>
      %c0_60 = arith.constant 0 : index
      %c110_61 = arith.constant 110 : index
      %78 = vector.load %arg9[%c0_60, %c110_61] : memref<32x580xbf16, #tpu.memory_space<vmem>>, vector<32x324xbf16>
      %79 = vector.extract_strided_slice %68 {offsets = [0, 32], sizes = [32, 32], strides = [1, 1]} : vector<32x288xbf16> to vector<32x32xbf16>
      %cst_62 = arith.constant dense<0.000000e+00> : vector<32x324xf32>
      %80 = tpu.matmul %79, %78, %cst_62 {dimension_numbers = #tpu.dot_dimension_numbers<[1], [0], [0], [1], [0, 0, 1, 1], [], []>} : vector<32x32xbf16>, vector<32x324xbf16>, vector<32x324xf32> -> vector<32x324xf32>
      %81 = arith.addf %77, %80 : vector<32x324xf32>
      %c0_63 = arith.constant 0 : index
      %c111_64 = arith.constant 111 : index
      %82 = vector.load %arg9[%c0_63, %c111_64] : memref<32x580xbf16, #tpu.memory_space<vmem>>, vector<32x324xbf16>
      %83 = vector.extract_strided_slice %68 {offsets = [0, 64], sizes = [32, 32], strides = [1, 1]} : vector<32x288xbf16> to vector<32x32xbf16>
      %cst_65 = arith.constant dense<0.000000e+00> : vector<32x324xf32>
      %84 = tpu.matmul %83, %82, %cst_65 {dimension_numbers = #tpu.dot_dimension_numbers<[1], [0], [0], [1], [0, 0, 1, 1], [], []>} : vector<32x32xbf16>, vector<32x324xbf16>, vector<32x324xf32> -> vector<32x324xf32>
      %85 = arith.addf %81, %84 : vector<32x324xf32>
      %c0_66 = arith.constant 0 : index
      %c127_67 = arith.constant 127 : index
      %86 = vector.load %arg9[%c0_66, %c127_67] : memref<32x580xbf16, #tpu.memory_space<vmem>>, vector<32x324xbf16>
      %87 = vector.extract_strided_slice %68 {offsets = [0, 96], sizes = [32, 32], strides = [1, 1]} : vector<32x288xbf16> to vector<32x32xbf16>
      %cst_68 = arith.constant dense<0.000000e+00> : vector<32x324xf32>
      %88 = tpu.matmul %87, %86, %cst_68 {dimension_numbers = #tpu.dot_dimension_numbers<[1], [0], [0], [1], [0, 0, 1, 1], [], []>} : vector<32x32xbf16>, vector<32x324xbf16>, vector<32x324xf32> -> vector<32x324xf32>
      %89 = arith.addf %85, %88 : vector<32x324xf32>
      %c0_69 = arith.constant 0 : index
      %c128_70 = arith.constant 128 : index
      %90 = vector.load %arg9[%c0_69, %c128_70] : memref<32x580xbf16, #tpu.memory_space<vmem>>, vector<32x324xbf16>
      %91 = vector.extract_strided_slice %68 {offsets = [0, 128], sizes = [32, 32], strides = [1, 1]} : vector<32x288xbf16> to vector<32x32xbf16>
      %cst_71 = arith.constant dense<0.000000e+00> : vector<32x324xf32>
      %92 = tpu.matmul %91, %90, %cst_71 {dimension_numbers = #tpu.dot_dimension_numbers<[1], [0], [0], [1], [0, 0, 1, 1], [], []>} : vector<32x32xbf16>, vector<32x324xbf16>, vector<32x324xf32> -> vector<32x324xf32>
      %93 = arith.addf %89, %92 : vector<32x324xf32>
      %c0_72 = arith.constant 0 : index
      %c129_73 = arith.constant 129 : index
      %94 = vector.load %arg9[%c0_72, %c129_73] : memref<32x580xbf16, #tpu.memory_space<vmem>>, vector<32x324xbf16>
      %95 = vector.extract_strided_slice %68 {offsets = [0, 160], sizes = [32, 32], strides = [1, 1]} : vector<32x288xbf16> to vector<32x32xbf16>
      %cst_74 = arith.constant dense<0.000000e+00> : vector<32x324xf32>
      %96 = tpu.matmul %95, %94, %cst_74 {dimension_numbers = #tpu.dot_dimension_numbers<[1], [0], [0], [1], [0, 0, 1, 1], [], []>} : vector<32x32xbf16>, vector<32x324xbf16>, vector<32x324xf32> -> vector<32x324xf32>
      %97 = arith.addf %93, %96 : vector<32x324xf32>
      %c0_75 = arith.constant 0 : index
      %c145_76 = arith.constant 145 : index
      %98 = vector.load %arg9[%c0_75, %c145_76] : memref<32x580xbf16, #tpu.memory_space<vmem>>, vector<32x324xbf16>
      %99 = vector.extract_strided_slice %68 {offsets = [0, 192], sizes = [32, 32], strides = [1, 1]} : vector<32x288xbf16> to vector<32x32xbf16>
      %cst_77 = arith.constant dense<0.000000e+00> : vector<32x324xf32>
      %100 = tpu.matmul %99, %98, %cst_77 {dimension_numbers = #tpu.dot_dimension_numbers<[1], [0], [0], [1], [0, 0, 1, 1], [], []>} : vector<32x32xbf16>, vector<32x324xbf16>, vector<32x324xf32> -> vector<32x324xf32>
      %101 = arith.addf %97, %100 : vector<32x324xf32>
      %c0_78 = arith.constant 0 : index
      %c146_79 = arith.constant 146 : index
      %102 = vector.load %arg9[%c0_78, %c146_79] : memref<32x580xbf16, #tpu.memory_space<vmem>>, vector<32x324xbf16>
      %103 = vector.extract_strided_slice %68 {offsets = [0, 224], sizes = [32, 32], strides = [1, 1]} : vector<32x288xbf16> to vector<32x32xbf16>
      %cst_80 = arith.constant dense<0.000000e+00> : vector<32x324xf32>
      %104 = tpu.matmul %103, %102, %cst_80 {dimension_numbers = #tpu.dot_dimension_numbers<[1], [0], [0], [1], [0, 0, 1, 1], [], []>} : vector<32x32xbf16>, vector<32x324xbf16>, vector<32x324xf32> -> vector<32x324xf32>
      %105 = arith.addf %101, %104 : vector<32x324xf32>
      %c0_81 = arith.constant 0 : index
      %c147_82 = arith.constant 147 : index
      %106 = vector.load %arg9[%c0_81, %c147_82] : memref<32x580xbf16, #tpu.memory_space<vmem>>, vector<32x324xbf16>
      %107 = vector.extract_strided_slice %68 {offsets = [0, 256], sizes = [32, 32], strides = [1, 1]} : vector<32x288xbf16> to vector<32x32xbf16>
      %cst_83 = arith.constant dense<0.000000e+00> : vector<32x324xf32>
      %108 = tpu.matmul %107, %106, %cst_83 {dimension_numbers = #tpu.dot_dimension_numbers<[1], [0], [0], [1], [0, 0, 1, 1], [], []>} : vector<32x32xbf16>, vector<32x324xbf16>, vector<32x324xf32> -> vector<32x324xf32>
      %109 = arith.addf %105, %108 : vector<32x324xf32>
      %110 = vector.broadcast %72 : vector<32x1xf32> to vector<32x324xf32>
      %111 = arith.addf %109, %110 : vector<32x324xf32>
      %cst_84 = arith.constant 2.000000e-01 : f32
      %112 = vector.broadcast %cst_84 : f32 to vector<32x324xf32>
      %113 = arith.mulf %112, %111 : vector<32x324xf32>
      %114 = arith.maximumf %111, %113 : vector<32x324xf32>
      %115 = vector.broadcast %0 : vector<1x324xf32> to vector<32x324xf32>
      %116 = arith.mulf %114, %115 : vector<32x324xf32>
      %117 = arith.truncf %116 : vector<32x324xf32> to vector<32x324xbf16>
      %c0_85 = arith.constant 0 : index
      %c128_86 = arith.constant 128 : index
      %118 = vector.load %arg9[%c0_85, %c128_86] : memref<32x580xbf16, #tpu.memory_space<vmem>>, vector<32x324xbf16>
      tpu.vector_store %arg9[%c0_85, %c128_86], %117 {strides = array<i32>} : memref<32x580xbf16, #tpu.memory_space<vmem>>, vector<32x324xbf16>,
      %c2_i32_87 = arith.constant 2 : i32
      %119 = arith.muli %c2_i32_87, %arg11 : i32
      %c1_i32_88 = arith.constant 1 : i32
      %120 = arith.addi %119, %c1_i32_88 : i32
      %121 = arith.index_cast %120 : i32 to index
      %c0_89 = arith.constant 0 : index
      %c0_90 = arith.constant 0 : index
      %122 = vector.load %arg5[%121, %c0_89, %c0_90] : memref<26x32x288xbf16, #tpu.memory_space<vmem>>, vector<1x32x288xbf16>
      %123 = vector.shape_cast %122 : vector<1x32x288xbf16> to vector<32x288xbf16>
      %c2_i32_91 = arith.constant 2 : i32
      %124 = arith.muli %c2_i32_91, %arg11 : i32
      %c1_i32_92 = arith.constant 1 : i32
      %125 = arith.addi %124, %c1_i32_92 : i32
      %126 = arith.index_cast %125 : i32 to index
      %c0_93 = arith.constant 0 : index
      %c0_94 = arith.constant 0 : index
      %127 = vector.load %arg6[%126, %c0_93, %c0_94] : memref<26x32x1xf32, #tpu.memory_space<vmem>>, vector<1x32x1xf32>
      %128 = vector.shape_cast %127 : vector<1x32x1xf32> to vector<32x1xf32>
      %cst_95 = arith.constant 0.000000e+00 : f32
      %129 = vector.broadcast %cst_95 : f32 to vector<32x324xf32>
      %c0_96 = arith.constant 0 : index
      %c109_97 = arith.constant 109 : index
      %130 = vector.load %arg9[%c0_96, %c109_97] : memref<32x580xbf16, #tpu.memory_space<vmem>>, vector<32x324xbf16>
      %131 = vector.extract_strided_slice %123 {offsets = [0, 0], sizes = [32, 32], strides = [1, 1]} : vector<32x288xbf16> to vector<32x32xbf16>
      %cst_98 = arith.constant dense<0.000000e+00> : vector<32x324xf32>
      %132 = tpu.matmul %131, %130, %cst_98 {dimension_numbers = #tpu.dot_dimension_numbers<[1], [0], [0], [1], [0, 0, 1, 1], [], []>} : vector<32x32xbf16>, vector<32x324xbf16>, vector<32x324xf32> -> vector<32x324xf32>
      %133 = arith.addf %129, %132 : vector<32x324xf32>
      %c0_99 = arith.constant 0 : index
      %c110_100 = arith.constant 110 : index
      %134 = vector.load %arg9[%c0_99, %c110_100] : memref<32x580xbf16, #tpu.memory_space<vmem>>, vector<32x324xbf16>
      %135 = vector.extract_strided_slice %123 {offsets = [0, 32], sizes = [32, 32], strides = [1, 1]} : vector<32x288xbf16> to vector<32x32xbf16>
      %cst_101 = arith.constant dense<0.000000e+00> : vector<32x324xf32>
      %136 = tpu.matmul %135, %134, %cst_101 {dimension_numbers = #tpu.dot_dimension_numbers<[1], [0], [0], [1], [0, 0, 1, 1], [], []>} : vector<32x32xbf16>, vector<32x324xbf16>, vector<32x324xf32> -> vector<32x324xf32>
      %137 = arith.addf %133, %136 : vector<32x324xf32>
      %c0_102 = arith.constant 0 : index
      %c111_103 = arith.constant 111 : index
      %138 = vector.load %arg9[%c0_102, %c111_103] : memref<32x580xbf16, #tpu.memory_space<vmem>>, vector<32x324xbf16>
      %139 = vector.extract_strided_slice %123 {offsets = [0, 64], sizes = [32, 32], strides = [1, 1]} : vector<32x288xbf16> to vector<32x32xbf16>
      %cst_104 = arith.constant dense<0.000000e+00> : vector<32x324xf32>
      %140 = tpu.matmul %139, %138, %cst_104 {dimension_numbers = #tpu.dot_dimension_numbers<[1], [0], [0], [1], [0, 0, 1, 1], [], []>} : vector<32x32xbf16>, vector<32x324xbf16>, vector<32x324xf32> -> vector<32x324xf32>
      %141 = arith.addf %137, %140 : vector<32x324xf32>
      %c0_105 = arith.constant 0 : index
      %c127_106 = arith.constant 127 : index
      %142 = vector.load %arg9[%c0_105, %c127_106] : memref<32x580xbf16, #tpu.memory_space<vmem>>, vector<32x324xbf16>
      %143 = vector.extract_strided_slice %123 {offsets = [0, 96], sizes = [32, 32], strides = [1, 1]} : vector<32x288xbf16> to vector<32x32xbf16>
      %cst_107 = arith.constant dense<0.000000e+00> : vector<32x324xf32>
      %144 = tpu.matmul %143, %142, %cst_107 {dimension_numbers = #tpu.dot_dimension_numbers<[1], [0], [0], [1], [0, 0, 1, 1], [], []>} : vector<32x32xbf16>, vector<32x324xbf16>, vector<32x324xf32> -> vector<32x324xf32>
      %145 = arith.addf %141, %144 : vector<32x324xf32>
      %c0_108 = arith.constant 0 : index
      %c128_109 = arith.constant 128 : index
      %146 = vector.load %arg9[%c0_108, %c128_109] : memref<32x580xbf16, #tpu.memory_space<vmem>>, vector<32x324xbf16>
      %147 = vector.extract_strided_slice %123 {offsets = [0, 128], sizes = [32, 32], strides = [1, 1]} : vector<32x288xbf16> to vector<32x32xbf16>
      %cst_110 = arith.constant dense<0.000000e+00> : vector<32x324xf32>
      %148 = tpu.matmul %147, %146, %cst_110 {dimension_numbers = #tpu.dot_dimension_numbers<[1], [0], [0], [1], [0, 0, 1, 1], [], []>} : vector<32x32xbf16>, vector<32x324xbf16>, vector<32x324xf32> -> vector<32x324xf32>
      %149 = arith.addf %145, %148 : vector<32x324xf32>
      %c0_111 = arith.constant 0 : index
      %c129_112 = arith.constant 129 : index
      %150 = vector.load %arg9[%c0_111, %c129_112] : memref<32x580xbf16, #tpu.memory_space<vmem>>, vector<32x324xbf16>
      %151 = vector.extract_strided_slice %123 {offsets = [0, 160], sizes = [32, 32], strides = [1, 1]} : vector<32x288xbf16> to vector<32x32xbf16>
      %cst_113 = arith.constant dense<0.000000e+00> : vector<32x324xf32>
      %152 = tpu.matmul %151, %150, %cst_113 {dimension_numbers = #tpu.dot_dimension_numbers<[1], [0], [0], [1], [0, 0, 1, 1], [], []>} : vector<32x32xbf16>, vector<32x324xbf16>, vector<32x324xf32> -> vector<32x324xf32>
      %153 = arith.addf %149, %152 : vector<32x324xf32>
      %c0_114 = arith.constant 0 : index
      %c145_115 = arith.constant 145 : index
      %154 = vector.load %arg9[%c0_114, %c145_115] : memref<32x580xbf16, #tpu.memory_space<vmem>>, vector<32x324xbf16>
      %155 = vector.extract_strided_slice %123 {offsets = [0, 192], sizes = [32, 32], strides = [1, 1]} : vector<32x288xbf16> to vector<32x32xbf16>
      %cst_116 = arith.constant dense<0.000000e+00> : vector<32x324xf32>
      %156 = tpu.matmul %155, %154, %cst_116 {dimension_numbers = #tpu.dot_dimension_numbers<[1], [0], [0], [1], [0, 0, 1, 1], [], []>} : vector<32x32xbf16>, vector<32x324xbf16>, vector<32x324xf32> -> vector<32x324xf32>
      %157 = arith.addf %153, %156 : vector<32x324xf32>
      %c0_117 = arith.constant 0 : index
      %c146_118 = arith.constant 146 : index
      %158 = vector.load %arg9[%c0_117, %c146_118] : memref<32x580xbf16, #tpu.memory_space<vmem>>, vector<32x324xbf16>
      %159 = vector.extract_strided_slice %123 {offsets = [0, 224], sizes = [32, 32], strides = [1, 1]} : vector<32x288xbf16> to vector<32x32xbf16>
      %cst_119 = arith.constant dense<0.000000e+00> : vector<32x324xf32>
      %160 = tpu.matmul %159, %158, %cst_119 {dimension_numbers = #tpu.dot_dimension_numbers<[1], [0], [0], [1], [0, 0, 1, 1], [], []>} : vector<32x32xbf16>, vector<32x324xbf16>, vector<32x324xf32> -> vector<32x324xf32>
      %161 = arith.addf %157, %160 : vector<32x324xf32>
      %c0_120 = arith.constant 0 : index
      %c147_121 = arith.constant 147 : index
      %162 = vector.load %arg9[%c0_120, %c147_121] : memref<32x580xbf16, #tpu.memory_space<vmem>>, vector<32x324xbf16>
      %163 = vector.extract_strided_slice %123 {offsets = [0, 256], sizes = [32, 32], strides = [1, 1]} : vector<32x288xbf16> to vector<32x32xbf16>
      %cst_122 = arith.constant dense<0.000000e+00> : vector<32x324xf32>
      %164 = tpu.matmul %163, %162, %cst_122 {dimension_numbers = #tpu.dot_dimension_numbers<[1], [0], [0], [1], [0, 0, 1, 1], [], []>} : vector<32x32xbf16>, vector<32x324xbf16>, vector<32x324xf32> -> vector<32x324xf32>
      %165 = arith.addf %161, %164 : vector<32x324xf32>
      %166 = vector.broadcast %128 : vector<32x1xf32> to vector<32x324xf32>
      %167 = arith.addf %165, %166 : vector<32x324xf32>
      %168 = arith.addf %62, %167 : vector<32x324xf32>
      %169 = vector.broadcast %0 : vector<1x324xf32> to vector<32x324xf32>
      %170 = arith.mulf %168, %169 : vector<32x324xf32>
      %c0_123 = arith.constant 0 : index
      %c0_124 = arith.constant 0 : index
      %171 = vector.load %arg10[%c0_123, %c0_124] : memref<32x324xf32, #tpu.memory_space<vmem>>, vector<32x324xf32>
      tpu.vector_store %arg10[%c0_123, %c0_124], %170 {strides = array<i32>} : memref<32x324xf32, #tpu.memory_space<vmem>>, vector<32x324xf32>,
    }
    %c13_i32_41 = arith.constant 13 : i32
    %c0_42 = arith.constant 0 : index
    %c0_43 = arith.constant 0 : index
    %58 = vector.load %arg10[%c0_42, %c0_43] : memref<32x324xf32, #tpu.memory_space<vmem>>, vector<32x324xf32>
    %c0_44 = arith.constant 0 : index
    %c0_45 = arith.constant 0 : index
    %c0_46 = arith.constant 0 : index
    %59 = vector.load %arg7[%c0_44, %c0_45, %c0_46] : memref<1x32x324xf32, #tpu.memory_space<vmem>>, vector<1x32x324xf32>
    %60 = vector.shape_cast %59 : vector<1x32x324xf32> to vector<32x324xf32>
    %61 = vector.shape_cast %58 : vector<32x324xf32> to vector<1x32x324xf32>
    tpu.vector_store %arg7[%c0_44, %c0_45, %c0_46], %61 {strides = array<i32>} : memref<1x32x324xf32, #tpu.memory_space<vmem>>, vector<1x32x324xf32>,
    return
  }
  func.func @transform_0(%arg0: i32) -> (i32, i32, i32) {
    %c0_i32 = arith.constant 0 : i32
    %c0_i32_0 = arith.constant 0 : i32
    %c0_i32_1 = arith.constant 0 : i32
    return %arg0, %c0_i32, %c0_i32_0 : i32, i32, i32
  }
  func.func @transform_1(%arg0: i32) -> (i32, i32) {
    %c0_i32 = arith.constant 0 : i32
    %c0_i32_0 = arith.constant 0 : i32
    %c0_i32_1 = arith.constant 0 : i32
    return %c0_i32, %c0_i32_0 : i32, i32
  }
  func.func @transform_2(%arg0: i32) -> (i32, i32) {
    %c0_i32 = arith.constant 0 : i32
    %c0_i32_0 = arith.constant 0 : i32
    %c0_i32_1 = arith.constant 0 : i32
    return %c0_i32, %c0_i32_0 : i32, i32
  }
  func.func @transform_3(%arg0: i32) -> (i32, i32) {
    %c0_i32 = arith.constant 0 : i32
    %c0_i32_0 = arith.constant 0 : i32
    %c0_i32_1 = arith.constant 0 : i32
    return %c0_i32, %c0_i32_0 : i32, i32
  }
  func.func @transform_4(%arg0: i32) -> (i32, i32, i32) {
    %c0_i32 = arith.constant 0 : i32
    %c0_i32_0 = arith.constant 0 : i32
    %c0_i32_1 = arith.constant 0 : i32
    %c0_i32_2 = arith.constant 0 : i32
    return %c0_i32, %c0_i32_0, %c0_i32_1 : i32, i32, i32
  }
  func.func @transform_5(%arg0: i32) -> (i32, i32, i32) {
    %c0_i32 = arith.constant 0 : i32
    %c0_i32_0 = arith.constant 0 : i32
    %c0_i32_1 = arith.constant 0 : i32
    %c0_i32_2 = arith.constant 0 : i32
    return %c0_i32, %c0_i32_0, %c0_i32_1 : i32, i32, i32
  }
  func.func @transform_6(%arg0: i32) -> (i32, i32, i32) {
    %c0_i32 = arith.constant 0 : i32
    %c0_i32_0 = arith.constant 0 : i32
    %c0_i32_1 = arith.constant 0 : i32
    return %arg0, %c0_i32, %c0_i32_0 : i32, i32, i32
  }
}

</mosaic_0001>

<llo_original>
// kernel: tpu_custom_call.1
$region0: #{tpu_custom_call.1}
  #allocation0 [shape = 'u32[]', space=smem, size = 0x4, offset = 0x4, fixed_abs, tag = 'smem constant byte address 0x4 - core index']
  #allocation1 [shape = 'u32[144,128]{1,0:T(1,128)}', space=vmem, size = 0x12000, scoped, tag = 'internal scratch']
  #allocation2 [shape = 'bf16[4,580]{1,0:T(4,128)(2,1)}', space=vmem, size = 0x1400, scoped, tag = 'scratch operand']
  #allocation3 [shape = 'bf16[32,580]{1,0:T(16,128)(2,1)}', space=vmem, size = 0xa000, scoped, tag = 'scratch operand']
  #allocation4 [shape = 'f32[32,324]{1,0:T(8,128)}', space=vmem, size = 0xc000, scoped, tag = 'scratch operand']
  %s0 = inlined_call_operand.vmem [shape: f32[2,4,324], index: 0, kind: input, shape index: {}]
  %s1 = inlined_call_operand.vmem [shape: f32[1,324], index: 1, kind: input, shape index: {}]
  %s2 = inlined_call_operand.vmem [shape: bf16[32,36], index: 2, kind: input, shape index: {}]
  %s3 = inlined_call_operand.vmem [shape: f32[32,1], index: 3, kind: input, shape index: {}]
  %s4 = inlined_call_operand.hbm [shape: bf16[26,32,288], index: 4, kind: input, shape index: {}]
  %s5 = inlined_call_operand.vmem [shape: f32[26,32,1], index: 5, kind: input, shape index: {}]
  %s6 = inlined_call_operand.hbm [shape: f32[2,32,324], index: 6, kind: output, shape index: {}]
  %s7 = sld [smem:[#allocation0]]
  $region68: #{tpu_custom_call.1} parent=0
    _
  %s9 = ssub.s32 1, %s7
  %s10 = scalar_select 0, %s9, %s7
  $region1: #{tpu_custom_call.1} parent=0
    #allocation5 [shape = 'u8[638976]{0}', space=vmem, size = 0x9c000, scoped, tag = 'input window, operand 4, single buffered']
    #allocation6 [shape = 's32[2]{0}', space=sflag, size = 0x8, scoped, tag = 'scoped memory for tpu_custom_call.1']
    #allocation7 [shape = 's32[2]{0}', space=sflag, size = 0x8, scoped, tag = 'scoped memory for tpu_custom_call.1']
    #allocation8 [shape = 'u8[98304]{0}', space=vmem, size = 0x18000, scoped, tag = 'output window, operand 0']
    %11 = vsyncpa [#allocation6], 0
    %12 = vsyncpa [#allocation7], 0
    %s13 = scalar_lea.sflag [#allocation7], 1
    %14 = vsyncpa %s13, 0
    loop: start=0, step=1, limit=4
    $region2: #{tpu_custom_call.1} parent=1 // loop_pre_header
      _
    $region3: #{tpu_custom_call.1} parent=1 // loop_header
      %s16 = sphi 0, %s20
      %p17 = scmp.ge.s32.totalorder %s16, 4
      %s26 = sphi 0, %s28
      %s29 = sphi 0, %s26
      %s30 = sphi 0, %s29
      %s46 = sphi 0, %s30
      %s50 = sphi 0, %s50
      %s52 = sphi 0, %s50
      %s53 = sphi 0, %s52
      %s67 = sphi 0, %s53
      %s71 = sphi 0, %s71
      %s73 = sphi 0, %s71
      %s74 = sphi 0, %s73
      %s88 = sphi 0, %s74
      %s92 = sphi 0, %s92
      %s94 = sphi 0, %s92
      %s95 = sphi 0, %s94
      %s109 = sphi 0, %s95
      %s113 = sphi 0, %s113
      %s115 = sphi 0, %s113
      %s116 = sphi 0, %s115
      %s130 = sphi 0, %s116
      %s134 = sphi 0, %s134
      %s136 = sphi 0, %s134
      %s137 = sphi 0, %s136
      %s151 = sphi 0, %s137
      %s157 = sphi 0, %s159
      %s160 = sphi 0, %s157
      %s161 = sphi 0, %s160
      %s177 = sphi 0, %s161
    $region4: #{tpu_custom_call.1} parent=1 // loop_header_branch
      %19 = sbr.rel (%p17) target = $region8
    $region5: #{tpu_custom_call.1} parent=1 // loop_body
      %s21 = ssub.s32 %s16, 1
      %s22 = ssub.s32 %s16, 2
      %s23 = sadd.s32 %s16, 1
      %s24 = ssub.s32 %s16, %s23
      %p25 = scmp.eq.s32.totalorder %s24, 0
      %s27 = sadd.s32 %s26, 1
      %s28 = scalar_select %p25, %s26, %s27
      %p31 = pneg %p25
      %p32 = scmp.eq.s32.totalorder %s16, 1
      %p33 = por %p31, %p32
      %p34 = scmp.ne.s32.totalorder %s26, %s29
      %p35 = scmp.eq.s32.totalorder %s16, 0
      %p36 = por %p34, %p35
      %p37 = scmp.ne.s32.totalorder %s26, %s29
      %p38 = scmp.eq.s32.totalorder %s21, 1
      %p39 = por %p37, %p38
      %p40 = scmp.ne.s32.totalorder %s29, %s30
      %p41 = scmp.eq.s32.totalorder %s21, 0
      %p42 = por %p40, %p41
      %p43 = scmp.ne.s32.totalorder %s29, %s30
      %p44 = scmp.eq.s32.totalorder %s22, 1
      %p45 = por %p43, %p44
      %p47 = scmp.ne.s32.totalorder %s30, %s46
      %p48 = scmp.eq.s32.totalorder %s22, 0
      %p49 = por %p47, %p48
      %s51 = sadd.s32 %s50, 1
      %p54 = scmp.eq.s32.totalorder %s16, 1
      %p55 = scmp.ne.s32.totalorder %s50, %s52
      %p56 = scmp.eq.s32.totalorder %s16, 0
      %p57 = por %p55, %p56
      %p58 = scmp.ne.s32.totalorder %s50, %s52
      %p59 = scmp.eq.s32.totalorder %s21, 1
      %p60 = por %p58, %p59
      %p61 = scmp.ne.s32.totalorder %s52, %s53
      %p62 = scmp.eq.s32.totalorder %s21, 0
      %p63 = por %p61, %p62
      %p64 = scmp.ne.s32.totalorder %s52, %s53
      %p65 = scmp.eq.s32.totalorder %s22, 1
      %p66 = por %p64, %p65
      %p68 = scmp.ne.s32.totalorder %s53, %s67
      %p69 = scmp.eq.s32.totalorder %s22, 0
      %p70 = por %p68, %p69
      %s72 = sadd.s32 %s71, 1
      %p75 = scmp.eq.s32.totalorder %s16, 1
      %p76 = scmp.ne.s32.totalorder %s71, %s73
      %p77 = scmp.eq.s32.totalorder %s16, 0
      %p78 = por %p76, %p77
      %p79 = scmp.ne.s32.totalorder %s71, %s73
      %p80 = scmp.eq.s32.totalorder %s21, 1
      %p81 = por %p79, %p80
      %p82 = scmp.ne.s32.totalorder %s73, %s74
      %p83 = scmp.eq.s32.totalorder %s21, 0
      %p84 = por %p82, %p83
      %p85 = scmp.ne.s32.totalorder %s73, %s74
      %p86 = scmp.eq.s32.totalorder %s22, 1
      %p87 = por %p85, %p86
      %p89 = scmp.ne.s32.totalorder %s74, %s88
      %p90 = scmp.eq.s32.totalorder %s22, 0
      %p91 = por %p89, %p90
      %s93 = sadd.s32 %s92, 1
      %p96 = scmp.eq.s32.totalorder %s16, 1
      %p97 = scmp.ne.s32.totalorder %s92, %s94
      %p98 = scmp.eq.s32.totalorder %s16, 0
      %p99 = por %p97, %p98
      %p100 = scmp.ne.s32.totalorder %s92, %s94
      %p101 = scmp.eq.s32.totalorder %s21, 1
      %p102 = por %p100, %p101
      %p103 = scmp.ne.s32.totalorder %s94, %s95
      %p104 = scmp.eq.s32.totalorder %s21, 0
      %p105 = por %p103, %p104
      %p106 = scmp.ne.s32.totalorder %s94, %s95
      %p107 = scmp.eq.s32.totalorder %s22, 1
      %p108 = por %p106, %p107
      %p110 = scmp.ne.s32.totalorder %s95, %s109
      %p111 = scmp.eq.s32.totalorder %s22, 0
      %p112 = por %p110, %p111
      %s114 = sadd.s32 %s113, 1
      %p117 = scmp.eq.s32.totalorder %s16, 1
      %p118 = scmp.ne.s32.totalorder %s113, %s115
      %p119 = scmp.eq.s32.totalorder %s16, 0
      %p120 = por %p118, %p119
      %p121 = scmp.ne.s32.totalorder %s113, %s115
      %p122 = scmp.eq.s32.totalorder %s21, 1
      %p123 = por %p121, %p122
      %p124 = scmp.ne.s32.totalorder %s115, %s116
      %p125 = scmp.eq.s32.totalorder %s21, 0
      %p126 = por %p124, %p125
      %p127 = scmp.ne.s32.totalorder %s115, %s116
      %p128 = scmp.eq.s32.totalorder %s22, 1
      %p129 = por %p127, %p128
      %p131 = scmp.ne.s32.totalorder %s116, %s130
      %p132 = scmp.eq.s32.totalorder %s22, 0
      %p133 = por %p131, %p132
      %s135 = sadd.s32 %s134, 1
      %p138 = scmp.eq.s32.totalorder %s16, 1
      %p139 = scmp.ne.s32.totalorder %s134, %s136
      %p140 = scmp.eq.s32.totalorder %s16, 0
      %p141 = por %p139, %p140
      %p142 = scmp.ne.s32.totalorder %s134, %s136
      %p143 = scmp.eq.s32.totalorder %s21, 1
      %p144 = por %p142, %p143
      %p145 = scmp.ne.s32.totalorder %s136, %s137
      %p146 = scmp.eq.s32.totalorder %s21, 0
      %p147 = por %p145, %p146
      %p148 = scmp.ne.s32.totalorder %s136, %s137
      %p149 = scmp.eq.s32.totalorder %s22, 1
      %p150 = por %p148, %p149
      %p152 = scmp.ne.s32.totalorder %s137, %s151
      %p153 = scmp.eq.s32.totalorder %s22, 0
      %p154 = por %p152, %p153
      %s155 = ssub.s32 %s16, %s23
      %p156 = scmp.eq.s32.totalorder %s155, 0
      %s158 = sadd.s32 %s157, 1
      %s159 = scalar_select %p156, %s157, %s158
      %p162 = pneg %p156
      %p163 = scmp.eq.s32.totalorder %s16, 1
      %p164 = por %p162, %p163
      %p165 = scmp.ne.s32.totalorder %s157, %s160
      %p166 = scmp.eq.s32.totalorder %s16, 0
      %p167 = por %p165, %p166
      %p168 = scmp.ne.s32.totalorder %s157, %s160
      %p169 = scmp.eq.s32.totalorder %s21, 1
      %p170 = por %p168, %p169
      %p171 = scmp.ne.s32.totalorder %s160, %s161
      %p172 = scmp.eq.s32.totalorder %s21, 0
      %p173 = por %p171, %p172
      %p174 = scmp.ne.s32.totalorder %s160, %s161
      %p175 = scmp.eq.s32.totalorder %s22, 1
      %p176 = por %p174, %p175
      %p178 = scmp.ne.s32.totalorder %s161, %s177
      %p179 = scmp.eq.s32.totalorder %s22, 0
      %p180 = por %p178, %p179
      %p181 = scmp.le.s32.totalorder 1, %s16
      %p182 = scmp.lt.s32.totalorder %s16, 3
      %p183 = pnand %p181, %p182
      %p184 = pneg %p183
      // Predicated region
      $region9: #{tpu_custom_call.1} parent=5 // pred_check
        _
      $region10: #{tpu_custom_call.1} parent=5 // pred_check_branch
        %186 = sbr.rel (%p183) target = $region12
      $region11: #{tpu_custom_call.1} parent=5 // pred_region
        %s187 = ssub.s32 %s16, 1
        // Predicated region
        $region13: #{tpu_custom_call.1} parent=11 // pred_check
          %p188 = pneg %p63
        $region14: #{tpu_custom_call.1} parent=11 // pred_check_branch
          %190 = sbr.rel (%p188) target = $region16
        $region15: #{tpu_custom_call.1} parent=11 // pred_region
          _
        $region16: #{tpu_custom_call.1} parent=11 // pred_fallthru
          _
        // Predicated region
        $region17: #{tpu_custom_call.1} parent=11 // pred_check
          %p191 = pneg %p84
        $region18: #{tpu_custom_call.1} parent=11 // pred_check_branch
          %193 = sbr.rel (%p191) target = $region20
        $region19: #{tpu_custom_call.1} parent=11 // pred_region
          _
        $region20: #{tpu_custom_call.1} parent=11 // pred_fallthru
          _
        // Predicated region
        $region21: #{tpu_custom_call.1} parent=11 // pred_check
          %p194 = pneg %p105
        $region22: #{tpu_custom_call.1} parent=11 // pred_check_branch
          %196 = sbr.rel (%p194) target = $region24
        $region23: #{tpu_custom_call.1} parent=11 // pred_region
          _
        $region24: #{tpu_custom_call.1} parent=11 // pred_fallthru
          _
        // Predicated region
        $region25: #{tpu_custom_call.1} parent=11 // pred_check
          %p197 = pneg %p126
        $region26: #{tpu_custom_call.1} parent=11 // pred_check_branch
          %199 = sbr.rel (%p197) target = $region28
        $region27: #{tpu_custom_call.1} parent=11 // pred_region
          %s201 = ssub.s32 19968, 19968
          %202 = vsyncadd [#allocation6], %s201
          %s203 = sshll.u32 [#allocation5], 4
          %s204 = int_to_ptr.vmem [resolvable:$true] %s203
          %209 = dma.hbm_to_vmem [thread:$0]  %s4, 19968, %s204, [#allocation6], 192, 192, 12
        $region28: #{tpu_custom_call.1} parent=11 // pred_fallthru
          _
        // Predicated region
        $region29: #{tpu_custom_call.1} parent=11 // pred_check
          %p210 = pneg %p147
        $region30: #{tpu_custom_call.1} parent=11 // pred_check_branch
          %212 = sbr.rel (%p210) target = $region32
        $region31: #{tpu_custom_call.1} parent=11 // pred_region
          _
        $region32: #{tpu_custom_call.1} parent=11 // pred_fallthru
          _
      $region12: #{tpu_custom_call.1} parent=5 // pred_fallthru
        _
      %p213 = scmp.lt.s32.totalorder %s16, 2
      // Predicated region
      $region33: #{tpu_custom_call.1} parent=5 // pred_check
        %p214 = pneg %p213
      $region34: #{tpu_custom_call.1} parent=5 // pred_check_branch
        %216 = sbr.rel (%p214) target = $region36
      $region35: #{tpu_custom_call.1} parent=5 // pred_region
        // Predicated region
        $region37: #{tpu_custom_call.1} parent=35 // pred_check
          %p217 = pneg %p36
        $region38: #{tpu_custom_call.1} parent=35 // pred_check_branch
          %219 = sbr.rel (%p217) target = $region40
        $region39: #{tpu_custom_call.1} parent=35 // pred_region
          %p220 = scmp.lt.s32.totalorder %s16, 1
          %s221 = scalar_select %p220, %s16, 1
          %s222 = smul.addr %s221, 3
          %s223 = smul.addr %s222, 4
          %s224 = scalar_lea.vmem %s0, %s223
        $region40: #{tpu_custom_call.1} parent=35 // pred_fallthru
          _
      $region36: #{tpu_custom_call.1} parent=5 // pred_fallthru
        _
      %p225 = scmp.le.s32.totalorder 1, %s16
      %p226 = scmp.lt.s32.totalorder %s16, 3
      %p227 = pnand %p225, %p226
      %p228 = pneg %p227
      // Predicated region
      $region41: #{tpu_custom_call.1} parent=5 // pred_check
        _
      $region42: #{tpu_custom_call.1} parent=5 // pred_check_branch
        %230 = sbr.rel (%p227) target = $region44
      $region43: #{tpu_custom_call.1} parent=5 // pred_region
        %s231 = ssub.s32 %s16, 1
        // Predicated region
        $region45: #{tpu_custom_call.1} parent=43 // pred_check
          %p232 = pneg %p126
        $region46: #{tpu_custom_call.1} parent=43 // pred_check_branch
          %234 = sbr.rel (%p232) target = $region48
        $region47: #{tpu_custom_call.1} parent=43 // pred_region
          %235 = dma.done [#allocation6], 19968
        $region48: #{tpu_custom_call.1} parent=43 // pred_fallthru
          _
        %p236 = scmp.lt.s32.totalorder %s21, 1
        %s237 = scalar_select %p236, %s21, 1
        %s238 = smul.addr %s237, 3
        %s239 = smul.addr %s238, 4
        %s240 = scalar_lea.vmem %s0, %s239
        %p241 = pneg %p42
        %p242 = pneg %p39
        %p243 = pneg %p63
        %p244 = pneg %p60
        %p245 = pneg %p84
        %p246 = pneg %p81
        %p247 = pneg %p105
        %p248 = pneg %p102
        %p249 = pneg %p126
        %p250 = pneg %p123
        %p251 = pneg %p147
        %p252 = pneg %p144
        %p253 = pneg %p173
        %p254 = pneg %p170
        %s255 = sand.u32 %s160, 1
        %s256 = scalar_lea.sflag [#allocation7], %s255
        %s257 = sand.u32 %s160, 1
        %s258 = smul.addr %s257, 96
        %s259 = scalar_lea.vmem [#allocation8], %s258
        %p260 = scmp.lt.s32.totalorder %s21, 1
        %s261 = scalar_select %p260, %s21, 1
        %s262 = smul.addr %s261, 3
        %s263 = smul.addr %s262, 4
        %s264 = scalar_lea.vmem %s0, %s263
        %v266 = vld [vmem:[%s1] sm:$0x7]
        %267 = vst [vmem:[#allocation2] sm:$0x3] 0
        %vm268 = vcmask 1041952
        %vm269 = vcmask 551938
        %vm270 = vmor %vm269, %vm268
        %271 = vst.msk [vmem:[#allocation2 + $0x6] sm:$0xf] %vm270, 0
        %272 = vst [vmem:[#allocation3] sm:$0xff] 0
        %273 = vst [vmem:[#allocation3 + $0x28] sm:$0xff] 0
        %vm274 = vcmask 1048096
        %275 = vst.msk [vmem:[#allocation3 + $0x18] sm:$0xff] %vm274, 0
        %vm276 = vcmask 556032
        %277 = vst.msk [vmem:[#allocation3 + $0x20] sm:$0xff] %vm276, 0
        %278 = vst.msk [vmem:[#allocation3 + $0x40] sm:$0xff] %vm274, 0
        %279 = vst.msk [vmem:[#allocation3 + $0x48] sm:$0xff] %vm276, 0
        %v280 = vld [vmem:[%s264] sm:$0xff]
        %v281 = vld [vmem:[%s264 + $0x8] sm:$0xf]
        %v283 = vcombine.high %v280, %v280
        %v285 = vpack.c.bf16 %v280, %v280
        %v286 = vpack.c.bf16 %v283, %v283
        %v287 = vpack.c.bf16 %v281, %v281
        %v291 = vcombine.low %v285, %v286
        %v293 = vunpack.c.l.s4 1983009808
        %v294 = vunpack.c.0.s8 %v293
        %v295 = vlaneseq
        %v296 = vshrl.u32 %v295, 7
        %v297 = vsub.s32 %v294, %v296
        %v298 = vrot.slane %v291, %v297
        %v300 = vunpack.c.l.s4 1983009808
        %v301 = vunpack.c.0.s8 %v300
        %v302 = vlaneseq
        %v303 = vshrl.u32 %v302, 7
        %v304 = vsub.s32 %v301, %v303
        %v305 = vrot.slane %v287, %v304
        %v306 = vcombine.low %v298, %v305
        %vm308 = vcmask 1041408
        %vm309 = vcmask 1043458
        %vm310 = vmor %vm309, %vm308
        %vm311 = vcmask 553988
        %vm312 = vmor %vm311, %vm310
        %313 = vst.msk [vmem:[#allocation2 + $0x2] sm:$0x3f] %vm312, %v306
        %v314 = vld [vmem:[%s2] sm:$0xf]
        %v315 = vld [vmem:[%s2 + $0x4] sm:$0xf]
        %v316 = vld [vmem:[%s2 + $0x8] sm:$0xf]
        %v317 = vld [vmem:[%s2 + $0xc] sm:$0xf]
        %v318 = vld [vmem:[%s3] sm:$0xff]
        %v319 = vld [vmem:[%s3 + $0x8] sm:$0xff]
        %v320 = vld [vmem:[%s3 + $0x10] sm:$0xff]
        %v321 = vld [vmem:[%s3 + $0x18] sm:$0xff]
        %v322 = vld [vmem:[#allocation2] sm:$0xff]
        %v327 = vunpack.c.l.b16 %v314
        %v328 = vunpack.c.l.b16 %v315
        %v329 = vunpack.c.l.b16 %v316
        %v330 = vunpack.c.l.b16 %v317
        %v331 = vpack.c.b16 %v328, %v327
        %v332 = vpack.c.b16 %v330, %v329
        %333 = vrot.lane.b32.xlu0 %v331, 124
        %v334 = vpop.permute.xlu0 %333
        %335 = vrot.lane.b32.xlu0 %v332, 124
        %v336 = vpop.permute.xlu0 %335
        %v338 = vcombine.high %v322, %v322
        %v340 = vunpack.c.l.s4 1983009808
        %v341 = vunpack.c.0.s8 %v340
        %v342 = vlaneseq
        %v343 = vshrl.u32 %v342, 7
        %v344 = vsub.s32 %v341, %v343
        %v345 = vrot.slane %v322, %v344
        %v347 = vunpack.c.l.s4 1983009808
        %v348 = vunpack.c.0.s8 %v347
        %v349 = vlaneseq
        %v350 = vshrl.u32 %v349, 7
        %v351 = vsub.s32 %v348, %v350
        %v352 = vrot.slane %v338, %v351
        %v353 = vcombine.high %v345, %v345
        %v354 = vcombine.high %v352, %v352
        %355 = vrot.lane.b32.xlu0 %v345, 18
        %v356 = vpop.permute.xlu0 %355
        %357 = vrot.lane.b32.xlu0 %v353, 18
        %v358 = vpop.permute.xlu0 %357
        %359 = vrot.lane.b32.xlu0 %v352, 18
        %v360 = vpop.permute.xlu0 %359
        %361 = vrot.lane.b32.xlu0 %v354, 18
        %v362 = vpop.permute.xlu0 %361
        %vm363 = vcmask 146432
        %v364 = vsel %vm363, %v356, %v358
        %v365 = vsel %vm363, %v358, %v360
        %v366 = vsel %vm363, %v360, %v362
        %vm367 = vcmask 31744
        %v369 = vsel %vm367, %v334, 0
        %v372 = vsel %vm367, %v336, 0
        %v375 = vsel %vm308, %v364, 0
        %v378 = vsel %vm308, %v365, 0
        %v381 = vsel %vm308, %v366, 0
        %383 = vmatprep.subr.bf16.mxu0 %v378
        %384 = vmatpush1.bf16.msra.mxu0 %v375
        %385 = vmatprep.subr.bf16.mxu0 0
        %386 = vmatpush1.bf16.msra.mxu0 0
        %387 = vmatprep.subr.bf16.mxu0 0
        %388 = vmatpush1.bf16.msra.mxu0 0
        %389 = vmatprep.subr.bf16.mxu0 0
        %390 = vmatpush1.bf16.msra.mxu0 0
        %391 = vmatprep.subr.bf16.mxu0 0
        %392 = vmatpush1.bf16.msra.mxu0 0
        %393 = vmatprep.subr.bf16.mxu0 0
        %394 = vmatpush1.bf16.msra.mxu0 0
        %395 = vmatprep.subr.bf16.mxu0 0
        %396 = vmatpush1.bf16.msra.mxu0 0
        %397 = vmatprep.subr.bf16.mxu0 0
        %398 = vmatpush1.bf16.msra.mxu0 0
        %399 = vmatprep.subr.bf16.mxu0 0
        %400 = vmatpush1.bf16.msra.mxu0 0
        %401 = vmatprep.subr.bf16.mxu0 0
        %402 = vmatpush1.bf16.msra.mxu0 0
        %403 = vmatprep.subr.bf16.mxu0 0
        %404 = vmatpush1.bf16.msra.mxu0 0
        %405 = vmatprep.subr.bf16.mxu0 0
        %406 = vmatpush1.bf16.msra.mxu0 0
        %407 = vmatprep.subr.bf16.mxu0 0
        %408 = vmatpush1.bf16.msra.mxu0 0
        %409 = vmatprep.subr.bf16.mxu0 0
        %410 = vmatpush1.bf16.msra.mxu0 0
        %411 = vmatprep.subr.bf16.mxu0 0
        %412 = vmatpush1.bf16.msra.mxu0 0
        %413 = vmatprep.subr.bf16.mxu0 0
        %414 = vmatpush1.bf16.msra.mxu0 0
        %415 = vmatprep.mubr.bf16.mxu0 0
        %416 = vmatmul.mubr.bf16.gmra.mrb[0].mxu0 %v369
        %v417 = vpop.f32.mrb[0].mxu0
        %v418 = vadd.f32 0.0, %v417
        %v419 = vpop.f32.mrb[0].mxu0
        %v420 = vadd.f32 0.0, %v419
        %v421 = vpop.f32.mrb[0].mxu0
        %v422 = vadd.f32 0.0, %v421
        %v423 = vpop.f32.mrb[0].mxu0
        %v424 = vadd.f32 0.0, %v423
        %425 = vmatprep.mubr.bf16.mxu0 0
        %426 = vmatmul.mubr.bf16.gmra.mrb[0].mxu0 %v372
        %v427 = vpop.f32.mrb[0].mxu0
        %v428 = vadd.f32 0.0, %v427
        %v429 = vpop.f32.mrb[0].mxu0
        %v430 = vadd.f32 0.0, %v429
        %v431 = vpop.f32.mrb[0].mxu0
        %v432 = vadd.f32 0.0, %v431
        %v433 = vpop.f32.mrb[0].mxu0
        %v434 = vadd.f32 0.0, %v433
        %435 = vdwg.mxu0
        %436 = vmatprep.subr.bf16.mxu0 0
        %437 = vmatpush1.bf16.msra.mxu0 %v381
        %438 = vmatprep.subr.bf16.mxu0 0
        %439 = vmatpush1.bf16.msra.mxu0 0
        %440 = vmatprep.subr.bf16.mxu0 0
        %441 = vmatpush1.bf16.msra.mxu0 0
        %442 = vmatprep.subr.bf16.mxu0 0
        %443 = vmatpush1.bf16.msra.mxu0 0
        %444 = vmatprep.subr.bf16.mxu0 0
        %445 = vmatpush1.bf16.msra.mxu0 0
        %446 = vmatprep.subr.bf16.mxu0 0
        %447 = vmatpush1.bf16.msra.mxu0 0
        %448 = vmatprep.subr.bf16.mxu0 0
        %449 = vmatpush1.bf16.msra.mxu0 0
        %450 = vmatprep.subr.bf16.mxu0 0
        %451 = vmatpush1.bf16.msra.mxu0 0
        %452 = vmatprep.subr.bf16.mxu0 0
        %453 = vmatpush1.bf16.msra.mxu0 0
        %454 = vmatprep.subr.bf16.mxu0 0
        %455 = vmatpush1.bf16.msra.mxu0 0
        %456 = vmatprep.subr.bf16.mxu0 0
        %457 = vmatpush1.bf16.msra.mxu0 0
        %458 = vmatprep.subr.bf16.mxu0 0
        %459 = vmatpush1.bf16.msra.mxu0 0
        %460 = vmatprep.subr.bf16.mxu0 0
        %461 = vmatpush1.bf16.msra.mxu0 0
        %462 = vmatprep.subr.bf16.mxu0 0
        %463 = vmatpush1.bf16.msra.mxu0 0
        %464 = vmatprep.subr.bf16.mxu0 0
        %465 = vmatpush1.bf16.msra.mxu0 0
        %466 = vmatprep.subr.bf16.mxu0 0
        %467 = vmatpush1.bf16.msra.mxu0 0
        %468 = vmatprep.mubr.bf16.mxu0 0
        %469 = vmatmul.mubr.bf16.gmra.mrb[0].mxu0 %v369
        %v470 = vpop.f32.mrb[0].mxu0
        %v471 = vadd.f32 0.0, %v470
        %v472 = vpop.f32.mrb[0].mxu0
        %v473 = vpop.f32.mrb[0].mxu0
        %v474 = vadd.f32 0.0, %v473
        %v475 = vpop.f32.mrb[0].mxu0
        %476 = vmatprep.mubr.bf16.mxu0 0
        %477 = vmatmul.mubr.bf16.gmra.mrb[0].mxu0 %v372
        %v478 = vpop.f32.mrb[0].mxu0
        %v479 = vadd.f32 0.0, %v478
        %v480 = vpop.f32.mrb[0].mxu0
        %v481 = vpop.f32.mrb[0].mxu0
        %v482 = vadd.f32 0.0, %v481
        %v483 = vpop.f32.mrb[0].mxu0
        %484 = vdwg.mxu0
        %485 = vrot.lane.b32.xlu0 %v345, 19
        %v486 = vpop.permute.xlu0 %485
        %487 = vrot.lane.b32.xlu0 %v353, 19
        %v488 = vpop.permute.xlu0 %487
        %489 = vrot.lane.b32.xlu0 %v352, 19
        %v490 = vpop.permute.xlu0 %489
        %491 = vrot.lane.b32.xlu0 %v354, 19
        %v492 = vpop.permute.xlu0 %491
        %vm493 = vcmask 154624
        %v494 = vsel %vm493, %v486, %v488
        %v495 = vsel %vm493, %v488, %v490
        %v496 = vsel %vm493, %v490, %v492
        %v498 = vsel %vm367, %v331, 0
        %v501 = vsel %vm367, %v332, 0
        %v504 = vsel %vm308, %v494, 0
        %v507 = vsel %vm308, %v495, 0
        %v510 = vsel %vm308, %v496, 0
        %512 = vmatprep.subr.bf16.mxu0 %v507
        %513 = vmatpush1.bf16.msra.mxu0 %v504
        %514 = vmatprep.subr.bf16.mxu0 0
        %515 = vmatpush1.bf16.msra.mxu0 0
        %516 = vmatprep.subr.bf16.mxu0 0
        %517 = vmatpush1.bf16.msra.mxu0 0
        %518 = vmatprep.subr.bf16.mxu0 0
        %519 = vmatpush1.bf16.msra.mxu0 0
        %520 = vmatprep.subr.bf16.mxu0 0
        %521 = vmatpush1.bf16.msra.mxu0 0
        %522 = vmatprep.subr.bf16.mxu0 0
        %523 = vmatpush1.bf16.msra.mxu0 0
        %524 = vmatprep.subr.bf16.mxu0 0
        %525 = vmatpush1.bf16.msra.mxu0 0
        %526 = vmatprep.subr.bf16.mxu0 0
        %527 = vmatpush1.bf16.msra.mxu0 0
        %528 = vmatprep.subr.bf16.mxu0 0
        %529 = vmatpush1.bf16.msra.mxu0 0
        %530 = vmatprep.subr.bf16.mxu0 0
        %531 = vmatpush1.bf16.msra.mxu0 0
        %532 = vmatprep.subr.bf16.mxu0 0
        %533 = vmatpush1.bf16.msra.mxu0 0
        %534 = vmatprep.subr.bf16.mxu0 0
        %535 = vmatpush1.bf16.msra.mxu0 0
        %536 = vmatprep.subr.bf16.mxu0 0
        %537 = vmatpush1.bf16.msra.mxu0 0
        %538 = vmatprep.subr.bf16.mxu0 0
        %539 = vmatpush1.bf16.msra.mxu0 0
        %540 = vmatprep.subr.bf16.mxu0 0
        %541 = vmatpush1.bf16.msra.mxu0 0
        %542 = vmatprep.subr.bf16.mxu0 0
        %543 = vmatpush1.bf16.msra.mxu0 0
        %544 = vmatprep.mubr.bf16.mxu0 0
        %545 = vmatmul.mubr.bf16.gmra.mrb[0].mxu0 %v498
        %v546 = vpop.f32.mrb[0].mxu0
        %v547 = vadd.f32 %v418, %v546
        %v548 = vpop.f32.mrb[0].mxu0
        %v549 = vadd.f32 %v420, %v548
        %v550 = vpop.f32.mrb[0].mxu0
        %v551 = vadd.f32 %v422, %v550
        %v552 = vpop.f32.mrb[0].mxu0
        %v553 = vadd.f32 %v424, %v552
        %554 = vmatprep.mubr.bf16.mxu0 0
        %555 = vmatmul.mubr.bf16.gmra.mrb[0].mxu0 %v501
        %v556 = vpop.f32.mrb[0].mxu0
        %v557 = vadd.f32 %v428, %v556
        %v558 = vpop.f32.mrb[0].mxu0
        %v559 = vadd.f32 %v430, %v558
        %v560 = vpop.f32.mrb[0].mxu0
        %v561 = vadd.f32 %v432, %v560
        %v562 = vpop.f32.mrb[0].mxu0
        %v563 = vadd.f32 %v434, %v562
        %564 = vdwg.mxu0
        %565 = vmatprep.subr.bf16.mxu0 0
        %566 = vmatpush1.bf16.msra.mxu0 %v510
        %567 = vmatprep.subr.bf16.mxu0 0
        %568 = vmatpush1.bf16.msra.mxu0 0
        %569 = vmatprep.subr.bf16.mxu0 0
        %570 = vmatpush1.bf16.msra.mxu0 0
        %571 = vmatprep.subr.bf16.mxu0 0
        %572 = vmatpush1.bf16.msra.mxu0 0
        %573 = vmatprep.subr.bf16.mxu0 0
        %574 = vmatpush1.bf16.msra.mxu0 0
        %575 = vmatprep.subr.bf16.mxu0 0
        %576 = vmatpush1.bf16.msra.mxu0 0
        %577 = vmatprep.subr.bf16.mxu0 0
        %578 = vmatpush1.bf16.msra.mxu0 0
        %579 = vmatprep.subr.bf16.mxu0 0
        %580 = vmatpush1.bf16.msra.mxu0 0
        %581 = vmatprep.subr.bf16.mxu0 0
        %582 = vmatpush1.bf16.msra.mxu0 0
        %583 = vmatprep.subr.bf16.mxu0 0
        %584 = vmatpush1.bf16.msra.mxu0 0
        %585 = vmatprep.subr.bf16.mxu0 0
        %586 = vmatpush1.bf16.msra.mxu0 0
        %587 = vmatprep.subr.bf16.mxu0 0
        %588 = vmatpush1.bf16.msra.mxu0 0
        %589 = vmatprep.subr.bf16.mxu0 0
        %590 = vmatpush1.bf16.msra.mxu0 0
        %591 = vmatprep.subr.bf16.mxu0 0
        %592 = vmatpush1.bf16.msra.mxu0 0
        %593 = vmatprep.subr.bf16.mxu0 0
        %594 = vmatpush1.bf16.msra.mxu0 0
        %595 = vmatprep.subr.bf16.mxu0 0
        %596 = vmatpush1.bf16.msra.mxu0 0
        %597 = vmatprep.mubr.bf16.mxu0 0
        %598 = vmatmul.mubr.bf16.gmra.mrb[0].mxu0 %v498
        %v599 = vpop.f32.mrb[0].mxu0
        %v600 = vadd.f32 %v471, %v599
        %v601 = vpop.f32.mrb[0].mxu0
        %v602 = vpop.f32.mrb[0].mxu0
        %v603 = vadd.f32 %v474, %v602
        %v604 = vpop.f32.mrb[0].mxu0
        %605 = vmatprep.mubr.bf16.mxu0 0
        %606 = vmatmul.mubr.bf16.gmra.mrb[0].mxu0 %v501
        %v607 = vpop.f32.mrb[0].mxu0
        %v608 = vadd.f32 %v479, %v607
        %v609 = vpop.f32.mrb[0].mxu0
        %v610 = vpop.f32.mrb[0].mxu0
        %v611 = vadd.f32 %v482, %v610
        %v612 = vpop.f32.mrb[0].mxu0
        %613 = vdwg.mxu0
        %v614 = vld [vmem:[#allocation2] sm:$0xff]
        %615 = vrot.lane.b32.xlu0 %v331, 120
        %v616 = vpop.permute.xlu0 %615
        %617 = vrot.lane.b32.xlu0 %v332, 120
        %v618 = vpop.permute.xlu0 %617
        %v620 = vcombine.high %v614, %v614
        %v622 = vunpack.c.l.s4 1983009808
        %v623 = vunpack.c.0.s8 %v622
        %v624 = vlaneseq
        %v625 = vshrl.u32 %v624, 7
        %v626 = vsub.s32 %v623, %v625
        %v627 = vrot.slane %v614, %v626
        %v629 = vunpack.c.l.s4 1983009808
        %v630 = vunpack.c.0.s8 %v629
        %v631 = vlaneseq
        %v632 = vshrl.u32 %v631, 7
        %v633 = vsub.s32 %v630, %v632
        %v634 = vrot.slane %v620, %v633
        %v635 = vcombine.high %v627, %v627
        %v636 = vcombine.high %v634, %v634
        %637 = vrot.lane.b32.xlu0 %v627, 17
        %v638 = vpop.permute.xlu0 %637
        %639 = vrot.lane.b32.xlu0 %v635, 17
        %v640 = vpop.permute.xlu0 %639
        %641 = vrot.lane.b32.xlu0 %v634, 17
        %v642 = vpop.permute.xlu0 %641
        %643 = vrot.lane.b32.xlu0 %v636, 17
        %v644 = vpop.permute.xlu0 %643
        %vm645 = vcmask 138240
        %v646 = vsel %vm645, %v638, %v640
        %v647 = vsel %vm645, %v640, %v642
        %v648 = vsel %vm645, %v642, %v644
        %v650 = vsel %vm367, %v616, 0
        %v653 = vsel %vm367, %v618, 0
        %v656 = vsel %vm308, %v646, 0
        %v659 = vsel %vm308, %v647, 0
        %v662 = vsel %vm308, %v648, 0
        %664 = vmatprep.subr.bf16.mxu0 %v659
        %665 = vmatpush1.bf16.msra.mxu0 %v656
        %666 = vmatprep.subr.bf16.mxu0 0
        %667 = vmatpush1.bf16.msra.mxu0 0
        %668 = vmatprep.subr.bf16.mxu0 0
        %669 = vmatpush1.bf16.msra.mxu0 0
        %670 = vmatprep.subr.bf16.mxu0 0
        %671 = vmatpush1.bf16.msra.mxu0 0
        %672 = vmatprep.subr.bf16.mxu0 0
        %673 = vmatpush1.bf16.msra.mxu0 0
        %674 = vmatprep.subr.bf16.mxu0 0
        %675 = vmatpush1.bf16.msra.mxu0 0
        %676 = vmatprep.subr.bf16.mxu0 0
        %677 = vmatpush1.bf16.msra.mxu0 0
        %678 = vmatprep.subr.bf16.mxu0 0
        %679 = vmatpush1.bf16.msra.mxu0 0
        %680 = vmatprep.subr.bf16.mxu0 0
        %681 = vmatpush1.bf16.msra.mxu0 0
        %682 = vmatprep.subr.bf16.mxu0 0
        %683 = vmatpush1.bf16.msra.mxu0 0
        %684 = vmatprep.subr.bf16.mxu0 0
        %685 = vmatpush1.bf16.msra.mxu0 0
        %686 = vmatprep.subr.bf16.mxu0 0
        %687 = vmatpush1.bf16.msra.mxu0 0
        %688 = vmatprep.subr.bf16.mxu0 0
        %689 = vmatpush1.bf16.msra.mxu0 0
        %690 = vmatprep.subr.bf16.mxu0 0
        %691 = vmatpush1.bf16.msra.mxu0 0
        %692 = vmatprep.subr.bf16.mxu0 0
        %693 = vmatpush1.bf16.msra.mxu0 0
        %694 = vmatprep.subr.bf16.mxu0 0
        %695 = vmatpush1.bf16.msra.mxu0 0
        %696 = vmatprep.mubr.bf16.mxu0 0
        %697 = vmatmul.mubr.bf16.gmra.mrb[0].mxu0 %v650
        %v698 = vpop.f32.mrb[0].mxu0
        %v699 = vadd.f32 0.0, %v698
        %v700 = vpop.f32.mrb[0].mxu0
        %v701 = vadd.f32 0.0, %v700
        %v702 = vpop.f32.mrb[0].mxu0
        %v703 = vadd.f32 0.0, %v702
        %v704 = vpop.f32.mrb[0].mxu0
        %v705 = vadd.f32 0.0, %v704
        %706 = vmatprep.mubr.bf16.mxu0 0
        %707 = vmatmul.mubr.bf16.gmra.mrb[0].mxu0 %v653
        %v708 = vpop.f32.mrb[0].mxu0
        %v709 = vadd.f32 0.0, %v708
        %v710 = vpop.f32.mrb[0].mxu0
        %v711 = vadd.f32 0.0, %v710
        %v712 = vpop.f32.mrb[0].mxu0
        %v713 = vadd.f32 0.0, %v712
        %v714 = vpop.f32.mrb[0].mxu0
        %v715 = vadd.f32 0.0, %v714
        %716 = vdwg.mxu0
        %717 = vmatprep.subr.bf16.mxu0 0
        %718 = vmatpush1.bf16.msra.mxu0 %v662
        %719 = vmatprep.subr.bf16.mxu0 0
        %720 = vmatpush1.bf16.msra.mxu0 0
        %721 = vmatprep.subr.bf16.mxu0 0
        %722 = vmatpush1.bf16.msra.mxu0 0
        %723 = vmatprep.subr.bf16.mxu0 0
        %724 = vmatpush1.bf16.msra.mxu0 0
        %725 = vmatprep.subr.bf16.mxu0 0
        %726 = vmatpush1.bf16.msra.mxu0 0
        %727 = vmatprep.subr.bf16.mxu0 0
        %728 = vmatpush1.bf16.msra.mxu0 0
        %729 = vmatprep.subr.bf16.mxu0 0
        %730 = vmatpush1.bf16.msra.mxu0 0
        %731 = vmatprep.subr.bf16.mxu0 0
        %732 = vmatpush1.bf16.msra.mxu0 0
        %733 = vmatprep.subr.bf16.mxu0 0
        %734 = vmatpush1.bf16.msra.mxu0 0
        %735 = vmatprep.subr.bf16.mxu0 0
        %736 = vmatpush1.bf16.msra.mxu0 0
        %737 = vmatprep.subr.bf16.mxu0 0
        %738 = vmatpush1.bf16.msra.mxu0 0
        %739 = vmatprep.subr.bf16.mxu0 0
        %740 = vmatpush1.bf16.msra.mxu0 0
        %741 = vmatprep.subr.bf16.mxu0 0
        %742 = vmatpush1.bf16.msra.mxu0 0
        %743 = vmatprep.subr.bf16.mxu0 0
        %744 = vmatpush1.bf16.msra.mxu0 0
        %745 = vmatprep.subr.bf16.mxu0 0
        %746 = vmatpush1.bf16.msra.mxu0 0
        %747 = vmatprep.subr.bf16.mxu0 0
        %748 = vmatpush1.bf16.msra.mxu0 0
        %749 = vmatprep.mubr.bf16.mxu0 0
        %750 = vmatmul.mubr.bf16.gmra.mrb[0].mxu0 %v650
        %v751 = vpop.f32.mrb[0].mxu0
        %v752 = vadd.f32 0.0, %v751
        %v753 = vpop.f32.mrb[0].mxu0
        %v754 = vpop.f32.mrb[0].mxu0
        %v755 = vadd.f32 0.0, %v754
        %v756 = vpop.f32.mrb[0].mxu0
        %757 = vmatprep.mubr.bf16.mxu0 0
        %758 = vmatmul.mubr.bf16.gmra.mrb[0].mxu0 %v653
        %v759 = vpop.f32.mrb[0].mxu0
        %v760 = vadd.f32 0.0, %v759
        %v761 = vpop.f32.mrb[0].mxu0
        %v762 = vpop.f32.mrb[0].mxu0
        %v763 = vadd.f32 0.0, %v762
        %v764 = vpop.f32.mrb[0].mxu0
        %765 = vdwg.mxu0
        %v766 = vadd.f32 %v547, %v699
        %v767 = vadd.f32 %v549, %v701
        %v768 = vadd.f32 %v600, %v752
        %v769 = vadd.f32 %v551, %v703
        %v770 = vadd.f32 %v553, %v705
        %v771 = vadd.f32 %v603, %v755
        %v772 = vadd.f32 %v557, %v709
        %v773 = vadd.f32 %v559, %v711
        %v774 = vadd.f32 %v608, %v760
        %v775 = vadd.f32 %v561, %v713
        %v776 = vadd.f32 %v563, %v715
        %v777 = vadd.f32 %v611, %v763
        %v778 = vld [vmem:[#allocation2] sm:$0xff]
        %779 = vrot.lane.b32.xlu0 %v331, 116
        %v780 = vpop.permute.xlu0 %779
        %781 = vrot.lane.b32.xlu0 %v332, 116
        %v782 = vpop.permute.xlu0 %781
        %v784 = vcombine.high %v778, %v778
        %v786 = vunpack.c.l.s4 1983009808
        %v787 = vunpack.c.0.s8 %v786
        %v788 = vlaneseq
        %v789 = vshrl.u32 %v788, 7
        %v790 = vsub.s32 %v787, %v789
        %v791 = vrot.slane %v778, %v790
        %v793 = vunpack.c.l.s4 1983009808
        %v794 = vunpack.c.0.s8 %v793
        %v795 = vlaneseq
        %v796 = vshrl.u32 %v795, 7
        %v797 = vsub.s32 %v794, %v796
        %v798 = vrot.slane %v784, %v797
        %v799 = vcombine.high %v791, %v791
        %v800 = vcombine.high %v798, %v798
        %801 = vrot.lane.b32.xlu0 %v791, 1
        %v802 = vpop.permute.xlu0 %801
        %803 = vrot.lane.b32.xlu0 %v799, 1
        %v804 = vpop.permute.xlu0 %803
        %805 = vrot.lane.b32.xlu0 %v798, 1
        %v806 = vpop.permute.xlu0 %805
        %807 = vrot.lane.b32.xlu0 %v800, 1
        %v808 = vpop.permute.xlu0 %807
        %vm809 = vcmask 7168
        %v810 = vsel %vm809, %v802, %v804
        %v811 = vsel %vm809, %v804, %v806
        %v812 = vsel %vm809, %v806, %v808
        %v814 = vsel %vm367, %v780, 0
        %v817 = vsel %vm367, %v782, 0
        %v820 = vsel %vm308, %v810, 0
        %v823 = vsel %vm308, %v811, 0
        %v826 = vsel %vm308, %v812, 0
        %828 = vmatprep.subr.bf16.mxu0 %v823
        %829 = vmatpush1.bf16.msra.mxu0 %v820
        %830 = vmatprep.subr.bf16.mxu0 0
        %831 = vmatpush1.bf16.msra.mxu0 0
        %832 = vmatprep.subr.bf16.mxu0 0
        %833 = vmatpush1.bf16.msra.mxu0 0
        %834 = vmatprep.subr.bf16.mxu0 0
        %835 = vmatpush1.bf16.msra.mxu0 0
        %836 = vmatprep.subr.bf16.mxu0 0
        %837 = vmatpush1.bf16.msra.mxu0 0
        %838 = vmatprep.subr.bf16.mxu0 0
        %839 = vmatpush1.bf16.msra.mxu0 0
        %840 = vmatprep.subr.bf16.mxu0 0
        %841 = vmatpush1.bf16.msra.mxu0 0
        %842 = vmatprep.subr.bf16.mxu0 0
        %843 = vmatpush1.bf16.msra.mxu0 0
        %844 = vmatprep.subr.bf16.mxu0 0
        %845 = vmatpush1.bf16.msra.mxu0 0
        %846 = vmatprep.subr.bf16.mxu0 0
        %847 = vmatpush1.bf16.msra.mxu0 0
        %848 = vmatprep.subr.bf16.mxu0 0
        %849 = vmatpush1.bf16.msra.mxu0 0
        %850 = vmatprep.subr.bf16.mxu0 0
        %851 = vmatpush1.bf16.msra.mxu0 0
        %852 = vmatprep.subr.bf16.mxu0 0
        %853 = vmatpush1.bf16.msra.mxu0 0
        %854 = vmatprep.subr.bf16.mxu0 0
        %855 = vmatpush1.bf16.msra.mxu0 0
        %856 = vmatprep.subr.bf16.mxu0 0
        %857 = vmatpush1.bf16.msra.mxu0 0
        %858 = vmatprep.subr.bf16.mxu0 0
        %859 = vmatpush1.bf16.msra.mxu0 0
        %860 = vmatprep.mubr.bf16.mxu0 0
        %861 = vmatmul.mubr.bf16.gmra.mrb[0].mxu0 %v814
        %v862 = vpop.f32.mrb[0].mxu0
        %v863 = vadd.f32 0.0, %v862
        %v864 = vpop.f32.mrb[0].mxu0
        %v865 = vadd.f32 0.0, %v864
        %v866 = vpop.f32.mrb[0].mxu0
        %v867 = vadd.f32 0.0, %v866
        %v868 = vpop.f32.mrb[0].mxu0
        %v869 = vadd.f32 0.0, %v868
        %870 = vmatprep.mubr.bf16.mxu0 0
        %871 = vmatmul.mubr.bf16.gmra.mrb[0].mxu0 %v817
        %v872 = vpop.f32.mrb[0].mxu0
        %v873 = vadd.f32 0.0, %v872
        %v874 = vpop.f32.mrb[0].mxu0
        %v875 = vadd.f32 0.0, %v874
        %v876 = vpop.f32.mrb[0].mxu0
        %v877 = vadd.f32 0.0, %v876
        %v878 = vpop.f32.mrb[0].mxu0
        %v879 = vadd.f32 0.0, %v878
        %880 = vdwg.mxu0
        %881 = vmatprep.subr.bf16.mxu0 0
        %882 = vmatpush1.bf16.msra.mxu0 %v826
        %883 = vmatprep.subr.bf16.mxu0 0
        %884 = vmatpush1.bf16.msra.mxu0 0
        %885 = vmatprep.subr.bf16.mxu0 0
        %886 = vmatpush1.bf16.msra.mxu0 0
        %887 = vmatprep.subr.bf16.mxu0 0
        %888 = vmatpush1.bf16.msra.mxu0 0
        %889 = vmatprep.subr.bf16.mxu0 0
        %890 = vmatpush1.bf16.msra.mxu0 0
        %891 = vmatprep.subr.bf16.mxu0 0
        %892 = vmatpush1.bf16.msra.mxu0 0
        %893 = vmatprep.subr.bf16.mxu0 0
        %894 = vmatpush1.bf16.msra.mxu0 0
        %895 = vmatprep.subr.bf16.mxu0 0
        %896 = vmatpush1.bf16.msra.mxu0 0
        %897 = vmatprep.subr.bf16.mxu0 0
        %898 = vmatpush1.bf16.msra.mxu0 0
        %899 = vmatprep.subr.bf16.mxu0 0
        %900 = vmatpush1.bf16.msra.mxu0 0
        %901 = vmatprep.subr.bf16.mxu0 0
        %902 = vmatpush1.bf16.msra.mxu0 0
        %903 = vmatprep.subr.bf16.mxu0 0
        %904 = vmatpush1.bf16.msra.mxu0 0
        %905 = vmatprep.subr.bf16.mxu0 0
        %906 = vmatpush1.bf16.msra.mxu0 0
        %907 = vmatprep.subr.bf16.mxu0 0
        %908 = vmatpush1.bf16.msra.mxu0 0
        %909 = vmatprep.subr.bf16.mxu0 0
        %910 = vmatpush1.bf16.msra.mxu0 0
        %911 = vmatprep.subr.bf16.mxu0 0
        %912 = vmatpush1.bf16.msra.mxu0 0
        %913 = vmatprep.mubr.bf16.mxu0 0
        %914 = vmatmul.mubr.bf16.gmra.mrb[0].mxu0 %v814
        %v915 = vpop.f32.mrb[0].mxu0
        %v916 = vadd.f32 0.0, %v915
        %v917 = vpop.f32.mrb[0].mxu0
        %v918 = vpop.f32.mrb[0].mxu0
        %v919 = vadd.f32 0.0, %v918
        %v920 = vpop.f32.mrb[0].mxu0
        %921 = vmatprep.mubr.bf16.mxu0 0
        %922 = vmatmul.mubr.bf16.gmra.mrb[0].mxu0 %v817
        %v923 = vpop.f32.mrb[0].mxu0
        %v924 = vadd.f32 0.0, %v923
        %v925 = vpop.f32.mrb[0].mxu0
        %v926 = vpop.f32.mrb[0].mxu0
        %v927 = vadd.f32 0.0, %v926
        %v928 = vpop.f32.mrb[0].mxu0
        %929 = vdwg.mxu0
        %v930 = vadd.f32 %v766, %v863
        %v931 = vadd.f32 %v767, %v865
        %v932 = vadd.f32 %v768, %v916
        %v933 = vadd.f32 %v769, %v867
        %v934 = vadd.f32 %v770, %v869
        %v935 = vadd.f32 %v771, %v919
        %v936 = vadd.f32 %v772, %v873
        %v937 = vadd.f32 %v773, %v875
        %v938 = vadd.f32 %v774, %v924
        %v939 = vadd.f32 %v775, %v877
        %v940 = vadd.f32 %v776, %v879
        %v941 = vadd.f32 %v777, %v927
        %v942 = vld [vmem:[#allocation2 + $0x2] sm:$0x3f]
        %943 = vrot.lane.b32.xlu0 %v331, 112
        %v944 = vpop.permute.xlu0 %943
        %945 = vrot.lane.b32.xlu0 %v332, 112
        %v946 = vpop.permute.xlu0 %945
        %v948 = vcombine.high %v942, %v942
        %v950 = vunpack.c.l.s4 1983009808
        %v951 = vunpack.c.0.s8 %v950
        %v952 = vlaneseq
        %v953 = vshrl.u32 %v952, 7
        %v954 = vsub.s32 %v951, %v953
        %v955 = vrot.slane %v942, %v954
        %v957 = vunpack.c.l.s4 1983009808
        %v958 = vunpack.c.0.s8 %v957
        %v959 = vlaneseq
        %v960 = vshrl.u32 %v959, 7
        %v961 = vsub.s32 %v958, %v960
        %v962 = vrot.slane %v948, %v961
        %v963 = vcombine.high %v955, %v955
        %v965 = vsel %vm367, %v944, 0
        %v968 = vsel %vm367, %v946, 0
        %v971 = vsel %vm308, %v955, 0
        %v974 = vsel %vm308, %v963, 0
        %v977 = vsel %vm308, %v962, 0
        %979 = vmatprep.subr.bf16.mxu0 %v974
        %980 = vmatpush1.bf16.msra.mxu0 %v971
        %981 = vmatprep.subr.bf16.mxu0 0
        %982 = vmatpush1.bf16.msra.mxu0 0
        %983 = vmatprep.subr.bf16.mxu0 0
        %984 = vmatpush1.bf16.msra.mxu0 0
        %985 = vmatprep.subr.bf16.mxu0 0
        %986 = vmatpush1.bf16.msra.mxu0 0
        %987 = vmatprep.subr.bf16.mxu0 0
        %988 = vmatpush1.bf16.msra.mxu0 0
        %989 = vmatprep.subr.bf16.mxu0 0
        %990 = vmatpush1.bf16.msra.mxu0 0
        %991 = vmatprep.subr.bf16.mxu0 0
        %992 = vmatpush1.bf16.msra.mxu0 0
        %993 = vmatprep.subr.bf16.mxu0 0
        %994 = vmatpush1.bf16.msra.mxu0 0
        %995 = vmatprep.subr.bf16.mxu0 0
        %996 = vmatpush1.bf16.msra.mxu0 0
        %997 = vmatprep.subr.bf16.mxu0 0
        %998 = vmatpush1.bf16.msra.mxu0 0
        %999 = vmatprep.subr.bf16.mxu0 0
        %1000 = vmatpush1.bf16.msra.mxu0 0
        %1001 = vmatprep.subr.bf16.mxu0 0
        %1002 = vmatpush1.bf16.msra.mxu0 0
        %1003 = vmatprep.subr.bf16.mxu0 0
        %1004 = vmatpush1.bf16.msra.mxu0 0
        %1005 = vmatprep.subr.bf16.mxu0 0
        %1006 = vmatpush1.bf16.msra.mxu0 0
        %1007 = vmatprep.subr.bf16.mxu0 0
        %1008 = vmatpush1.bf16.msra.mxu0 0
        %1009 = vmatprep.subr.bf16.mxu0 0
        %1010 = vmatpush1.bf16.msra.mxu0 0
        %1011 = vmatprep.mubr.bf16.mxu0 0
        %1012 = vmatmul.mubr.bf16.gmra.mrb[0].mxu0 %v965
        %v1013 = vpop.f32.mrb[0].mxu0
        %v1014 = vadd.f32 0.0, %v1013
        %v1015 = vpop.f32.mrb[0].mxu0
        %v1016 = vadd.f32 0.0, %v1015
        %v1017 = vpop.f32.mrb[0].mxu0
        %v1018 = vadd.f32 0.0, %v1017
        %v1019 = vpop.f32.mrb[0].mxu0
        %v1020 = vadd.f32 0.0, %v1019
        %1021 = vmatprep.mubr.bf16.mxu0 0
        %1022 = vmatmul.mubr.bf16.gmra.mrb[0].mxu0 %v968
        %v1023 = vpop.f32.mrb[0].mxu0
        %v1024 = vadd.f32 0.0, %v1023
        %v1025 = vpop.f32.mrb[0].mxu0
        %v1026 = vadd.f32 0.0, %v1025
        %v1027 = vpop.f32.mrb[0].mxu0
        %v1028 = vadd.f32 0.0, %v1027
        %v1029 = vpop.f32.mrb[0].mxu0
        %v1030 = vadd.f32 0.0, %v1029
        %1031 = vdwg.mxu0
        %1032 = vmatprep.subr.bf16.mxu0 0
        %1033 = vmatpush1.bf16.msra.mxu0 %v977
        %1034 = vmatprep.subr.bf16.mxu0 0
        %1035 = vmatpush1.bf16.msra.mxu0 0
        %1036 = vmatprep.subr.bf16.mxu0 0
        %1037 = vmatpush1.bf16.msra.mxu0 0
        %1038 = vmatprep.subr.bf16.mxu0 0
        %1039 = vmatpush1.bf16.msra.mxu0 0
        %1040 = vmatprep.subr.bf16.mxu0 0
        %1041 = vmatpush1.bf16.msra.mxu0 0
        %1042 = vmatprep.subr.bf16.mxu0 0
        %1043 = vmatpush1.bf16.msra.mxu0 0
        %1044 = vmatprep.subr.bf16.mxu0 0
        %1045 = vmatpush1.bf16.msra.mxu0 0
        %1046 = vmatprep.subr.bf16.mxu0 0
        %1047 = vmatpush1.bf16.msra.mxu0 0
        %1048 = vmatprep.subr.bf16.mxu0 0
        %1049 = vmatpush1.bf16.msra.mxu0 0
        %1050 = vmatprep.subr.bf16.mxu0 0
        %1051 = vmatpush1.bf16.msra.mxu0 0
        %1052 = vmatprep.subr.bf16.mxu0 0
        %1053 = vmatpush1.bf16.msra.mxu0 0
        %1054 = vmatprep.subr.bf16.mxu0 0
        %1055 = vmatpush1.bf16.msra.mxu0 0
        %1056 = vmatprep.subr.bf16.mxu0 0
        %1057 = vmatpush1.bf16.msra.mxu0 0
        %1058 = vmatprep.subr.bf16.mxu0 0
        %1059 = vmatpush1.bf16.msra.mxu0 0
        %1060 = vmatprep.subr.bf16.mxu0 0
        %1061 = vmatpush1.bf16.msra.mxu0 0
        %1062 = vmatprep.subr.bf16.mxu0 0
        %1063 = vmatpush1.bf16.msra.mxu0 0
        %1064 = vmatprep.mubr.bf16.mxu0 0
        %1065 = vmatmul.mubr.bf16.gmra.mrb[0].mxu0 %v965
        %v1066 = vpop.f32.mrb[0].mxu0
        %v1067 = vadd.f32 0.0, %v1066
        %v1068 = vpop.f32.mrb[0].mxu0
        %v1069 = vpop.f32.mrb[0].mxu0
        %v1070 = vadd.f32 0.0, %v1069
        %v1071 = vpop.f32.mrb[0].mxu0
        %1072 = vmatprep.mubr.bf16.mxu0 0
        %1073 = vmatmul.mubr.bf16.gmra.mrb[0].mxu0 %v968
        %v1074 = vpop.f32.mrb[0].mxu0
        %v1075 = vadd.f32 0.0, %v1074
        %v1076 = vpop.f32.mrb[0].mxu0
        %v1077 = vpop.f32.mrb[0].mxu0
        %v1078 = vadd.f32 0.0, %v1077
        %v1079 = vpop.f32.mrb[0].mxu0
        %1080 = vdwg.mxu0
        %v1081 = vadd.f32 %v930, %v1014
        %v1082 = vadd.f32 %v931, %v1016
        %v1083 = vadd.f32 %v932, %v1067
        %v1084 = vadd.f32 %v933, %v1018
        %v1085 = vadd.f32 %v934, %v1020
        %v1086 = vadd.f32 %v935, %v1070
        %v1087 = vadd.f32 %v936, %v1024
        %v1088 = vadd.f32 %v937, %v1026
        %v1089 = vadd.f32 %v938, %v1075
        %v1090 = vadd.f32 %v939, %v1028
        %v1091 = vadd.f32 %v940, %v1030
        %v1092 = vadd.f32 %v941, %v1078
        %v1093 = vld [vmem:[#allocation2 + $0x2] sm:$0x3f]
        %1094 = vrot.lane.b32.xlu0 %v331, 108
        %v1095 = vpop.permute.xlu0 %1094
        %1096 = vrot.lane.b32.xlu0 %v332, 108
        %v1097 = vpop.permute.xlu0 %1096
        %v1099 = vcombine.high %v1093, %v1093
        %v1101 = vunpack.c.l.s4 1983009808
        %v1102 = vunpack.c.0.s8 %v1101
        %v1103 = vlaneseq
        %v1104 = vshrl.u32 %v1103, 7
        %v1105 = vsub.s32 %v1102, %v1104
        %v1106 = vrot.slane %v1093, %v1105
        %v1108 = vunpack.c.l.s4 1983009808
        %v1109 = vunpack.c.0.s8 %v1108
        %v1110 = vlaneseq
        %v1111 = vshrl.u32 %v1110, 7
        %v1112 = vsub.s32 %v1109, %v1111
        %v1113 = vrot.slane %v1099, %v1112
        %v1114 = vcombine.high %v1106, %v1106
        %1115 = vrot.lane.b32.xlu0 %v1106, 127
        %v1116 = vpop.permute.xlu0 %1115
        %1117 = vrot.lane.b32.xlu0 %v1114, 127
        %v1118 = vpop.permute.xlu0 %1117
        %1119 = vrot.lane.b32.xlu0 %v1113, 127
        %v1120 = vpop.permute.xlu0 %1119
        %vm1121 = vcmask 1039360
        %v1122 = vsel %vm1121, %v1116, %v1118
        %v1123 = vsel %vm1121, %v1118, %v1120
        %v1125 = vsel %vm367, %v1095, 0
        %v1128 = vsel %vm367, %v1097, 0
        %v1131 = vsel %vm308, %v1122, 0
        %v1134 = vsel %vm308, %v1123, 0
        %v1137 = vsel %vm308, %v1120, 0
        %1139 = vmatprep.subr.bf16.mxu0 %v1134
        %1140 = vmatpush1.bf16.msra.mxu0 %v1131
        %1141 = vmatprep.subr.bf16.mxu0 0
        %1142 = vmatpush1.bf16.msra.mxu0 0
        %1143 = vmatprep.subr.bf16.mxu0 0
        %1144 = vmatpush1.bf16.msra.mxu0 0
        %1145 = vmatprep.subr.bf16.mxu0 0
        %1146 = vmatpush1.bf16.msra.mxu0 0
        %1147 = vmatprep.subr.bf16.mxu0 0
        %1148 = vmatpush1.bf16.msra.mxu0 0
        %1149 = vmatprep.subr.bf16.mxu0 0
        %1150 = vmatpush1.bf16.msra.mxu0 0
        %1151 = vmatprep.subr.bf16.mxu0 0
        %1152 = vmatpush1.bf16.msra.mxu0 0
        %1153 = vmatprep.subr.bf16.mxu0 0
        %1154 = vmatpush1.bf16.msra.mxu0 0
        %1155 = vmatprep.subr.bf16.mxu0 0
        %1156 = vmatpush1.bf16.msra.mxu0 0
        %1157 = vmatprep.subr.bf16.mxu0 0
        %1158 = vmatpush1.bf16.msra.mxu0 0
        %1159 = vmatprep.subr.bf16.mxu0 0
        %1160 = vmatpush1.bf16.msra.mxu0 0
        %1161 = vmatprep.subr.bf16.mxu0 0
        %1162 = vmatpush1.bf16.msra.mxu0 0
        %1163 = vmatprep.subr.bf16.mxu0 0
        %1164 = vmatpush1.bf16.msra.mxu0 0
        %1165 = vmatprep.subr.bf16.mxu0 0
        %1166 = vmatpush1.bf16.msra.mxu0 0
        %1167 = vmatprep.subr.bf16.mxu0 0
        %1168 = vmatpush1.bf16.msra.mxu0 0
        %1169 = vmatprep.subr.bf16.mxu0 0
        %1170 = vmatpush1.bf16.msra.mxu0 0
        %1171 = vmatprep.mubr.bf16.mxu0 0
        %1172 = vmatmul.mubr.bf16.gmra.mrb[0].mxu0 %v1125
        %v1173 = vpop.f32.mrb[0].mxu0
        %v1174 = vadd.f32 0.0, %v1173
        %v1175 = vpop.f32.mrb[0].mxu0
        %v1176 = vadd.f32 0.0, %v1175
        %v1177 = vpop.f32.mrb[0].mxu0
        %v1178 = vadd.f32 0.0, %v1177
        %v1179 = vpop.f32.mrb[0].mxu0
        %v1180 = vadd.f32 0.0, %v1179
        %1181 = vmatprep.mubr.bf16.mxu0 0
        %1182 = vmatmul.mubr.bf16.gmra.mrb[0].mxu0 %v1128
        %v1183 = vpop.f32.mrb[0].mxu0
        %v1184 = vadd.f32 0.0, %v1183
        %v1185 = vpop.f32.mrb[0].mxu0
        %v1186 = vadd.f32 0.0, %v1185
        %v1187 = vpop.f32.mrb[0].mxu0
        %v1188 = vadd.f32 0.0, %v1187
        %v1189 = vpop.f32.mrb[0].mxu0
        %v1190 = vadd.f32 0.0, %v1189
        %1191 = vdwg.mxu0
        %1192 = vmatprep.subr.bf16.mxu0 0
        %1193 = vmatpush1.bf16.msra.mxu0 %v1137
        %1194 = vmatprep.subr.bf16.mxu0 0
        %1195 = vmatpush1.bf16.msra.mxu0 0
        %1196 = vmatprep.subr.bf16.mxu0 0
        %1197 = vmatpush1.bf16.msra.mxu0 0
        %1198 = vmatprep.subr.bf16.mxu0 0
        %1199 = vmatpush1.bf16.msra.mxu0 0
        %1200 = vmatprep.subr.bf16.mxu0 0
        %1201 = vmatpush1.bf16.msra.mxu0 0
        %1202 = vmatprep.subr.bf16.mxu0 0
        %1203 = vmatpush1.bf16.msra.mxu0 0
        %1204 = vmatprep.subr.bf16.mxu0 0
        %1205 = vmatpush1.bf16.msra.mxu0 0
        %1206 = vmatprep.subr.bf16.mxu0 0
        %1207 = vmatpush1.bf16.msra.mxu0 0
        %1208 = vmatprep.subr.bf16.mxu0 0
        %1209 = vmatpush1.bf16.msra.mxu0 0
        %1210 = vmatprep.subr.bf16.mxu0 0
        %1211 = vmatpush1.bf16.msra.mxu0 0
        %1212 = vmatprep.subr.bf16.mxu0 0
        %1213 = vmatpush1.bf16.msra.mxu0 0
        %1214 = vmatprep.subr.bf16.mxu0 0
        %1215 = vmatpush1.bf16.msra.mxu0 0
        %1216 = vmatprep.subr.bf16.mxu0 0
        %1217 = vmatpush1.bf16.msra.mxu0 0
        %1218 = vmatprep.subr.bf16.mxu0 0
        %1219 = vmatpush1.bf16.msra.mxu0 0
        %1220 = vmatprep.subr.bf16.mxu0 0
        %1221 = vmatpush1.bf16.msra.mxu0 0
        %1222 = vmatprep.subr.bf16.mxu0 0
        %1223 = vmatpush1.bf16.msra.mxu0 0
        %1224 = vmatprep.mubr.bf16.mxu0 0
        %1225 = vmatmul.mubr.bf16.gmra.mrb[0].mxu0 %v1125
        %v1226 = vpop.f32.mrb[0].mxu0
        %v1227 = vadd.f32 0.0, %v1226
        %v1228 = vpop.f32.mrb[0].mxu0
        %v1229 = vpop.f32.mrb[0].mxu0
        %v1230 = vadd.f32 0.0, %v1229
        %v1231 = vpop.f32.mrb[0].mxu0
        %1232 = vmatprep.mubr.bf16.mxu0 0
        %1233 = vmatmul.mubr.bf16.gmra.mrb[0].mxu0 %v1128
        %v1234 = vpop.f32.mrb[0].mxu0
        %v1235 = vadd.f32 0.0, %v1234
        %v1236 = vpop.f32.mrb[0].mxu0
        %v1237 = vpop.f32.mrb[0].mxu0
        %v1238 = vadd.f32 0.0, %v1237
        %v1239 = vpop.f32.mrb[0].mxu0
        %1240 = vdwg.mxu0
        %v1241 = vadd.f32 %v1081, %v1174
        %v1242 = vadd.f32 %v1082, %v1176
        %v1243 = vadd.f32 %v1083, %v1227
        %v1244 = vadd.f32 %v1084, %v1178
        %v1245 = vadd.f32 %v1085, %v1180
        %v1246 = vadd.f32 %v1086, %v1230
        %v1247 = vadd.f32 %v1087, %v1184
        %v1248 = vadd.f32 %v1088, %v1186
        %v1249 = vadd.f32 %v1089, %v1235
        %v1250 = vadd.f32 %v1090, %v1188
        %v1251 = vadd.f32 %v1091, %v1190
        %v1252 = vadd.f32 %v1092, %v1238
        %v1253 = vld [vmem:[#allocation2 + $0x2] sm:$0x3f]
        %1254 = vrot.lane.b32.xlu0 %v331, 104
        %v1255 = vpop.permute.xlu0 %1254
        %1256 = vrot.lane.b32.xlu0 %v332, 104
        %v1257 = vpop.permute.xlu0 %1256
        %v1259 = vcombine.high %v1253, %v1253
        %v1261 = vunpack.c.l.s4 1983009808
        %v1262 = vunpack.c.0.s8 %v1261
        %v1263 = vlaneseq
        %v1264 = vshrl.u32 %v1263, 7
        %v1265 = vsub.s32 %v1262, %v1264
        %v1266 = vrot.slane %v1253, %v1265
        %v1268 = vunpack.c.l.s4 1983009808
        %v1269 = vunpack.c.0.s8 %v1268
        %v1270 = vlaneseq
        %v1271 = vshrl.u32 %v1270, 7
        %v1272 = vsub.s32 %v1269, %v1271
        %v1273 = vrot.slane %v1259, %v1272
        %v1274 = vcombine.high %v1266, %v1266
        %1275 = vrot.lane.b32.xlu0 %v1266, 111
        %v1276 = vpop.permute.xlu0 %1275
        %1277 = vrot.lane.b32.xlu0 %v1274, 111
        %v1278 = vpop.permute.xlu0 %1277
        %1279 = vrot.lane.b32.xlu0 %v1273, 111
        %v1280 = vpop.permute.xlu0 %1279
        %vm1281 = vcmask 908288
        %v1282 = vsel %vm1281, %v1276, %v1278
        %v1283 = vsel %vm1281, %v1278, %v1280
        %v1285 = vsel %vm367, %v1255, 0
        %v1288 = vsel %vm367, %v1257, 0
        %v1291 = vsel %vm308, %v1282, 0
        %v1294 = vsel %vm308, %v1283, 0
        %v1297 = vsel %vm308, %v1280, 0
        %1299 = vmatprep.subr.bf16.mxu0 %v1294
        %1300 = vmatpush1.bf16.msra.mxu0 %v1291
        %1301 = vmatprep.subr.bf16.mxu0 0
        %1302 = vmatpush1.bf16.msra.mxu0 0
        %1303 = vmatprep.subr.bf16.mxu0 0
        %1304 = vmatpush1.bf16.msra.mxu0 0
        %1305 = vmatprep.subr.bf16.mxu0 0
        %1306 = vmatpush1.bf16.msra.mxu0 0
        %1307 = vmatprep.subr.bf16.mxu0 0
        %1308 = vmatpush1.bf16.msra.mxu0 0
        %1309 = vmatprep.subr.bf16.mxu0 0
        %1310 = vmatpush1.bf16.msra.mxu0 0
        %1311 = vmatprep.subr.bf16.mxu0 0
        %1312 = vmatpush1.bf16.msra.mxu0 0
        %1313 = vmatprep.subr.bf16.mxu0 0
        %1314 = vmatpush1.bf16.msra.mxu0 0
        %1315 = vmatprep.subr.bf16.mxu0 0
        %1316 = vmatpush1.bf16.msra.mxu0 0
        %1317 = vmatprep.subr.bf16.mxu0 0
        %1318 = vmatpush1.bf16.msra.mxu0 0
        %1319 = vmatprep.subr.bf16.mxu0 0
        %1320 = vmatpush1.bf16.msra.mxu0 0
        %1321 = vmatprep.subr.bf16.mxu0 0
        %1322 = vmatpush1.bf16.msra.mxu0 0
        %1323 = vmatprep.subr.bf16.mxu0 0
        %1324 = vmatpush1.bf16.msra.mxu0 0
        %1325 = vmatprep.subr.bf16.mxu0 0
        %1326 = vmatpush1.bf16.msra.mxu0 0
        %1327 = vmatprep.subr.bf16.mxu0 0
        %1328 = vmatpush1.bf16.msra.mxu0 0
        %1329 = vmatprep.subr.bf16.mxu0 0
        %1330 = vmatpush1.bf16.msra.mxu0 0
        %1331 = vmatprep.mubr.bf16.mxu0 0
        %1332 = vmatmul.mubr.bf16.gmra.mrb[0].mxu0 %v1285
        %v1333 = vpop.f32.mrb[0].mxu0
        %v1334 = vadd.f32 0.0, %v1333
        %v1335 = vpop.f32.mrb[0].mxu0
        %v1336 = vadd.f32 0.0, %v1335
        %v1337 = vpop.f32.mrb[0].mxu0
        %v1338 = vadd.f32 0.0, %v1337
        %v1339 = vpop.f32.mrb[0].mxu0
        %v1340 = vadd.f32 0.0, %v1339
        %1341 = vmatprep.mubr.bf16.mxu0 0
        %1342 = vmatmul.mubr.bf16.gmra.mrb[0].mxu0 %v1288
        %v1343 = vpop.f32.mrb[0].mxu0
        %v1344 = vadd.f32 0.0, %v1343
        %v1345 = vpop.f32.mrb[0].mxu0
        %v1346 = vadd.f32 0.0, %v1345
        %v1347 = vpop.f32.mrb[0].mxu0
        %v1348 = vadd.f32 0.0, %v1347
        %v1349 = vpop.f32.mrb[0].mxu0
        %v1350 = vadd.f32 0.0, %v1349
        %1351 = vdwg.mxu0
        %1352 = vmatprep.subr.bf16.mxu0 0
        %1353 = vmatpush1.bf16.msra.mxu0 %v1297
        %1354 = vmatprep.subr.bf16.mxu0 0
        %1355 = vmatpush1.bf16.msra.mxu0 0
        %1356 = vmatprep.subr.bf16.mxu0 0
        %1357 = vmatpush1.bf16.msra.mxu0 0
        %1358 = vmatprep.subr.bf16.mxu0 0
        %1359 = vmatpush1.bf16.msra.mxu0 0
        %1360 = vmatprep.subr.bf16.mxu0 0
        %1361 = vmatpush1.bf16.msra.mxu0 0
        %1362 = vmatprep.subr.bf16.mxu0 0
        %1363 = vmatpush1.bf16.msra.mxu0 0
        %1364 = vmatprep.subr.bf16.mxu0 0
        %1365 = vmatpush1.bf16.msra.mxu0 0
        %1366 = vmatprep.subr.bf16.mxu0 0
        %1367 = vmatpush1.bf16.msra.mxu0 0
        %1368 = vmatprep.subr.bf16.mxu0 0
        %1369 = vmatpush1.bf16.msra.mxu0 0
        %1370 = vmatprep.subr.bf16.mxu0 0
        %1371 = vmatpush1.bf16.msra.mxu0 0
        %1372 = vmatprep.subr.bf16.mxu0 0
        %1373 = vmatpush1.bf16.msra.mxu0 0
        %1374 = vmatprep.subr.bf16.mxu0 0
        %1375 = vmatpush1.bf16.msra.mxu0 0
        %1376 = vmatprep.subr.bf16.mxu0 0
        %1377 = vmatpush1.bf16.msra.mxu0 0
        %1378 = vmatprep.subr.bf16.mxu0 0
        %1379 = vmatpush1.bf16.msra.mxu0 0
        %1380 = vmatprep.subr.bf16.mxu0 0
        %1381 = vmatpush1.bf16.msra.mxu0 0
        %1382 = vmatprep.subr.bf16.mxu0 0
        %1383 = vmatpush1.bf16.msra.mxu0 0
        %1384 = vmatprep.mubr.bf16.mxu0 0
        %1385 = vmatmul.mubr.bf16.gmra.mrb[0].mxu0 %v1285
        %v1386 = vpop.f32.mrb[0].mxu0
        %v1387 = vadd.f32 0.0, %v1386
        %v1388 = vpop.f32.mrb[0].mxu0
        %v1389 = vpop.f32.mrb[0].mxu0
        %v1390 = vadd.f32 0.0, %v1389
        %v1391 = vpop.f32.mrb[0].mxu0
        %1392 = vmatprep.mubr.bf16.mxu0 0
        %1393 = vmatmul.mubr.bf16.gmra.mrb[0].mxu0 %v1288
        %v1394 = vpop.f32.mrb[0].mxu0
        %v1395 = vadd.f32 0.0, %v1394
        %v1396 = vpop.f32.mrb[0].mxu0
        %v1397 = vpop.f32.mrb[0].mxu0
        %v1398 = vadd.f32 0.0, %v1397
        %v1399 = vpop.f32.mrb[0].mxu0
        %1400 = vdwg.mxu0
        %v1401 = vadd.f32 %v1241, %v1334
        %v1402 = vadd.f32 %v1242, %v1336
        %v1403 = vadd.f32 %v1243, %v1387
        %v1404 = vadd.f32 %v1244, %v1338
        %v1405 = vadd.f32 %v1245, %v1340
        %v1406 = vadd.f32 %v1246, %v1390
        %v1407 = vadd.f32 %v1247, %v1344
        %v1408 = vadd.f32 %v1248, %v1346
        %v1409 = vadd.f32 %v1249, %v1395
        %v1410 = vadd.f32 %v1250, %v1348
        %v1411 = vadd.f32 %v1251, %v1350
        %v1412 = vadd.f32 %v1252, %v1398
        %v1413 = vld [vmem:[#allocation2 + $0x2] sm:$0x3f]
        %1414 = vrot.lane.b32.xlu0 %v331, 100
        %v1415 = vpop.permute.xlu0 %1414
        %1416 = vrot.lane.b32.xlu0 %v332, 100
        %v1417 = vpop.permute.xlu0 %1416
        %v1419 = vcombine.high %v1413, %v1413
        %v1421 = vunpack.c.l.s4 1983009808
        %v1422 = vunpack.c.0.s8 %v1421
        %v1423 = vlaneseq
        %v1424 = vshrl.u32 %v1423, 7
        %v1425 = vsub.s32 %v1422, %v1424
        %v1426 = vrot.slane %v1413, %v1425
        %v1428 = vunpack.c.l.s4 1983009808
        %v1429 = vunpack.c.0.s8 %v1428
        %v1430 = vlaneseq
        %v1431 = vshrl.u32 %v1430, 7
        %v1432 = vsub.s32 %v1429, %v1431
        %v1433 = vrot.slane %v1419, %v1432
        %v1434 = vcombine.high %v1426, %v1426
        %1435 = vrot.lane.b32.xlu0 %v1426, 110
        %v1436 = vpop.permute.xlu0 %1435
        %1437 = vrot.lane.b32.xlu0 %v1434, 110
        %v1438 = vpop.permute.xlu0 %1437
        %1439 = vrot.lane.b32.xlu0 %v1433, 110
        %v1440 = vpop.permute.xlu0 %1439
        %vm1441 = vcmask 900096
        %v1442 = vsel %vm1441, %v1436, %v1438
        %v1443 = vsel %vm1441, %v1438, %v1440
        %v1445 = vsel %vm367, %v1415, 0
        %v1448 = vsel %vm367, %v1417, 0
        %v1451 = vsel %vm308, %v1442, 0
        %v1454 = vsel %vm308, %v1443, 0
        %v1457 = vsel %vm308, %v1440, 0
        %1459 = vmatprep.subr.bf16.mxu0 %v1454
        %1460 = vmatpush1.bf16.msra.mxu0 %v1451
        %1461 = vmatprep.subr.bf16.mxu0 0
        %1462 = vmatpush1.bf16.msra.mxu0 0
        %1463 = vmatprep.subr.bf16.mxu0 0
        %1464 = vmatpush1.bf16.msra.mxu0 0
        %1465 = vmatprep.subr.bf16.mxu0 0
        %1466 = vmatpush1.bf16.msra.mxu0 0
        %1467 = vmatprep.subr.bf16.mxu0 0
        %1468 = vmatpush1.bf16.msra.mxu0 0
        %1469 = vmatprep.subr.bf16.mxu0 0
        %1470 = vmatpush1.bf16.msra.mxu0 0
        %1471 = vmatprep.subr.bf16.mxu0 0
        %1472 = vmatpush1.bf16.msra.mxu0 0
        %1473 = vmatprep.subr.bf16.mxu0 0
        %1474 = vmatpush1.bf16.msra.mxu0 0
        %1475 = vmatprep.subr.bf16.mxu0 0
        %1476 = vmatpush1.bf16.msra.mxu0 0
        %1477 = vmatprep.subr.bf16.mxu0 0
        %1478 = vmatpush1.bf16.msra.mxu0 0
        %1479 = vmatprep.subr.bf16.mxu0 0
        %1480 = vmatpush1.bf16.msra.mxu0 0
        %1481 = vmatprep.subr.bf16.mxu0 0
        %1482 = vmatpush1.bf16.msra.mxu0 0
        %1483 = vmatprep.subr.bf16.mxu0 0
        %1484 = vmatpush1.bf16.msra.mxu0 0
        %1485 = vmatprep.subr.bf16.mxu0 0
        %1486 = vmatpush1.bf16.msra.mxu0 0
        %1487 = vmatprep.subr.bf16.mxu0 0
        %1488 = vmatpush1.bf16.msra.mxu0 0
        %1489 = vmatprep.subr.bf16.mxu0 0
        %1490 = vmatpush1.bf16.msra.mxu0 0
        %1491 = vmatprep.mubr.bf16.mxu0 0
        %1492 = vmatmul.mubr.bf16.gmra.mrb[0].mxu0 %v1445
        %v1493 = vpop.f32.mrb[0].mxu0
        %v1494 = vadd.f32 0.0, %v1493
        %v1495 = vpop.f32.mrb[0].mxu0
        %v1496 = vadd.f32 0.0, %v1495
        %v1497 = vpop.f32.mrb[0].mxu0
        %v1498 = vadd.f32 0.0, %v1497
        %v1499 = vpop.f32.mrb[0].mxu0
        %v1500 = vadd.f32 0.0, %v1499
        %1501 = vmatprep.mubr.bf16.mxu0 0
        %1502 = vmatmul.mubr.bf16.gmra.mrb[0].mxu0 %v1448
        %v1503 = vpop.f32.mrb[0].mxu0
        %v1504 = vadd.f32 0.0, %v1503
        %v1505 = vpop.f32.mrb[0].mxu0
        %v1506 = vadd.f32 0.0, %v1505
        %v1507 = vpop.f32.mrb[0].mxu0
        %v1508 = vadd.f32 0.0, %v1507
        %v1509 = vpop.f32.mrb[0].mxu0
        %v1510 = vadd.f32 0.0, %v1509
        %1511 = vdwg.mxu0
        %1512 = vmatprep.subr.bf16.mxu0 0
        %1513 = vmatpush1.bf16.msra.mxu0 %v1457
        %1514 = vmatprep.subr.bf16.mxu0 0
        %1515 = vmatpush1.bf16.msra.mxu0 0
        %1516 = vmatprep.subr.bf16.mxu0 0
        %1517 = vmatpush1.bf16.msra.mxu0 0
        %1518 = vmatprep.subr.bf16.mxu0 0
        %1519 = vmatpush1.bf16.msra.mxu0 0
        %1520 = vmatprep.subr.bf16.mxu0 0
        %1521 = vmatpush1.bf16.msra.mxu0 0
        %1522 = vmatprep.subr.bf16.mxu0 0
        %1523 = vmatpush1.bf16.msra.mxu0 0
        %1524 = vmatprep.subr.bf16.mxu0 0
        %1525 = vmatpush1.bf16.msra.mxu0 0
        %1526 = vmatprep.subr.bf16.mxu0 0
        %1527 = vmatpush1.bf16.msra.mxu0 0
        %1528 = vmatprep.subr.bf16.mxu0 0
        %1529 = vmatpush1.bf16.msra.mxu0 0
        %1530 = vmatprep.subr.bf16.mxu0 0
        %1531 = vmatpush1.bf16.msra.mxu0 0
        %1532 = vmatprep.subr.bf16.mxu0 0
        %1533 = vmatpush1.bf16.msra.mxu0 0
        %1534 = vmatprep.subr.bf16.mxu0 0
        %1535 = vmatpush1.bf16.msra.mxu0 0
        %1536 = vmatprep.subr.bf16.mxu0 0
        %1537 = vmatpush1.bf16.msra.mxu0 0
        %1538 = vmatprep.subr.bf16.mxu0 0
        %1539 = vmatpush1.bf16.msra.mxu0 0
        %1540 = vmatprep.subr.bf16.mxu0 0
        %1541 = vmatpush1.bf16.msra.mxu0 0
        %1542 = vmatprep.subr.bf16.mxu0 0
        %1543 = vmatpush1.bf16.msra.mxu0 0
        %1544 = vmatprep.mubr.bf16.mxu0 0
        %1545 = vmatmul.mubr.bf16.gmra.mrb[0].mxu0 %v1445
        %v1546 = vpop.f32.mrb[0].mxu0
        %v1547 = vadd.f32 0.0, %v1546
        %v1548 = vpop.f32.mrb[0].mxu0
        %v1549 = vpop.f32.mrb[0].mxu0
        %v1550 = vadd.f32 0.0, %v1549
        %v1551 = vpop.f32.mrb[0].mxu0
        %1552 = vmatprep.mubr.bf16.mxu0 0
        %1553 = vmatmul.mubr.bf16.gmra.mrb[0].mxu0 %v1448
        %v1554 = vpop.f32.mrb[0].mxu0
        %v1555 = vadd.f32 0.0, %v1554
        %v1556 = vpop.f32.mrb[0].mxu0
        %v1557 = vpop.f32.mrb[0].mxu0
        %v1558 = vadd.f32 0.0, %v1557
        %v1559 = vpop.f32.mrb[0].mxu0
        %1560 = vdwg.mxu0
        %v1561 = vadd.f32 %v1401, %v1494
        %v1562 = vadd.f32 %v1402, %v1496
        %v1563 = vadd.f32 %v1403, %v1547
        %v1564 = vadd.f32 %v1404, %v1498
        %v1565 = vadd.f32 %v1405, %v1500
        %v1566 = vadd.f32 %v1406, %v1550
        %v1567 = vadd.f32 %v1407, %v1504
        %v1568 = vadd.f32 %v1408, %v1506
        %v1569 = vadd.f32 %v1409, %v1555
        %v1570 = vadd.f32 %v1410, %v1508
        %v1571 = vadd.f32 %v1411, %v1510
        %v1572 = vadd.f32 %v1412, %v1558
        %v1573 = vld [vmem:[#allocation2 + $0x2] sm:$0x3f]
        %1574 = vrot.lane.b32.xlu0 %v331, 96
        %v1575 = vpop.permute.xlu0 %1574
        %1576 = vrot.lane.b32.xlu0 %v332, 96
        %v1577 = vpop.permute.xlu0 %1576
        %v1579 = vcombine.high %v1573, %v1573
        %v1581 = vunpack.c.l.s4 1983009808
        %v1582 = vunpack.c.0.s8 %v1581
        %v1583 = vlaneseq
        %v1584 = vshrl.u32 %v1583, 7
        %v1585 = vsub.s32 %v1582, %v1584
        %v1586 = vrot.slane %v1573, %v1585
        %v1588 = vunpack.c.l.s4 1983009808
        %v1589 = vunpack.c.0.s8 %v1588
        %v1590 = vlaneseq
        %v1591 = vshrl.u32 %v1590, 7
        %v1592 = vsub.s32 %v1589, %v1591
        %v1593 = vrot.slane %v1579, %v1592
        %v1594 = vcombine.high %v1586, %v1586
        %1595 = vrot.lane.b32.xlu0 %v1586, 109
        %v1596 = vpop.permute.xlu0 %1595
        %1597 = vrot.lane.b32.xlu0 %v1594, 109
        %v1598 = vpop.permute.xlu0 %1597
        %1599 = vrot.lane.b32.xlu0 %v1593, 109
        %v1600 = vpop.permute.xlu0 %1599
        %vm1601 = vcmask 891904
        %v1602 = vsel %vm1601, %v1596, %v1598
        %v1603 = vsel %vm1601, %v1598, %v1600
        %v1605 = vsel %vm367, %v1575, 0
        %v1608 = vsel %vm367, %v1577, 0
        %v1611 = vsel %vm308, %v1602, 0
        %v1614 = vsel %vm308, %v1603, 0
        %v1617 = vsel %vm308, %v1600, 0
        %1619 = vmatprep.subr.bf16.mxu0 %v1614
        %1620 = vmatpush1.bf16.msra.mxu0 %v1611
        %1621 = vmatprep.subr.bf16.mxu0 0
        %1622 = vmatpush1.bf16.msra.mxu0 0
        %1623 = vmatprep.subr.bf16.mxu0 0
        %1624 = vmatpush1.bf16.msra.mxu0 0
        %1625 = vmatprep.subr.bf16.mxu0 0
        %1626 = vmatpush1.bf16.msra.mxu0 0
        %1627 = vmatprep.subr.bf16.mxu0 0
        %1628 = vmatpush1.bf16.msra.mxu0 0
        %1629 = vmatprep.subr.bf16.mxu0 0
        %1630 = vmatpush1.bf16.msra.mxu0 0
        %1631 = vmatprep.subr.bf16.mxu0 0
        %1632 = vmatpush1.bf16.msra.mxu0 0
        %1633 = vmatprep.subr.bf16.mxu0 0
        %1634 = vmatpush1.bf16.msra.mxu0 0
        %1635 = vmatprep.subr.bf16.mxu0 0
        %1636 = vmatpush1.bf16.msra.mxu0 0
        %1637 = vmatprep.subr.bf16.mxu0 0
        %1638 = vmatpush1.bf16.msra.mxu0 0
        %1639 = vmatprep.subr.bf16.mxu0 0
        %1640 = vmatpush1.bf16.msra.mxu0 0
        %1641 = vmatprep.subr.bf16.mxu0 0
        %1642 = vmatpush1.bf16.msra.mxu0 0
        %1643 = vmatprep.subr.bf16.mxu0 0
        %1644 = vmatpush1.bf16.msra.mxu0 0
        %1645 = vmatprep.subr.bf16.mxu0 0
        %1646 = vmatpush1.bf16.msra.mxu0 0
        %1647 = vmatprep.subr.bf16.mxu0 0
        %1648 = vmatpush1.bf16.msra.mxu0 0
        %1649 = vmatprep.subr.bf16.mxu0 0
        %1650 = vmatpush1.bf16.msra.mxu0 0
        %1651 = vmatprep.mubr.bf16.mxu0 0
        %1652 = vmatmul.mubr.bf16.gmra.mrb[0].mxu0 %v1605
        %v1653 = vpop.f32.mrb[0].mxu0
        %v1654 = vadd.f32 0.0, %v1653
        %v1655 = vpop.f32.mrb[0].mxu0
        %v1656 = vadd.f32 0.0, %v1655
        %v1657 = vpop.f32.mrb[0].mxu0
        %v1658 = vadd.f32 0.0, %v1657
        %v1659 = vpop.f32.mrb[0].mxu0
        %v1660 = vadd.f32 0.0, %v1659
        %1661 = vmatprep.mubr.bf16.mxu0 0
        %1662 = vmatmul.mubr.bf16.gmra.mrb[0].mxu0 %v1608
        %v1663 = vpop.f32.mrb[0].mxu0
        %v1664 = vadd.f32 0.0, %v1663
        %v1665 = vpop.f32.mrb[0].mxu0
        %v1666 = vadd.f32 0.0, %v1665
        %v1667 = vpop.f32.mrb[0].mxu0
        %v1668 = vadd.f32 0.0, %v1667
        %v1669 = vpop.f32.mrb[0].mxu0
        %v1670 = vadd.f32 0.0, %v1669
        %1671 = vdwg.mxu0
        %1672 = vmatprep.subr.bf16.mxu0 0
        %1673 = vmatpush1.bf16.msra.mxu0 %v1617
        %1674 = vmatprep.subr.bf16.mxu0 0
        %1675 = vmatpush1.bf16.msra.mxu0 0
        %1676 = vmatprep.subr.bf16.mxu0 0
        %1677 = vmatpush1.bf16.msra.mxu0 0
        %1678 = vmatprep.subr.bf16.mxu0 0
        %1679 = vmatpush1.bf16.msra.mxu0 0
        %1680 = vmatprep.subr.bf16.mxu0 0
        %1681 = vmatpush1.bf16.msra.mxu0 0
        %1682 = vmatprep.subr.bf16.mxu0 0
        %1683 = vmatpush1.bf16.msra.mxu0 0
        %1684 = vmatprep.subr.bf16.mxu0 0
        %1685 = vmatpush1.bf16.msra.mxu0 0
        %1686 = vmatprep.subr.bf16.mxu0 0
        %1687 = vmatpush1.bf16.msra.mxu0 0
        %1688 = vmatprep.subr.bf16.mxu0 0
        %1689 = vmatpush1.bf16.msra.mxu0 0
        %1690 = vmatprep.subr.bf16.mxu0 0
        %1691 = vmatpush1.bf16.msra.mxu0 0
        %1692 = vmatprep.subr.bf16.mxu0 0
        %1693 = vmatpush1.bf16.msra.mxu0 0
        %1694 = vmatprep.subr.bf16.mxu0 0
        %1695 = vmatpush1.bf16.msra.mxu0 0
        %1696 = vmatprep.subr.bf16.mxu0 0
        %1697 = vmatpush1.bf16.msra.mxu0 0
        %1698 = vmatprep.subr.bf16.mxu0 0
        %1699 = vmatpush1.bf16.msra.mxu0 0
        %1700 = vmatprep.subr.bf16.mxu0 0
        %1701 = vmatpush1.bf16.msra.mxu0 0
        %1702 = vmatprep.subr.bf16.mxu0 0
        %1703 = vmatpush1.bf16.msra.mxu0 0
        %1704 = vmatprep.mubr.bf16.mxu0 0
        %1705 = vmatmul.mubr.bf16.gmra.mrb[0].mxu0 %v1605
        %v1706 = vpop.f32.mrb[0].mxu0
        %v1707 = vadd.f32 0.0, %v1706
        %v1708 = vpop.f32.mrb[0].mxu0
        %v1709 = vpop.f32.mrb[0].mxu0
        %v1710 = vadd.f32 0.0, %v1709
        %v1711 = vpop.f32.mrb[0].mxu0
        %1712 = vmatprep.mubr.bf16.mxu0 0
        %1713 = vmatmul.mubr.bf16.gmra.mrb[0].mxu0 %v1608
        %v1714 = vpop.f32.mrb[0].mxu0
        %v1715 = vadd.f32 0.0, %v1714
        %v1716 = vpop.f32.mrb[0].mxu0
        %v1717 = vpop.f32.mrb[0].mxu0
        %v1718 = vadd.f32 0.0, %v1717
        %v1719 = vpop.f32.mrb[0].mxu0
        %1720 = vdwg.mxu0
        %v1721 = vadd.f32 %v1561, %v1654
        %v1722 = vadd.f32 %v1562, %v1656
        %v1723 = vadd.f32 %v1563, %v1707
        %v1724 = vadd.f32 %v1564, %v1658
        %v1725 = vadd.f32 %v1565, %v1660
        %v1726 = vadd.f32 %v1566, %v1710
        %v1727 = vadd.f32 %v1567, %v1664
        %v1728 = vadd.f32 %v1568, %v1666
        %v1729 = vadd.f32 %v1569, %v1715
        %v1730 = vadd.f32 %v1570, %v1668
        %v1731 = vadd.f32 %v1571, %v1670
        %v1732 = vadd.f32 %v1572, %v1718
        %1734 = vset.pattern.permute.xlu0 0
        %1735 = vperm.xlu0 %1734, %v318
        %v1736 = vpop.permute.xlu0 %1735
        %1739 = vset.pattern.permute.xlu0 0
        %1740 = vperm.xlu0 %1739, %v319
        %v1741 = vpop.permute.xlu0 %1740
        %1744 = vset.pattern.permute.xlu0 0
        %1745 = vperm.xlu0 %1744, %v320
        %v1746 = vpop.permute.xlu0 %1745
        %1749 = vset.pattern.permute.xlu0 0
        %1750 = vperm.xlu0 %1749, %v321
        %v1751 = vpop.permute.xlu0 %1750
        %v1753 = vadd.f32 %v1721, %v1736
        %v1754 = vadd.f32 %v1722, %v1736
        %v1755 = vadd.f32 %v1723, %v1736
        %v1756 = vadd.f32 %v1724, %v1741
        %v1757 = vadd.f32 %v1725, %v1741
        %v1758 = vadd.f32 %v1726, %v1741
        %v1759 = vadd.f32 %v1727, %v1746
        %v1760 = vadd.f32 %v1728, %v1746
        %v1761 = vadd.f32 %v1729, %v1746
        %v1762 = vadd.f32 %v1730, %v1751
        %v1763 = vadd.f32 %v1731, %v1751
        %v1764 = vadd.f32 %v1732, %v1751
        %v1766 = vlaneseq
        %v1767 = vshrl.u32 %v1766, 7
        %v1768 = vsub.s32 0, %v1767
        %v1769 = vrot.slane %v266, %v1768
        %v1770 = vlaneseq
        %v1771 = vshrl.u32 %v1770, 7
        %v1772 = vsub.s32 1, %v1771
        %v1773 = vrot.slane %v266, %v1772
        %v1774 = vlaneseq
        %v1775 = vshrl.u32 %v1774, 7
        %v1776 = vsub.s32 2, %v1775
        %v1777 = vrot.slane %v266, %v1776
        %v1781 = vmul.f32 %v1753, %v1769
        %v1782 = vmul.f32 %v1754, %v1773
        %v1783 = vmul.f32 %v1755, %v1777
        %v1784 = vmul.f32 %v1756, %v1769
        %v1785 = vmul.f32 %v1757, %v1773
        %v1786 = vmul.f32 %v1758, %v1777
        %v1787 = vmul.f32 %v1759, %v1769
        %v1788 = vmul.f32 %v1760, %v1773
        %v1789 = vmul.f32 %v1761, %v1777
        %v1790 = vmul.f32 %v1762, %v1769
        %v1791 = vmul.f32 %v1763, %v1773
        %v1792 = vmul.f32 %v1764, %v1777
        %1793 = vst [vmem:[#allocation4] sm:$0xff] %v1781
        %1794 = vst [vmem:[#allocation4 + $0x8] sm:$0xff] %v1782
        %1795 = vst.msk [vmem:[#allocation4 + $0x10] sm:$0xff] %vm276, %v1783
        %1796 = vst [vmem:[#allocation4 + $0x18] sm:$0xff] %v1784
        %1797 = vst [vmem:[#allocation4 + $0x20] sm:$0xff] %v1785
        %1798 = vst.msk [vmem:[#allocation4 + $0x28] sm:$0xff] %vm276, %v1786
        %1799 = vst [vmem:[#allocation4 + $0x30] sm:$0xff] %v1787
        %1800 = vst [vmem:[#allocation4 + $0x38] sm:$0xff] %v1788
        %1801 = vst.msk [vmem:[#allocation4 + $0x40] sm:$0xff] %vm276, %v1789
        %1802 = vst [vmem:[#allocation4 + $0x48] sm:$0xff] %v1790
        %1803 = vst [vmem:[#allocation4 + $0x50] sm:$0xff] %v1791
        %1804 = vst.msk [vmem:[#allocation4 + $0x58] sm:$0xff] %vm276, %v1792
        loop: start=0, step=1, limit=13
        $region49: #{tpu_custom_call.1} parent=43 // loop_pre_header
          _
        $region50: #{tpu_custom_call.1} parent=43 // loop_header
          %s1806 = sphi 0, %s1810
          %p1807 = scmp.ge.s32.totalorder %s1806, 13
        $region51: #{tpu_custom_call.1} parent=43 // loop_header_branch
          %1809 = sbr.rel (%p1807) target = $region55
        $region52: #{tpu_custom_call.1} parent=43 // loop_body
          %v1811 = vld [vmem:[#allocation4] sm:$0xff]
          %v1812 = vld [vmem:[#allocation4 + $0x8] sm:$0xff]
          %v1813 = vld [vmem:[#allocation4 + $0x10] sm:$0xff]
          %v1814 = vld [vmem:[#allocation4 + $0x18] sm:$0xff]
          %v1815 = vld [vmem:[#allocation4 + $0x20] sm:$0xff]
          %v1816 = vld [vmem:[#allocation4 + $0x28] sm:$0xff]
          %v1817 = vld [vmem:[#allocation4 + $0x30] sm:$0xff]
          %v1818 = vld [vmem:[#allocation4 + $0x38] sm:$0xff]
          %v1819 = vld [vmem:[#allocation4 + $0x40] sm:$0xff]
          %v1820 = vld [vmem:[#allocation4 + $0x48] sm:$0xff]
          %v1821 = vld [vmem:[#allocation4 + $0x50] sm:$0xff]
          %v1822 = vld [vmem:[#allocation4 + $0x58] sm:$0xff]
          %v1823 = vpack.c.bf16 %v1814, %v1811
          %v1824 = vpack.c.bf16 %v1815, %v1812
          %v1825 = vpack.c.bf16 %v1816, %v1813
          %v1826 = vpack.c.bf16 %v1820, %v1817
          %v1827 = vpack.c.bf16 %v1821, %v1818
          %v1828 = vpack.c.bf16 %v1822, %v1819
          %1829 = vst [vmem:[#allocation3 + $0x8] sm:$0xff] %v1823
          %1830 = vst [vmem:[#allocation3 + $0x10] sm:$0xff] %v1824
          %1831 = vst.msk [vmem:[#allocation3 + $0x18] sm:$0xff] %vm276, %v1825
          %1832 = vst [vmem:[#allocation3 + $0x30] sm:$0xff] %v1826
          %1833 = vst [vmem:[#allocation3 + $0x38] sm:$0xff] %v1827
          %1834 = vst.msk [vmem:[#allocation3 + $0x40] sm:$0xff] %vm276, %v1828
          %s1835 = smul.u32 %s1806, 2
          %s1836 = smul.u32 %s1835, 12
          %s1837 = smul.addr %s1836, 4
          %s1838 = scalar_lea.vmem [#allocation5], %s1837
          %v1839 = vld [vmem:[%s1838] sm:$0xff]
          %v1840 = vld [vmem:[%s1838 + $0x8] sm:$0xf]
          %v1841 = vld [vmem:[%s1838 + $0xc] sm:$0xff]
          %v1842 = vld [vmem:[%s1838 + $0x14] sm:$0xf]
          %v1843 = vld [vmem:[%s1838 + $0x18] sm:$0xff]
          %v1844 = vld [vmem:[%s1838 + $0x20] sm:$0xf]
          %v1845 = vld [vmem:[%s1838 + $0x24] sm:$0xff]
          %v1846 = vld [vmem:[%s1838 + $0x2c] sm:$0xf]
          %s1847 = smul.u32 %s1835, 32
          %s1848 = scalar_lea.vmem %s5, %s1847
          %v1849 = vld [vmem:[%s1848] sm:$0xff]
          %v1850 = vld [vmem:[%s1848 + $0x8] sm:$0xff]
          %v1851 = vld [vmem:[%s1848 + $0x10] sm:$0xff]
          %v1852 = vld [vmem:[%s1848 + $0x18] sm:$0xff]
          %v1853 = vld [vmem:[#allocation3] sm:$0xff]
          %v1854 = vld [vmem:[#allocation3 + $0x8] sm:$0xff]
          %v1855 = vld [vmem:[#allocation3 + $0x10] sm:$0xff]
          %v1856 = vld [vmem:[#allocation3 + $0x18] sm:$0xff]
          %v1857 = vld [vmem:[#allocation3 + $0x28] sm:$0xff]
          %v1858 = vld [vmem:[#allocation3 + $0x30] sm:$0xff]
          %v1859 = vld [vmem:[#allocation3 + $0x38] sm:$0xff]
          %v1860 = vld [vmem:[#allocation3 + $0x40] sm:$0xff]
          %v1865 = vunpack.c.l.b16 %v1839
          %v1866 = vunpack.c.l.b16 %v1841
          %v1867 = vunpack.c.l.b16 %v1843
          %v1868 = vunpack.c.l.b16 %v1845
          %v1869 = vpack.c.b16 %v1866, %v1865
          %v1870 = vpack.c.b16 %v1868, %v1867
          %1871 = vrot.lane.b32.xlu0 %v1869, 96
          %v1872 = vpop.permute.xlu0 %1871
          %1873 = vrot.lane.b32.xlu0 %v1870, 96
          %v1874 = vpop.permute.xlu0 %1873
          %1883 = vrot.lane.b32.xlu0 %v1853, 18
          %v1884 = vpop.permute.xlu0 %1883
          %1885 = vrot.lane.b32.xlu0 %v1854, 18
          %v1886 = vpop.permute.xlu0 %1885
          %1887 = vrot.lane.b32.xlu0 %v1855, 18
          %v1888 = vpop.permute.xlu0 %1887
          %1889 = vrot.lane.b32.xlu0 %v1856, 18
          %v1890 = vpop.permute.xlu0 %1889
          %1891 = vrot.lane.b32.xlu0 %v1857, 18
          %v1892 = vpop.permute.xlu0 %1891
          %1893 = vrot.lane.b32.xlu0 %v1858, 18
          %v1894 = vpop.permute.xlu0 %1893
          %1895 = vrot.lane.b32.xlu0 %v1859, 18
          %v1896 = vpop.permute.xlu0 %1895
          %1897 = vrot.lane.b32.xlu0 %v1860, 18
          %v1898 = vpop.permute.xlu0 %1897
          %v1899 = vsel %vm363, %v1884, %v1886
          %v1900 = vsel %vm363, %v1886, %v1888
          %v1901 = vsel %vm363, %v1888, %v1890
          %v1902 = vsel %vm363, %v1892, %v1894
          %v1903 = vsel %vm363, %v1894, %v1896
          %v1904 = vsel %vm363, %v1896, %v1898
          %vm1911 = vcmask 261120
          %v1913 = vsel %vm1911, %v1872, 0
          %v1916 = vsel %vm1911, %v1874, 0
          %1918 = vmatprep.subr.bf16.mxu0 %v1900
          %1919 = vmatpush1.bf16.msra.mxu0 %v1899
          %1920 = vmatprep.subr.bf16.mxu0 %v1903
          %1921 = vmatpush1.bf16.msra.mxu0 %v1902
          %1922 = vmatprep.subr.bf16.mxu0 0
          %1923 = vmatpush1.bf16.msra.mxu0 0
          %1924 = vmatprep.subr.bf16.mxu0 0
          %1925 = vmatpush1.bf16.msra.mxu0 0
          %1926 = vmatprep.subr.bf16.mxu0 0
          %1927 = vmatpush1.bf16.msra.mxu0 0
          %1928 = vmatprep.subr.bf16.mxu0 0
          %1929 = vmatpush1.bf16.msra.mxu0 0
          %1930 = vmatprep.subr.bf16.mxu0 0
          %1931 = vmatpush1.bf16.msra.mxu0 0
          %1932 = vmatprep.subr.bf16.mxu0 0
          %1933 = vmatpush1.bf16.msra.mxu0 0
          %1934 = vmatprep.subr.bf16.mxu0 0
          %1935 = vmatpush1.bf16.msra.mxu0 0
          %1936 = vmatprep.subr.bf16.mxu0 0
          %1937 = vmatpush1.bf16.msra.mxu0 0
          %1938 = vmatprep.subr.bf16.mxu0 0
          %1939 = vmatpush1.bf16.msra.mxu0 0
          %1940 = vmatprep.subr.bf16.mxu0 0
          %1941 = vmatpush1.bf16.msra.mxu0 0
          %1942 = vmatprep.subr.bf16.mxu0 0
          %1943 = vmatpush1.bf16.msra.mxu0 0
          %1944 = vmatprep.subr.bf16.mxu0 0
          %1945 = vmatpush1.bf16.msra.mxu0 0
          %1946 = vmatprep.subr.bf16.mxu0 0
          %1947 = vmatpush1.bf16.msra.mxu0 0
          %1948 = vmatprep.subr.bf16.mxu0 0
          %1949 = vmatpush1.bf16.msra.mxu0 0
          %1950 = vmatprep.mubr.bf16.mxu0 0
          %1951 = vmatmul.mubr.bf16.gmra.mrb[0].mxu0 %v1913
          %v1952 = vpop.f32.mrb[0].mxu0
          %v1953 = vadd.f32 0.0, %v1952
          %v1954 = vpop.f32.mrb[0].mxu0
          %v1955 = vadd.f32 0.0, %v1954
          %v1956 = vpop.f32.mrb[0].mxu0
          %v1957 = vadd.f32 0.0, %v1956
          %v1958 = vpop.f32.mrb[0].mxu0
          %v1959 = vadd.f32 0.0, %v1958
          %1960 = vmatprep.mubr.bf16.mxu0 0
          %1961 = vmatmul.mubr.bf16.gmra.mrb[0].mxu0 %v1916
          %v1962 = vpop.f32.mrb[0].mxu0
          %v1963 = vadd.f32 0.0, %v1962
          %v1964 = vpop.f32.mrb[0].mxu0
          %v1965 = vadd.f32 0.0, %v1964
          %v1966 = vpop.f32.mrb[0].mxu0
          %v1967 = vadd.f32 0.0, %v1966
          %v1968 = vpop.f32.mrb[0].mxu0
          %v1969 = vadd.f32 0.0, %v1968
          %1970 = vdwg.mxu0
          %1971 = vmatprep.subr.bf16.mxu0 0
          %1972 = vmatpush1.bf16.msra.mxu0 %v1901
          %1973 = vmatprep.subr.bf16.mxu0 0
          %1974 = vmatpush1.bf16.msra.mxu0 %v1904
          %1975 = vmatprep.subr.bf16.mxu0 0
          %1976 = vmatpush1.bf16.msra.mxu0 0
          %1977 = vmatprep.subr.bf16.mxu0 0
          %1978 = vmatpush1.bf16.msra.mxu0 0
          %1979 = vmatprep.subr.bf16.mxu0 0
          %1980 = vmatpush1.bf16.msra.mxu0 0
          %1981 = vmatprep.subr.bf16.mxu0 0
          %1982 = vmatpush1.bf16.msra.mxu0 0
          %1983 = vmatprep.subr.bf16.mxu0 0
          %1984 = vmatpush1.bf16.msra.mxu0 0
          %1985 = vmatprep.subr.bf16.mxu0 0
          %1986 = vmatpush1.bf16.msra.mxu0 0
          %1987 = vmatprep.subr.bf16.mxu0 0
          %1988 = vmatpush1.bf16.msra.mxu0 0
          %1989 = vmatprep.subr.bf16.mxu0 0
          %1990 = vmatpush1.bf16.msra.mxu0 0
          %1991 = vmatprep.subr.bf16.mxu0 0
          %1992 = vmatpush1.bf16.msra.mxu0 0
          %1993 = vmatprep.subr.bf16.mxu0 0
          %1994 = vmatpush1.bf16.msra.mxu0 0
          %1995 = vmatprep.subr.bf16.mxu0 0
          %1996 = vmatpush1.bf16.msra.mxu0 0
          %1997 = vmatprep.subr.bf16.mxu0 0
          %1998 = vmatpush1.bf16.msra.mxu0 0
          %1999 = vmatprep.subr.bf16.mxu0 0
          %2000 = vmatpush1.bf16.msra.mxu0 0
          %2001 = vmatprep.subr.bf16.mxu0 0
          %2002 = vmatpush1.bf16.msra.mxu0 0
          %2003 = vmatprep.mubr.bf16.mxu0 0
          %2004 = vmatmul.mubr.bf16.gmra.mrb[0].mxu0 %v1913
          %v2005 = vpop.f32.mrb[0].mxu0
          %v2006 = vadd.f32 0.0, %v2005
          %v2007 = vpop.f32.mrb[0].mxu0
          %v2008 = vpop.f32.mrb[0].mxu0
          %v2009 = vadd.f32 0.0, %v2008
          %v2010 = vpop.f32.mrb[0].mxu0
          %2011 = vmatprep.mubr.bf16.mxu0 0
          %2012 = vmatmul.mubr.bf16.gmra.mrb[0].mxu0 %v1916
          %v2013 = vpop.f32.mrb[0].mxu0
          %v2014 = vadd.f32 0.0, %v2013
          %v2015 = vpop.f32.mrb[0].mxu0
          %v2016 = vpop.f32.mrb[0].mxu0
          %v2017 = vadd.f32 0.0, %v2016
          %v2018 = vpop.f32.mrb[0].mxu0
          %2019 = vdwg.mxu0
          %2020 = vrot.lane.b32.xlu0 %v1853, 19
          %v2021 = vpop.permute.xlu0 %2020
          %2022 = vrot.lane.b32.xlu0 %v1854, 19
          %v2023 = vpop.permute.xlu0 %2022
          %2024 = vrot.lane.b32.xlu0 %v1855, 19
          %v2025 = vpop.permute.xlu0 %2024
          %2026 = vrot.lane.b32.xlu0 %v1856, 19
          %v2027 = vpop.permute.xlu0 %2026
          %2028 = vrot.lane.b32.xlu0 %v1857, 19
          %v2029 = vpop.permute.xlu0 %2028
          %2030 = vrot.lane.b32.xlu0 %v1858, 19
          %v2031 = vpop.permute.xlu0 %2030
          %2032 = vrot.lane.b32.xlu0 %v1859, 19
          %v2033 = vpop.permute.xlu0 %2032
          %2034 = vrot.lane.b32.xlu0 %v1860, 19
          %v2035 = vpop.permute.xlu0 %2034
          %v2036 = vsel %vm493, %v2021, %v2023
          %v2037 = vsel %vm493, %v2023, %v2025
          %v2038 = vsel %vm493, %v2025, %v2027
          %v2039 = vsel %vm493, %v2029, %v2031
          %v2040 = vsel %vm493, %v2031, %v2033
          %v2041 = vsel %vm493, %v2033, %v2035
          %v2049 = vsel %vm1911, %v1869, 0
          %v2052 = vsel %vm1911, %v1870, 0
          %2054 = vmatprep.subr.bf16.mxu0 %v2037
          %2055 = vmatpush1.bf16.msra.mxu0 %v2036
          %2056 = vmatprep.subr.bf16.mxu0 %v2040
          %2057 = vmatpush1.bf16.msra.mxu0 %v2039
          %2058 = vmatprep.subr.bf16.mxu0 0
          %2059 = vmatpush1.bf16.msra.mxu0 0
          %2060 = vmatprep.subr.bf16.mxu0 0
          %2061 = vmatpush1.bf16.msra.mxu0 0
          %2062 = vmatprep.subr.bf16.mxu0 0
          %2063 = vmatpush1.bf16.msra.mxu0 0
          %2064 = vmatprep.subr.bf16.mxu0 0
          %2065 = vmatpush1.bf16.msra.mxu0 0
          %2066 = vmatprep.subr.bf16.mxu0 0
          %2067 = vmatpush1.bf16.msra.mxu0 0
          %2068 = vmatprep.subr.bf16.mxu0 0
          %2069 = vmatpush1.bf16.msra.mxu0 0
          %2070 = vmatprep.subr.bf16.mxu0 0
          %2071 = vmatpush1.bf16.msra.mxu0 0
          %2072 = vmatprep.subr.bf16.mxu0 0
          %2073 = vmatpush1.bf16.msra.mxu0 0
          %2074 = vmatprep.subr.bf16.mxu0 0
          %2075 = vmatpush1.bf16.msra.mxu0 0
          %2076 = vmatprep.subr.bf16.mxu0 0
          %2077 = vmatpush1.bf16.msra.mxu0 0
          %2078 = vmatprep.subr.bf16.mxu0 0
          %2079 = vmatpush1.bf16.msra.mxu0 0
          %2080 = vmatprep.subr.bf16.mxu0 0
          %2081 = vmatpush1.bf16.msra.mxu0 0
          %2082 = vmatprep.subr.bf16.mxu0 0
          %2083 = vmatpush1.bf16.msra.mxu0 0
          %2084 = vmatprep.subr.bf16.mxu0 0
          %2085 = vmatpush1.bf16.msra.mxu0 0
          %2086 = vmatprep.mubr.bf16.mxu0 0
          %2087 = vmatmul.mubr.bf16.gmra.mrb[0].mxu0 %v2049
          %v2088 = vpop.f32.mrb[0].mxu0
          %v2089 = vadd.f32 %v1953, %v2088
          %v2090 = vpop.f32.mrb[0].mxu0
          %v2091 = vadd.f32 %v1955, %v2090
          %v2092 = vpop.f32.mrb[0].mxu0
          %v2093 = vadd.f32 %v1957, %v2092
          %v2094 = vpop.f32.mrb[0].mxu0
          %v2095 = vadd.f32 %v1959, %v2094
          %2096 = vmatprep.mubr.bf16.mxu0 0
          %2097 = vmatmul.mubr.bf16.gmra.mrb[0].mxu0 %v2052
          %v2098 = vpop.f32.mrb[0].mxu0
          %v2099 = vadd.f32 %v1963, %v2098
          %v2100 = vpop.f32.mrb[0].mxu0
          %v2101 = vadd.f32 %v1965, %v2100
          %v2102 = vpop.f32.mrb[0].mxu0
          %v2103 = vadd.f32 %v1967, %v2102
          %v2104 = vpop.f32.mrb[0].mxu0
          %v2105 = vadd.f32 %v1969, %v2104
          %2106 = vdwg.mxu0
          %2107 = vmatprep.subr.bf16.mxu0 0
          %2108 = vmatpush1.bf16.msra.mxu0 %v2038
          %2109 = vmatprep.subr.bf16.mxu0 0
          %2110 = vmatpush1.bf16.msra.mxu0 %v2041
          %2111 = vmatprep.subr.bf16.mxu0 0
          %2112 = vmatpush1.bf16.msra.mxu0 0
          %2113 = vmatprep.subr.bf16.mxu0 0
          %2114 = vmatpush1.bf16.msra.mxu0 0
          %2115 = vmatprep.subr.bf16.mxu0 0
          %2116 = vmatpush1.bf16.msra.mxu0 0
          %2117 = vmatprep.subr.bf16.mxu0 0
          %2118 = vmatpush1.bf16.msra.mxu0 0
          %2119 = vmatprep.subr.bf16.mxu0 0
          %2120 = vmatpush1.bf16.msra.mxu0 0
          %2121 = vmatprep.subr.bf16.mxu0 0
          %2122 = vmatpush1.bf16.msra.mxu0 0
          %2123 = vmatprep.subr.bf16.mxu0 0
          %2124 = vmatpush1.bf16.msra.mxu0 0
          %2125 = vmatprep.subr.bf16.mxu0 0
          %2126 = vmatpush1.bf16.msra.mxu0 0
          %2127 = vmatprep.subr.bf16.mxu0 0
          %2128 = vmatpush1.bf16.msra.mxu0 0
          %2129 = vmatprep.subr.bf16.mxu0 0
          %2130 = vmatpush1.bf16.msra.mxu0 0
          %2131 = vmatprep.subr.bf16.mxu0 0
          %2132 = vmatpush1.bf16.msra.mxu0 0
          %2133 = vmatprep.subr.bf16.mxu0 0
          %2134 = vmatpush1.bf16.msra.mxu0 0
          %2135 = vmatprep.subr.bf16.mxu0 0
          %2136 = vmatpush1.bf16.msra.mxu0 0
          %2137 = vmatprep.subr.bf16.mxu0 0
          %2138 = vmatpush1.bf16.msra.mxu0 0
          %2139 = vmatprep.mubr.bf16.mxu0 0
          %2140 = vmatmul.mubr.bf16.gmra.mrb[0].mxu0 %v2049
          %v2141 = vpop.f32.mrb[0].mxu0
          %v2142 = vadd.f32 %v2006, %v2141
          %v2143 = vpop.f32.mrb[0].mxu0
          %v2144 = vpop.f32.mrb[0].mxu0
          %v2145 = vadd.f32 %v2009, %v2144
          %v2146 = vpop.f32.mrb[0].mxu0
          %2147 = vmatprep.mubr.bf16.mxu0 0
          %2148 = vmatmul.mubr.bf16.gmra.mrb[0].mxu0 %v2052
          %v2149 = vpop.f32.mrb[0].mxu0
          %v2150 = vadd.f32 %v2014, %v2149
          %v2151 = vpop.f32.mrb[0].mxu0
          %v2152 = vpop.f32.mrb[0].mxu0
          %v2153 = vadd.f32 %v2017, %v2152
          %v2154 = vpop.f32.mrb[0].mxu0
          %2155 = vdwg.mxu0
          %2156 = vrot.lane.b32.xlu0 %v1869, 64
          %v2157 = vpop.permute.xlu0 %2156
          %2158 = vrot.lane.b32.xlu0 %v1870, 64
          %v2159 = vpop.permute.xlu0 %2158
          %2160 = vrot.lane.b32.xlu0 %v1853, 17
          %v2161 = vpop.permute.xlu0 %2160
          %2162 = vrot.lane.b32.xlu0 %v1854, 17
          %v2163 = vpop.permute.xlu0 %2162
          %2164 = vrot.lane.b32.xlu0 %v1855, 17
          %v2165 = vpop.permute.xlu0 %2164
          %2166 = vrot.lane.b32.xlu0 %v1856, 17
          %v2167 = vpop.permute.xlu0 %2166
          %2168 = vrot.lane.b32.xlu0 %v1857, 17
          %v2169 = vpop.permute.xlu0 %2168
          %2170 = vrot.lane.b32.xlu0 %v1858, 17
          %v2171 = vpop.permute.xlu0 %2170
          %2172 = vrot.lane.b32.xlu0 %v1859, 17
          %v2173 = vpop.permute.xlu0 %2172
          %2174 = vrot.lane.b32.xlu0 %v1860, 17
          %v2175 = vpop.permute.xlu0 %2174
          %v2176 = vsel %vm645, %v2161, %v2163
          %v2177 = vsel %vm645, %v2163, %v2165
          %v2178 = vsel %vm645, %v2165, %v2167
          %v2179 = vsel %vm645, %v2169, %v2171
          %v2180 = vsel %vm645, %v2171, %v2173
          %v2181 = vsel %vm645, %v2173, %v2175
          %v2189 = vsel %vm1911, %v2157, 0
          %v2192 = vsel %vm1911, %v2159, 0
          %2194 = vmatprep.subr.bf16.mxu0 %v2177
          %2195 = vmatpush1.bf16.msra.mxu0 %v2176
          %2196 = vmatprep.subr.bf16.mxu0 %v2180
          %2197 = vmatpush1.bf16.msra.mxu0 %v2179
          %2198 = vmatprep.subr.bf16.mxu0 0
          %2199 = vmatpush1.bf16.msra.mxu0 0
          %2200 = vmatprep.subr.bf16.mxu0 0
          %2201 = vmatpush1.bf16.msra.mxu0 0
          %2202 = vmatprep.subr.bf16.mxu0 0
          %2203 = vmatpush1.bf16.msra.mxu0 0
          %2204 = vmatprep.subr.bf16.mxu0 0
          %2205 = vmatpush1.bf16.msra.mxu0 0
          %2206 = vmatprep.subr.bf16.mxu0 0
          %2207 = vmatpush1.bf16.msra.mxu0 0
          %2208 = vmatprep.subr.bf16.mxu0 0
          %2209 = vmatpush1.bf16.msra.mxu0 0
          %2210 = vmatprep.subr.bf16.mxu0 0
          %2211 = vmatpush1.bf16.msra.mxu0 0
          %2212 = vmatprep.subr.bf16.mxu0 0
          %2213 = vmatpush1.bf16.msra.mxu0 0
          %2214 = vmatprep.subr.bf16.mxu0 0
          %2215 = vmatpush1.bf16.msra.mxu0 0
          %2216 = vmatprep.subr.bf16.mxu0 0
          %2217 = vmatpush1.bf16.msra.mxu0 0
          %2218 = vmatprep.subr.bf16.mxu0 0
          %2219 = vmatpush1.bf16.msra.mxu0 0
          %2220 = vmatprep.subr.bf16.mxu0 0
          %2221 = vmatpush1.bf16.msra.mxu0 0
          %2222 = vmatprep.subr.bf16.mxu0 0
          %2223 = vmatpush1.bf16.msra.mxu0 0
          %2224 = vmatprep.subr.bf16.mxu0 0
          %2225 = vmatpush1.bf16.msra.mxu0 0
          %2226 = vmatprep.mubr.bf16.mxu0 0
          %2227 = vmatmul.mubr.bf16.gmra.mrb[0].mxu0 %v2189
          %v2228 = vpop.f32.mrb[0].mxu0
          %v2229 = vadd.f32 0.0, %v2228
          %v2230 = vpop.f32.mrb[0].mxu0
          %v2231 = vadd.f32 0.0, %v2230
          %v2232 = vpop.f32.mrb[0].mxu0
          %v2233 = vadd.f32 0.0, %v2232
          %v2234 = vpop.f32.mrb[0].mxu0
          %v2235 = vadd.f32 0.0, %v2234
          %2236 = vmatprep.mubr.bf16.mxu0 0
          %2237 = vmatmul.mubr.bf16.gmra.mrb[0].mxu0 %v2192
          %v2238 = vpop.f32.mrb[0].mxu0
          %v2239 = vadd.f32 0.0, %v2238
          %v2240 = vpop.f32.mrb[0].mxu0
          %v2241 = vadd.f32 0.0, %v2240
          %v2242 = vpop.f32.mrb[0].mxu0
          %v2243 = vadd.f32 0.0, %v2242
          %v2244 = vpop.f32.mrb[0].mxu0
          %v2245 = vadd.f32 0.0, %v2244
          %2246 = vdwg.mxu0
          %2247 = vmatprep.subr.bf16.mxu0 0
          %2248 = vmatpush1.bf16.msra.mxu0 %v2178
          %2249 = vmatprep.subr.bf16.mxu0 0
          %2250 = vmatpush1.bf16.msra.mxu0 %v2181
          %2251 = vmatprep.subr.bf16.mxu0 0
          %2252 = vmatpush1.bf16.msra.mxu0 0
          %2253 = vmatprep.subr.bf16.mxu0 0
          %2254 = vmatpush1.bf16.msra.mxu0 0
          %2255 = vmatprep.subr.bf16.mxu0 0
          %2256 = vmatpush1.bf16.msra.mxu0 0
          %2257 = vmatprep.subr.bf16.mxu0 0
          %2258 = vmatpush1.bf16.msra.mxu0 0
          %2259 = vmatprep.subr.bf16.mxu0 0
          %2260 = vmatpush1.bf16.msra.mxu0 0
          %2261 = vmatprep.subr.bf16.mxu0 0
          %2262 = vmatpush1.bf16.msra.mxu0 0
          %2263 = vmatprep.subr.bf16.mxu0 0
          %2264 = vmatpush1.bf16.msra.mxu0 0
          %2265 = vmatprep.subr.bf16.mxu0 0
          %2266 = vmatpush1.bf16.msra.mxu0 0
          %2267 = vmatprep.subr.bf16.mxu0 0
          %2268 = vmatpush1.bf16.msra.mxu0 0
          %2269 = vmatprep.subr.bf16.mxu0 0
          %2270 = vmatpush1.bf16.msra.mxu0 0
          %2271 = vmatprep.subr.bf16.mxu0 0
          %2272 = vmatpush1.bf16.msra.mxu0 0
          %2273 = vmatprep.subr.bf16.mxu0 0
          %2274 = vmatpush1.bf16.msra.mxu0 0
          %2275 = vmatprep.subr.bf16.mxu0 0
          %2276 = vmatpush1.bf16.msra.mxu0 0
          %2277 = vmatprep.subr.bf16.mxu0 0
          %2278 = vmatpush1.bf16.msra.mxu0 0
          %2279 = vmatprep.mubr.bf16.mxu0 0
          %2280 = vmatmul.mubr.bf16.gmra.mrb[0].mxu0 %v2189
          %v2281 = vpop.f32.mrb[0].mxu0
          %v2282 = vadd.f32 0.0, %v2281
          %v2283 = vpop.f32.mrb[0].mxu0
          %v2284 = vpop.f32.mrb[0].mxu0
          %v2285 = vadd.f32 0.0, %v2284
          %v2286 = vpop.f32.mrb[0].mxu0
          %2287 = vmatprep.mubr.bf16.mxu0 0
          %2288 = vmatmul.mubr.bf16.gmra.mrb[0].mxu0 %v2192
          %v2289 = vpop.f32.mrb[0].mxu0
          %v2290 = vadd.f32 0.0, %v2289
          %v2291 = vpop.f32.mrb[0].mxu0
          %v2292 = vpop.f32.mrb[0].mxu0
          %v2293 = vadd.f32 0.0, %v2292
          %v2294 = vpop.f32.mrb[0].mxu0
          %2295 = vdwg.mxu0
          %v2296 = vadd.f32 %v2089, %v2229
          %v2297 = vadd.f32 %v2091, %v2231
          %v2298 = vadd.f32 %v2142, %v2282
          %v2299 = vadd.f32 %v2093, %v2233
          %v2300 = vadd.f32 %v2095, %v2235
          %v2301 = vadd.f32 %v2145, %v2285
          %v2302 = vadd.f32 %v2099, %v2239
          %v2303 = vadd.f32 %v2101, %v2241
          %v2304 = vadd.f32 %v2150, %v2290
          %v2305 = vadd.f32 %v2103, %v2243
          %v2306 = vadd.f32 %v2105, %v2245
          %v2307 = vadd.f32 %v2153, %v2293
          %2308 = vrot.lane.b32.xlu0 %v1869, 32
          %v2309 = vpop.permute.xlu0 %2308
          %2310 = vrot.lane.b32.xlu0 %v1870, 32
          %v2311 = vpop.permute.xlu0 %2310
          %2312 = vrot.lane.b32.xlu0 %v1853, 1
          %v2313 = vpop.permute.xlu0 %2312
          %2314 = vrot.lane.b32.xlu0 %v1854, 1
          %v2315 = vpop.permute.xlu0 %2314
          %2316 = vrot.lane.b32.xlu0 %v1855, 1
          %v2317 = vpop.permute.xlu0 %2316
          %2318 = vrot.lane.b32.xlu0 %v1856, 1
          %v2319 = vpop.permute.xlu0 %2318
          %2320 = vrot.lane.b32.xlu0 %v1857, 1
          %v2321 = vpop.permute.xlu0 %2320
          %2322 = vrot.lane.b32.xlu0 %v1858, 1
          %v2323 = vpop.permute.xlu0 %2322
          %2324 = vrot.lane.b32.xlu0 %v1859, 1
          %v2325 = vpop.permute.xlu0 %2324
          %2326 = vrot.lane.b32.xlu0 %v1860, 1
          %v2327 = vpop.permute.xlu0 %2326
          %v2328 = vsel %vm809, %v2313, %v2315
          %v2329 = vsel %vm809, %v2315, %v2317
          %v2330 = vsel %vm809, %v2317, %v2319
          %v2331 = vsel %vm809, %v2321, %v2323
          %v2332 = vsel %vm809, %v2323, %v2325
          %v2333 = vsel %vm809, %v2325, %v2327
          %v2341 = vsel %vm1911, %v2309, 0
          %v2344 = vsel %vm1911, %v2311, 0
          %2346 = vmatprep.subr.bf16.mxu0 %v2329
          %2347 = vmatpush1.bf16.msra.mxu0 %v2328
          %2348 = vmatprep.subr.bf16.mxu0 %v2332
          %2349 = vmatpush1.bf16.msra.mxu0 %v2331
          %2350 = vmatprep.subr.bf16.mxu0 0
          %2351 = vmatpush1.bf16.msra.mxu0 0
          %2352 = vmatprep.subr.bf16.mxu0 0
          %2353 = vmatpush1.bf16.msra.mxu0 0
          %2354 = vmatprep.subr.bf16.mxu0 0
          %2355 = vmatpush1.bf16.msra.mxu0 0
          %2356 = vmatprep.subr.bf16.mxu0 0
          %2357 = vmatpush1.bf16.msra.mxu0 0
          %2358 = vmatprep.subr.bf16.mxu0 0
          %2359 = vmatpush1.bf16.msra.mxu0 0
          %2360 = vmatprep.subr.bf16.mxu0 0
          %2361 = vmatpush1.bf16.msra.mxu0 0
          %2362 = vmatprep.subr.bf16.mxu0 0
          %2363 = vmatpush1.bf16.msra.mxu0 0
          %2364 = vmatprep.subr.bf16.mxu0 0
          %2365 = vmatpush1.bf16.msra.mxu0 0
          %2366 = vmatprep.subr.bf16.mxu0 0
          %2367 = vmatpush1.bf16.msra.mxu0 0
          %2368 = vmatprep.subr.bf16.mxu0 0
          %2369 = vmatpush1.bf16.msra.mxu0 0
          %2370 = vmatprep.subr.bf16.mxu0 0
          %2371 = vmatpush1.bf16.msra.mxu0 0
          %2372 = vmatprep.subr.bf16.mxu0 0
          %2373 = vmatpush1.bf16.msra.mxu0 0
          %2374 = vmatprep.subr.bf16.mxu0 0
          %2375 = vmatpush1.bf16.msra.mxu0 0
          %2376 = vmatprep.subr.bf16.mxu0 0
          %2377 = vmatpush1.bf16.msra.mxu0 0
          %2378 = vmatprep.mubr.bf16.mxu0 0
          %2379 = vmatmul.mubr.bf16.gmra.mrb[0].mxu0 %v2341
          %v2380 = vpop.f32.mrb[0].mxu0
          %v2381 = vadd.f32 0.0, %v2380
          %v2382 = vpop.f32.mrb[0].mxu0
          %v2383 = vadd.f32 0.0, %v2382
          %v2384 = vpop.f32.mrb[0].mxu0
          %v2385 = vadd.f32 0.0, %v2384
          %v2386 = vpop.f32.mrb[0].mxu0
          %v2387 = vadd.f32 0.0, %v2386
          %2388 = vmatprep.mubr.bf16.mxu0 0
          %2389 = vmatmul.mubr.bf16.gmra.mrb[0].mxu0 %v2344
          %v2390 = vpop.f32.mrb[0].mxu0
          %v2391 = vadd.f32 0.0, %v2390
          %v2392 = vpop.f32.mrb[0].mxu0
          %v2393 = vadd.f32 0.0, %v2392
          %v2394 = vpop.f32.mrb[0].mxu0
          %v2395 = vadd.f32 0.0, %v2394
          %v2396 = vpop.f32.mrb[0].mxu0
          %v2397 = vadd.f32 0.0, %v2396
          %2398 = vdwg.mxu0
          %2399 = vmatprep.subr.bf16.mxu0 0
          %2400 = vmatpush1.bf16.msra.mxu0 %v2330
          %2401 = vmatprep.subr.bf16.mxu0 0
          %2402 = vmatpush1.bf16.msra.mxu0 %v2333
          %2403 = vmatprep.subr.bf16.mxu0 0
          %2404 = vmatpush1.bf16.msra.mxu0 0
          %2405 = vmatprep.subr.bf16.mxu0 0
          %2406 = vmatpush1.bf16.msra.mxu0 0
          %2407 = vmatprep.subr.bf16.mxu0 0
          %2408 = vmatpush1.bf16.msra.mxu0 0
          %2409 = vmatprep.subr.bf16.mxu0 0
          %2410 = vmatpush1.bf16.msra.mxu0 0
          %2411 = vmatprep.subr.bf16.mxu0 0
          %2412 = vmatpush1.bf16.msra.mxu0 0
          %2413 = vmatprep.subr.bf16.mxu0 0
          %2414 = vmatpush1.bf16.msra.mxu0 0
          %2415 = vmatprep.subr.bf16.mxu0 0
          %2416 = vmatpush1.bf16.msra.mxu0 0
          %2417 = vmatprep.subr.bf16.mxu0 0
          %2418 = vmatpush1.bf16.msra.mxu0 0
          %2419 = vmatprep.subr.bf16.mxu0 0
          %2420 = vmatpush1.bf16.msra.mxu0 0
          %2421 = vmatprep.subr.bf16.mxu0 0
          %2422 = vmatpush1.bf16.msra.mxu0 0
          %2423 = vmatprep.subr.bf16.mxu0 0
          %2424 = vmatpush1.bf16.msra.mxu0 0
          %2425 = vmatprep.subr.bf16.mxu0 0
          %2426 = vmatpush1.bf16.msra.mxu0 0
          %2427 = vmatprep.subr.bf16.mxu0 0
          %2428 = vmatpush1.bf16.msra.mxu0 0
          %2429 = vmatprep.subr.bf16.mxu0 0
          %2430 = vmatpush1.bf16.msra.mxu0 0
          %2431 = vmatprep.mubr.bf16.mxu0 0
          %2432 = vmatmul.mubr.bf16.gmra.mrb[0].mxu0 %v2341
          %v2433 = vpop.f32.mrb[0].mxu0
          %v2434 = vadd.f32 0.0, %v2433
          %v2435 = vpop.f32.mrb[0].mxu0
          %v2436 = vpop.f32.mrb[0].mxu0
          %v2437 = vadd.f32 0.0, %v2436
          %v2438 = vpop.f32.mrb[0].mxu0
          %2439 = vmatprep.mubr.bf16.mxu0 0
          %2440 = vmatmul.mubr.bf16.gmra.mrb[0].mxu0 %v2344
          %v2441 = vpop.f32.mrb[0].mxu0
          %v2442 = vadd.f32 0.0, %v2441
          %v2443 = vpop.f32.mrb[0].mxu0
          %v2444 = vpop.f32.mrb[0].mxu0
          %v2445 = vadd.f32 0.0, %v2444
          %v2446 = vpop.f32.mrb[0].mxu0
          %2447 = vdwg.mxu0
          %v2448 = vadd.f32 %v2296, %v2381
          %v2449 = vadd.f32 %v2297, %v2383
          %v2450 = vadd.f32 %v2298, %v2434
          %v2451 = vadd.f32 %v2299, %v2385
          %v2452 = vadd.f32 %v2300, %v2387
          %v2453 = vadd.f32 %v2301, %v2437
          %v2454 = vadd.f32 %v2302, %v2391
          %v2455 = vadd.f32 %v2303, %v2393
          %v2456 = vadd.f32 %v2304, %v2442
          %v2457 = vadd.f32 %v2305, %v2395
          %v2458 = vadd.f32 %v2306, %v2397
          %v2459 = vadd.f32 %v2307, %v2445
          %v2460 = vunpack.c.h.b16 %v1839
          %v2461 = vunpack.c.h.b16 %v1841
          %v2462 = vunpack.c.h.b16 %v1843
          %v2463 = vunpack.c.h.b16 %v1845
          %v2464 = vpack.c.b16 %v2461, %v2460
          %v2465 = vpack.c.b16 %v2463, %v2462
          %v2467 = vsel %vm1911, %v2464, 0
          %v2470 = vsel %vm1911, %v2465, 0
          %2472 = vmatprep.subr.bf16.mxu0 %v1855
          %2473 = vmatpush1.bf16.msra.mxu0 %v1854
          %2474 = vmatprep.subr.bf16.mxu0 %v1859
          %2475 = vmatpush1.bf16.msra.mxu0 %v1858
          %2476 = vmatprep.subr.bf16.mxu0 0
          %2477 = vmatpush1.bf16.msra.mxu0 0
          %2478 = vmatprep.subr.bf16.mxu0 0
          %2479 = vmatpush1.bf16.msra.mxu0 0
          %2480 = vmatprep.subr.bf16.mxu0 0
          %2481 = vmatpush1.bf16.msra.mxu0 0
          %2482 = vmatprep.subr.bf16.mxu0 0
          %2483 = vmatpush1.bf16.msra.mxu0 0
          %2484 = vmatprep.subr.bf16.mxu0 0
          %2485 = vmatpush1.bf16.msra.mxu0 0
          %2486 = vmatprep.subr.bf16.mxu0 0
          %2487 = vmatpush1.bf16.msra.mxu0 0
          %2488 = vmatprep.subr.bf16.mxu0 0
          %2489 = vmatpush1.bf16.msra.mxu0 0
          %2490 = vmatprep.subr.bf16.mxu0 0
          %2491 = vmatpush1.bf16.msra.mxu0 0
          %2492 = vmatprep.subr.bf16.mxu0 0
          %2493 = vmatpush1.bf16.msra.mxu0 0
          %2494 = vmatprep.subr.bf16.mxu0 0
          %2495 = vmatpush1.bf16.msra.mxu0 0
          %2496 = vmatprep.subr.bf16.mxu0 0
          %2497 = vmatpush1.bf16.msra.mxu0 0
          %2498 = vmatprep.subr.bf16.mxu0 0
          %2499 = vmatpush1.bf16.msra.mxu0 0
          %2500 = vmatprep.subr.bf16.mxu0 0
          %2501 = vmatpush1.bf16.msra.mxu0 0
          %2502 = vmatprep.subr.bf16.mxu0 0
          %2503 = vmatpush1.bf16.msra.mxu0 0
          %2504 = vmatprep.mubr.bf16.mxu0 0
          %2505 = vmatmul.mubr.bf16.gmra.mrb[0].mxu0 %v2467
          %v2506 = vpop.f32.mrb[0].mxu0
          %v2507 = vadd.f32 0.0, %v2506
          %v2508 = vpop.f32.mrb[0].mxu0
          %v2509 = vadd.f32 0.0, %v2508
          %v2510 = vpop.f32.mrb[0].mxu0
          %v2511 = vadd.f32 0.0, %v2510
          %v2512 = vpop.f32.mrb[0].mxu0
          %v2513 = vadd.f32 0.0, %v2512
          %2514 = vmatprep.mubr.bf16.mxu0 0
          %2515 = vmatmul.mubr.bf16.gmra.mrb[0].mxu0 %v2470
          %v2516 = vpop.f32.mrb[0].mxu0
          %v2517 = vadd.f32 0.0, %v2516
          %v2518 = vpop.f32.mrb[0].mxu0
          %v2519 = vadd.f32 0.0, %v2518
          %v2520 = vpop.f32.mrb[0].mxu0
          %v2521 = vadd.f32 0.0, %v2520
          %v2522 = vpop.f32.mrb[0].mxu0
          %v2523 = vadd.f32 0.0, %v2522
          %2524 = vdwg.mxu0
          %2525 = vmatprep.subr.bf16.mxu0 0
          %2526 = vmatpush1.bf16.msra.mxu0 %v1856
          %2527 = vmatprep.subr.bf16.mxu0 0
          %2528 = vmatpush1.bf16.msra.mxu0 %v1860
          %2529 = vmatprep.subr.bf16.mxu0 0
          %2530 = vmatpush1.bf16.msra.mxu0 0
          %2531 = vmatprep.subr.bf16.mxu0 0
          %2532 = vmatpush1.bf16.msra.mxu0 0
          %2533 = vmatprep.subr.bf16.mxu0 0
          %2534 = vmatpush1.bf16.msra.mxu0 0
          %2535 = vmatprep.subr.bf16.mxu0 0
          %2536 = vmatpush1.bf16.msra.mxu0 0
          %2537 = vmatprep.subr.bf16.mxu0 0
          %2538 = vmatpush1.bf16.msra.mxu0 0
          %2539 = vmatprep.subr.bf16.mxu0 0
          %2540 = vmatpush1.bf16.msra.mxu0 0
          %2541 = vmatprep.subr.bf16.mxu0 0
          %2542 = vmatpush1.bf16.msra.mxu0 0
          %2543 = vmatprep.subr.bf16.mxu0 0
          %2544 = vmatpush1.bf16.msra.mxu0 0
          %2545 = vmatprep.subr.bf16.mxu0 0
          %2546 = vmatpush1.bf16.msra.mxu0 0
          %2547 = vmatprep.subr.bf16.mxu0 0
          %2548 = vmatpush1.bf16.msra.mxu0 0
          %2549 = vmatprep.subr.bf16.mxu0 0
          %2550 = vmatpush1.bf16.msra.mxu0 0
          %2551 = vmatprep.subr.bf16.mxu0 0
          %2552 = vmatpush1.bf16.msra.mxu0 0
          %2553 = vmatprep.subr.bf16.mxu0 0
          %2554 = vmatpush1.bf16.msra.mxu0 0
          %2555 = vmatprep.subr.bf16.mxu0 0
          %2556 = vmatpush1.bf16.msra.mxu0 0
          %2557 = vmatprep.mubr.bf16.mxu0 0
          %2558 = vmatmul.mubr.bf16.gmra.mrb[0].mxu0 %v2467
          %v2559 = vpop.f32.mrb[0].mxu0
          %v2560 = vadd.f32 0.0, %v2559
          %v2561 = vpop.f32.mrb[0].mxu0
          %v2562 = vpop.f32.mrb[0].mxu0
          %v2563 = vadd.f32 0.0, %v2562
          %v2564 = vpop.f32.mrb[0].mxu0
          %2565 = vmatprep.mubr.bf16.mxu0 0
          %2566 = vmatmul.mubr.bf16.gmra.mrb[0].mxu0 %v2470
          %v2567 = vpop.f32.mrb[0].mxu0
          %v2568 = vadd.f32 0.0, %v2567
          %v2569 = vpop.f32.mrb[0].mxu0
          %v2570 = vpop.f32.mrb[0].mxu0
          %v2571 = vadd.f32 0.0, %v2570
          %v2572 = vpop.f32.mrb[0].mxu0
          %2573 = vdwg.mxu0
          %v2574 = vadd.f32 %v2448, %v2507
          %v2575 = vadd.f32 %v2449, %v2509
          %v2576 = vadd.f32 %v2450, %v2560
          %v2577 = vadd.f32 %v2451, %v2511
          %v2578 = vadd.f32 %v2452, %v2513
          %v2579 = vadd.f32 %v2453, %v2563
          %v2580 = vadd.f32 %v2454, %v2517
          %v2581 = vadd.f32 %v2455, %v2519
          %v2582 = vadd.f32 %v2456, %v2568
          %v2583 = vadd.f32 %v2457, %v2521
          %v2584 = vadd.f32 %v2458, %v2523
          %v2585 = vadd.f32 %v2459, %v2571
          %2586 = vrot.lane.b32.xlu0 %v2464, 96
          %v2587 = vpop.permute.xlu0 %2586
          %2588 = vrot.lane.b32.xlu0 %v2465, 96
          %v2589 = vpop.permute.xlu0 %2588
          %2590 = vrot.lane.b32.xlu0 %v1854, 127
          %v2591 = vpop.permute.xlu0 %2590
          %2592 = vrot.lane.b32.xlu0 %v1855, 127
          %v2593 = vpop.permute.xlu0 %2592
          %2594 = vrot.lane.b32.xlu0 %v1856, 127
          %v2595 = vpop.permute.xlu0 %2594
          %2596 = vrot.lane.b32.xlu0 %v1858, 127
          %v2597 = vpop.permute.xlu0 %2596
          %2598 = vrot.lane.b32.xlu0 %v1859, 127
          %v2599 = vpop.permute.xlu0 %2598
          %2600 = vrot.lane.b32.xlu0 %v1860, 127
          %v2601 = vpop.permute.xlu0 %2600
          %v2602 = vsel %vm1121, %v2591, %v2593
          %v2603 = vsel %vm1121, %v2593, %v2595
          %v2604 = vsel %vm1121, %v2597, %v2599
          %v2605 = vsel %vm1121, %v2599, %v2601
          %v2613 = vsel %vm1911, %v2587, 0
          %v2616 = vsel %vm1911, %v2589, 0
          %2618 = vmatprep.subr.bf16.mxu0 %v2603
          %2619 = vmatpush1.bf16.msra.mxu0 %v2602
          %2620 = vmatprep.subr.bf16.mxu0 %v2605
          %2621 = vmatpush1.bf16.msra.mxu0 %v2604
          %2622 = vmatprep.subr.bf16.mxu0 0
          %2623 = vmatpush1.bf16.msra.mxu0 0
          %2624 = vmatprep.subr.bf16.mxu0 0
          %2625 = vmatpush1.bf16.msra.mxu0 0
          %2626 = vmatprep.subr.bf16.mxu0 0
          %2627 = vmatpush1.bf16.msra.mxu0 0
          %2628 = vmatprep.subr.bf16.mxu0 0
          %2629 = vmatpush1.bf16.msra.mxu0 0
          %2630 = vmatprep.subr.bf16.mxu0 0
          %2631 = vmatpush1.bf16.msra.mxu0 0
          %2632 = vmatprep.subr.bf16.mxu0 0
          %2633 = vmatpush1.bf16.msra.mxu0 0
          %2634 = vmatprep.subr.bf16.mxu0 0
          %2635 = vmatpush1.bf16.msra.mxu0 0
          %2636 = vmatprep.subr.bf16.mxu0 0
          %2637 = vmatpush1.bf16.msra.mxu0 0
          %2638 = vmatprep.subr.bf16.mxu0 0
          %2639 = vmatpush1.bf16.msra.mxu0 0
          %2640 = vmatprep.subr.bf16.mxu0 0
          %2641 = vmatpush1.bf16.msra.mxu0 0
          %2642 = vmatprep.subr.bf16.mxu0 0
          %2643 = vmatpush1.bf16.msra.mxu0 0
          %2644 = vmatprep.subr.bf16.mxu0 0
          %2645 = vmatpush1.bf16.msra.mxu0 0
          %2646 = vmatprep.subr.bf16.mxu0 0
          %2647 = vmatpush1.bf16.msra.mxu0 0
          %2648 = vmatprep.subr.bf16.mxu0 0
          %2649 = vmatpush1.bf16.msra.mxu0 0
          %2650 = vmatprep.mubr.bf16.mxu0 0
          %2651 = vmatmul.mubr.bf16.gmra.mrb[0].mxu0 %v2613
          %v2652 = vpop.f32.mrb[0].mxu0
          %v2653 = vadd.f32 0.0, %v2652
          %v2654 = vpop.f32.mrb[0].mxu0
          %v2655 = vadd.f32 0.0, %v2654
          %v2656 = vpop.f32.mrb[0].mxu0
          %v2657 = vadd.f32 0.0, %v2656
          %v2658 = vpop.f32.mrb[0].mxu0
          %v2659 = vadd.f32 0.0, %v2658
          %2660 = vmatprep.mubr.bf16.mxu0 0
          %2661 = vmatmul.mubr.bf16.gmra.mrb[0].mxu0 %v2616
          %v2662 = vpop.f32.mrb[0].mxu0
          %v2663 = vadd.f32 0.0, %v2662
          %v2664 = vpop.f32.mrb[0].mxu0
          %v2665 = vadd.f32 0.0, %v2664
          %v2666 = vpop.f32.mrb[0].mxu0
          %v2667 = vadd.f32 0.0, %v2666
          %v2668 = vpop.f32.mrb[0].mxu0
          %v2669 = vadd.f32 0.0, %v2668
          %2670 = vdwg.mxu0
          %2671 = vmatprep.subr.bf16.mxu0 0
          %2672 = vmatpush1.bf16.msra.mxu0 %v2595
          %2673 = vmatprep.subr.bf16.mxu0 0
          %2674 = vmatpush1.bf16.msra.mxu0 %v2601
          %2675 = vmatprep.subr.bf16.mxu0 0
          %2676 = vmatpush1.bf16.msra.mxu0 0
          %2677 = vmatprep.subr.bf16.mxu0 0
          %2678 = vmatpush1.bf16.msra.mxu0 0
          %2679 = vmatprep.subr.bf16.mxu0 0
          %2680 = vmatpush1.bf16.msra.mxu0 0
          %2681 = vmatprep.subr.bf16.mxu0 0
          %2682 = vmatpush1.bf16.msra.mxu0 0
          %2683 = vmatprep.subr.bf16.mxu0 0
          %2684 = vmatpush1.bf16.msra.mxu0 0
          %2685 = vmatprep.subr.bf16.mxu0 0
          %2686 = vmatpush1.bf16.msra.mxu0 0
          %2687 = vmatprep.subr.bf16.mxu0 0
          %2688 = vmatpush1.bf16.msra.mxu0 0
          %2689 = vmatprep.subr.bf16.mxu0 0
          %2690 = vmatpush1.bf16.msra.mxu0 0
          %2691 = vmatprep.subr.bf16.mxu0 0
          %2692 = vmatpush1.bf16.msra.mxu0 0
          %2693 = vmatprep.subr.bf16.mxu0 0
          %2694 = vmatpush1.bf16.msra.mxu0 0
          %2695 = vmatprep.subr.bf16.mxu0 0
          %2696 = vmatpush1.bf16.msra.mxu0 0
          %2697 = vmatprep.subr.bf16.mxu0 0
          %2698 = vmatpush1.bf16.msra.mxu0 0
          %2699 = vmatprep.subr.bf16.mxu0 0
          %2700 = vmatpush1.bf16.msra.mxu0 0
          %2701 = vmatprep.subr.bf16.mxu0 0
          %2702 = vmatpush1.bf16.msra.mxu0 0
          %2703 = vmatprep.mubr.bf16.mxu0 0
          %2704 = vmatmul.mubr.bf16.gmra.mrb[0].mxu0 %v2613
          %v2705 = vpop.f32.mrb[0].mxu0
          %v2706 = vadd.f32 0.0, %v2705
          %v2707 = vpop.f32.mrb[0].mxu0
          %v2708 = vpop.f32.mrb[0].mxu0
          %v2709 = vadd.f32 0.0, %v2708
          %v2710 = vpop.f32.mrb[0].mxu0
          %2711 = vmatprep.mubr.bf16.mxu0 0
          %2712 = vmatmul.mubr.bf16.gmra.mrb[0].mxu0 %v2616
          %v2713 = vpop.f32.mrb[0].mxu0
          %v2714 = vadd.f32 0.0, %v2713
          %v2715 = vpop.f32.mrb[0].mxu0
          %v2716 = vpop.f32.mrb[0].mxu0
          %v2717 = vadd.f32 0.0, %v2716
          %v2718 = vpop.f32.mrb[0].mxu0
          %2719 = vdwg.mxu0
          %v2720 = vadd.f32 %v2574, %v2653
          %v2721 = vadd.f32 %v2575, %v2655
          %v2722 = vadd.f32 %v2576, %v2706
          %v2723 = vadd.f32 %v2577, %v2657
          %v2724 = vadd.f32 %v2578, %v2659
          %v2725 = vadd.f32 %v2579, %v2709
          %v2726 = vadd.f32 %v2580, %v2663
          %v2727 = vadd.f32 %v2581, %v2665
          %v2728 = vadd.f32 %v2582, %v2714
          %v2729 = vadd.f32 %v2583, %v2667
          %v2730 = vadd.f32 %v2584, %v2669
          %v2731 = vadd.f32 %v2585, %v2717
          %2732 = vrot.lane.b32.xlu0 %v2464, 64
          %v2733 = vpop.permute.xlu0 %2732
          %2734 = vrot.lane.b32.xlu0 %v2465, 64
          %v2735 = vpop.permute.xlu0 %2734
          %2736 = vrot.lane.b32.xlu0 %v1854, 111
          %v2737 = vpop.permute.xlu0 %2736
          %2738 = vrot.lane.b32.xlu0 %v1855, 111
          %v2739 = vpop.permute.xlu0 %2738
          %2740 = vrot.lane.b32.xlu0 %v1856, 111
          %v2741 = vpop.permute.xlu0 %2740
          %2742 = vrot.lane.b32.xlu0 %v1858, 111
          %v2743 = vpop.permute.xlu0 %2742
          %2744 = vrot.lane.b32.xlu0 %v1859, 111
          %v2745 = vpop.permute.xlu0 %2744
          %2746 = vrot.lane.b32.xlu0 %v1860, 111
          %v2747 = vpop.permute.xlu0 %2746
          %v2748 = vsel %vm1281, %v2737, %v2739
          %v2749 = vsel %vm1281, %v2739, %v2741
          %v2750 = vsel %vm1281, %v2743, %v2745
          %v2751 = vsel %vm1281, %v2745, %v2747
          %v2759 = vsel %vm1911, %v2733, 0
          %v2762 = vsel %vm1911, %v2735, 0
          %2764 = vmatprep.subr.bf16.mxu0 %v2749
          %2765 = vmatpush1.bf16.msra.mxu0 %v2748
          %2766 = vmatprep.subr.bf16.mxu0 %v2751
          %2767 = vmatpush1.bf16.msra.mxu0 %v2750
          %2768 = vmatprep.subr.bf16.mxu0 0
          %2769 = vmatpush1.bf16.msra.mxu0 0
          %2770 = vmatprep.subr.bf16.mxu0 0
          %2771 = vmatpush1.bf16.msra.mxu0 0
          %2772 = vmatprep.subr.bf16.mxu0 0
          %2773 = vmatpush1.bf16.msra.mxu0 0
          %2774 = vmatprep.subr.bf16.mxu0 0
          %2775 = vmatpush1.bf16.msra.mxu0 0
          %2776 = vmatprep.subr.bf16.mxu0 0
          %2777 = vmatpush1.bf16.msra.mxu0 0
          %2778 = vmatprep.subr.bf16.mxu0 0
          %2779 = vmatpush1.bf16.msra.mxu0 0
          %2780 = vmatprep.subr.bf16.mxu0 0
          %2781 = vmatpush1.bf16.msra.mxu0 0
          %2782 = vmatprep.subr.bf16.mxu0 0
          %2783 = vmatpush1.bf16.msra.mxu0 0
          %2784 = vmatprep.subr.bf16.mxu0 0
          %2785 = vmatpush1.bf16.msra.mxu0 0
          %2786 = vmatprep.subr.bf16.mxu0 0
          %2787 = vmatpush1.bf16.msra.mxu0 0
          %2788 = vmatprep.subr.bf16.mxu0 0
          %2789 = vmatpush1.bf16.msra.mxu0 0
          %2790 = vmatprep.subr.bf16.mxu0 0
          %2791 = vmatpush1.bf16.msra.mxu0 0
          %2792 = vmatprep.subr.bf16.mxu0 0
          %2793 = vmatpush1.bf16.msra.mxu0 0
          %2794 = vmatprep.subr.bf16.mxu0 0
          %2795 = vmatpush1.bf16.msra.mxu0 0
          %2796 = vmatprep.mubr.bf16.mxu0 0
          %2797 = vmatmul.mubr.bf16.gmra.mrb[0].mxu0 %v2759
          %v2798 = vpop.f32.mrb[0].mxu0
          %v2799 = vadd.f32 0.0, %v2798
          %v2800 = vpop.f32.mrb[0].mxu0
          %v2801 = vadd.f32 0.0, %v2800
          %v2802 = vpop.f32.mrb[0].mxu0
          %v2803 = vadd.f32 0.0, %v2802
          %v2804 = vpop.f32.mrb[0].mxu0
          %v2805 = vadd.f32 0.0, %v2804
          %2806 = vmatprep.mubr.bf16.mxu0 0
          %2807 = vmatmul.mubr.bf16.gmra.mrb[0].mxu0 %v2762
          %v2808 = vpop.f32.mrb[0].mxu0
          %v2809 = vadd.f32 0.0, %v2808
          %v2810 = vpop.f32.mrb[0].mxu0
          %v2811 = vadd.f32 0.0, %v2810
          %v2812 = vpop.f32.mrb[0].mxu0
          %v2813 = vadd.f32 0.0, %v2812
          %v2814 = vpop.f32.mrb[0].mxu0
          %v2815 = vadd.f32 0.0, %v2814
          %2816 = vdwg.mxu0
          %2817 = vmatprep.subr.bf16.mxu0 0
          %2818 = vmatpush1.bf16.msra.mxu0 %v2741
          %2819 = vmatprep.subr.bf16.mxu0 0
          %2820 = vmatpush1.bf16.msra.mxu0 %v2747
          %2821 = vmatprep.subr.bf16.mxu0 0
          %2822 = vmatpush1.bf16.msra.mxu0 0
          %2823 = vmatprep.subr.bf16.mxu0 0
          %2824 = vmatpush1.bf16.msra.mxu0 0
          %2825 = vmatprep.subr.bf16.mxu0 0
          %2826 = vmatpush1.bf16.msra.mxu0 0
          %2827 = vmatprep.subr.bf16.mxu0 0
          %2828 = vmatpush1.bf16.msra.mxu0 0
          %2829 = vmatprep.subr.bf16.mxu0 0
          %2830 = vmatpush1.bf16.msra.mxu0 0
          %2831 = vmatprep.subr.bf16.mxu0 0
          %2832 = vmatpush1.bf16.msra.mxu0 0
          %2833 = vmatprep.subr.bf16.mxu0 0
          %2834 = vmatpush1.bf16.msra.mxu0 0
          %2835 = vmatprep.subr.bf16.mxu0 0
          %2836 = vmatpush1.bf16.msra.mxu0 0
          %2837 = vmatprep.subr.bf16.mxu0 0
          %2838 = vmatpush1.bf16.msra.mxu0 0
          %2839 = vmatprep.subr.bf16.mxu0 0
          %2840 = vmatpush1.bf16.msra.mxu0 0
          %2841 = vmatprep.subr.bf16.mxu0 0
          %2842 = vmatpush1.bf16.msra.mxu0 0
          %2843 = vmatprep.subr.bf16.mxu0 0
          %2844 = vmatpush1.bf16.msra.mxu0 0
          %2845 = vmatprep.subr.bf16.mxu0 0
          %2846 = vmatpush1.bf16.msra.mxu0 0
          %2847 = vmatprep.subr.bf16.mxu0 0
          %2848 = vmatpush1.bf16.msra.mxu0 0
          %2849 = vmatprep.mubr.bf16.mxu0 0
          %2850 = vmatmul.mubr.bf16.gmra.mrb[0].mxu0 %v2759
          %v2851 = vpop.f32.mrb[0].mxu0
          %v2852 = vadd.f32 0.0, %v2851
          %v2853 = vpop.f32.mrb[0].mxu0
          %v2854 = vpop.f32.mrb[0].mxu0
          %v2855 = vadd.f32 0.0, %v2854
          %v2856 = vpop.f32.mrb[0].mxu0
          %2857 = vmatprep.mubr.bf16.mxu0 0
          %2858 = vmatmul.mubr.bf16.gmra.mrb[0].mxu0 %v2762
          %v2859 = vpop.f32.mrb[0].mxu0
          %v2860 = vadd.f32 0.0, %v2859
          %v2861 = vpop.f32.mrb[0].mxu0
          %v2862 = vpop.f32.mrb[0].mxu0
          %v2863 = vadd.f32 0.0, %v2862
          %v2864 = vpop.f32.mrb[0].mxu0
          %2865 = vdwg.mxu0
          %v2866 = vadd.f32 %v2720, %v2799
          %v2867 = vadd.f32 %v2721, %v2801
          %v2868 = vadd.f32 %v2722, %v2852
          %v2869 = vadd.f32 %v2723, %v2803
          %v2870 = vadd.f32 %v2724, %v2805
          %v2871 = vadd.f32 %v2725, %v2855
          %v2872 = vadd.f32 %v2726, %v2809
          %v2873 = vadd.f32 %v2727, %v2811
          %v2874 = vadd.f32 %v2728, %v2860
          %v2875 = vadd.f32 %v2729, %v2813
          %v2876 = vadd.f32 %v2730, %v2815
          %v2877 = vadd.f32 %v2731, %v2863
          %2878 = vrot.lane.b32.xlu0 %v2464, 32
          %v2879 = vpop.permute.xlu0 %2878
          %2880 = vrot.lane.b32.xlu0 %v2465, 32
          %v2881 = vpop.permute.xlu0 %2880
          %2882 = vrot.lane.b32.xlu0 %v1854, 110
          %v2883 = vpop.permute.xlu0 %2882
          %2884 = vrot.lane.b32.xlu0 %v1855, 110
          %v2885 = vpop.permute.xlu0 %2884
          %2886 = vrot.lane.b32.xlu0 %v1856, 110
          %v2887 = vpop.permute.xlu0 %2886
          %2888 = vrot.lane.b32.xlu0 %v1858, 110
          %v2889 = vpop.permute.xlu0 %2888
          %2890 = vrot.lane.b32.xlu0 %v1859, 110
          %v2891 = vpop.permute.xlu0 %2890
          %2892 = vrot.lane.b32.xlu0 %v1860, 110
          %v2893 = vpop.permute.xlu0 %2892
          %v2894 = vsel %vm1441, %v2883, %v2885
          %v2895 = vsel %vm1441, %v2885, %v2887
          %v2896 = vsel %vm1441, %v2889, %v2891
          %v2897 = vsel %vm1441, %v2891, %v2893
          %v2905 = vsel %vm1911, %v2879, 0
          %v2908 = vsel %vm1911, %v2881, 0
          %2910 = vmatprep.subr.bf16.mxu0 %v2895
          %2911 = vmatpush1.bf16.msra.mxu0 %v2894
          %2912 = vmatprep.subr.bf16.mxu0 %v2897
          %2913 = vmatpush1.bf16.msra.mxu0 %v2896
          %2914 = vmatprep.subr.bf16.mxu0 0
          %2915 = vmatpush1.bf16.msra.mxu0 0
          %2916 = vmatprep.subr.bf16.mxu0 0
          %2917 = vmatpush1.bf16.msra.mxu0 0
          %2918 = vmatprep.subr.bf16.mxu0 0
          %2919 = vmatpush1.bf16.msra.mxu0 0
          %2920 = vmatprep.subr.bf16.mxu0 0
          %2921 = vmatpush1.bf16.msra.mxu0 0
          %2922 = vmatprep.subr.bf16.mxu0 0
          %2923 = vmatpush1.bf16.msra.mxu0 0
          %2924 = vmatprep.subr.bf16.mxu0 0
          %2925 = vmatpush1.bf16.msra.mxu0 0
          %2926 = vmatprep.subr.bf16.mxu0 0
          %2927 = vmatpush1.bf16.msra.mxu0 0
          %2928 = vmatprep.subr.bf16.mxu0 0
          %2929 = vmatpush1.bf16.msra.mxu0 0
          %2930 = vmatprep.subr.bf16.mxu0 0
          %2931 = vmatpush1.bf16.msra.mxu0 0
          %2932 = vmatprep.subr.bf16.mxu0 0
          %2933 = vmatpush1.bf16.msra.mxu0 0
          %2934 = vmatprep.subr.bf16.mxu0 0
          %2935 = vmatpush1.bf16.msra.mxu0 0
          %2936 = vmatprep.subr.bf16.mxu0 0
          %2937 = vmatpush1.bf16.msra.mxu0 0
          %2938 = vmatprep.subr.bf16.mxu0 0
          %2939 = vmatpush1.bf16.msra.mxu0 0
          %2940 = vmatprep.subr.bf16.mxu0 0
          %2941 = vmatpush1.bf16.msra.mxu0 0
          %2942 = vmatprep.mubr.bf16.mxu0 0
          %2943 = vmatmul.mubr.bf16.gmra.mrb[0].mxu0 %v2905
          %v2944 = vpop.f32.mrb[0].mxu0
          %v2945 = vadd.f32 0.0, %v2944
          %v2946 = vpop.f32.mrb[0].mxu0
          %v2947 = vadd.f32 0.0, %v2946
          %v2948 = vpop.f32.mrb[0].mxu0
          %v2949 = vadd.f32 0.0, %v2948
          %v2950 = vpop.f32.mrb[0].mxu0
          %v2951 = vadd.f32 0.0, %v2950
          %2952 = vmatprep.mubr.bf16.mxu0 0
          %2953 = vmatmul.mubr.bf16.gmra.mrb[0].mxu0 %v2908
          %v2954 = vpop.f32.mrb[0].mxu0
          %v2955 = vadd.f32 0.0, %v2954
          %v2956 = vpop.f32.mrb[0].mxu0
          %v2957 = vadd.f32 0.0, %v2956
          %v2958 = vpop.f32.mrb[0].mxu0
          %v2959 = vadd.f32 0.0, %v2958
          %v2960 = vpop.f32.mrb[0].mxu0
          %v2961 = vadd.f32 0.0, %v2960
          %2962 = vdwg.mxu0
          %2963 = vmatprep.subr.bf16.mxu0 0
          %2964 = vmatpush1.bf16.msra.mxu0 %v2887
          %2965 = vmatprep.subr.bf16.mxu0 0
          %2966 = vmatpush1.bf16.msra.mxu0 %v2893
          %2967 = vmatprep.subr.bf16.mxu0 0
          %2968 = vmatpush1.bf16.msra.mxu0 0
          %2969 = vmatprep.subr.bf16.mxu0 0
          %2970 = vmatpush1.bf16.msra.mxu0 0
          %2971 = vmatprep.subr.bf16.mxu0 0
          %2972 = vmatpush1.bf16.msra.mxu0 0
          %2973 = vmatprep.subr.bf16.mxu0 0
          %2974 = vmatpush1.bf16.msra.mxu0 0
          %2975 = vmatprep.subr.bf16.mxu0 0
          %2976 = vmatpush1.bf16.msra.mxu0 0
          %2977 = vmatprep.subr.bf16.mxu0 0
          %2978 = vmatpush1.bf16.msra.mxu0 0
          %2979 = vmatprep.subr.bf16.mxu0 0
          %2980 = vmatpush1.bf16.msra.mxu0 0
          %2981 = vmatprep.subr.bf16.mxu0 0
          %2982 = vmatpush1.bf16.msra.mxu0 0
          %2983 = vmatprep.subr.bf16.mxu0 0
          %2984 = vmatpush1.bf16.msra.mxu0 0
          %2985 = vmatprep.subr.bf16.mxu0 0
          %2986 = vmatpush1.bf16.msra.mxu0 0
          %2987 = vmatprep.subr.bf16.mxu0 0
          %2988 = vmatpush1.bf16.msra.mxu0 0
          %2989 = vmatprep.subr.bf16.mxu0 0
          %2990 = vmatpush1.bf16.msra.mxu0 0
          %2991 = vmatprep.subr.bf16.mxu0 0
          %2992 = vmatpush1.bf16.msra.mxu0 0
          %2993 = vmatprep.subr.bf16.mxu0 0
          %2994 = vmatpush1.bf16.msra.mxu0 0
          %2995 = vmatprep.mubr.bf16.mxu0 0
          %2996 = vmatmul.mubr.bf16.gmra.mrb[0].mxu0 %v2905
          %v2997 = vpop.f32.mrb[0].mxu0
          %v2998 = vadd.f32 0.0, %v2997
          %v2999 = vpop.f32.mrb[0].mxu0
          %v3000 = vpop.f32.mrb[0].mxu0
          %v3001 = vadd.f32 0.0, %v3000
          %v3002 = vpop.f32.mrb[0].mxu0
          %3003 = vmatprep.mubr.bf16.mxu0 0
          %3004 = vmatmul.mubr.bf16.gmra.mrb[0].mxu0 %v2908
          %v3005 = vpop.f32.mrb[0].mxu0
          %v3006 = vadd.f32 0.0, %v3005
          %v3007 = vpop.f32.mrb[0].mxu0
          %v3008 = vpop.f32.mrb[0].mxu0
          %v3009 = vadd.f32 0.0, %v3008
          %v3010 = vpop.f32.mrb[0].mxu0
          %3011 = vdwg.mxu0
          %v3012 = vadd.f32 %v2866, %v2945
          %v3013 = vadd.f32 %v2867, %v2947
          %v3014 = vadd.f32 %v2868, %v2998
          %v3015 = vadd.f32 %v2869, %v2949
          %v3016 = vadd.f32 %v2870, %v2951
          %v3017 = vadd.f32 %v2871, %v3001
          %v3018 = vadd.f32 %v2872, %v2955
          %v3019 = vadd.f32 %v2873, %v2957
          %v3020 = vadd.f32 %v2874, %v3006
          %v3021 = vadd.f32 %v2875, %v2959
          %v3022 = vadd.f32 %v2876, %v2961
          %v3023 = vadd.f32 %v2877, %v3009
          %v3028 = vunpack.c.l.b16 %v1840
          %v3029 = vunpack.c.l.b16 %v1842
          %v3030 = vunpack.c.l.b16 %v1844
          %v3031 = vunpack.c.l.b16 %v1846
          %v3032 = vpack.c.b16 %v3029, %v3028
          %v3033 = vpack.c.b16 %v3031, %v3030
          %3034 = vrot.lane.b32.xlu0 %v1854, 109
          %v3035 = vpop.permute.xlu0 %3034
          %3036 = vrot.lane.b32.xlu0 %v1855, 109
          %v3037 = vpop.permute.xlu0 %3036
          %3038 = vrot.lane.b32.xlu0 %v1856, 109
          %v3039 = vpop.permute.xlu0 %3038
          %3040 = vrot.lane.b32.xlu0 %v1858, 109
          %v3041 = vpop.permute.xlu0 %3040
          %3042 = vrot.lane.b32.xlu0 %v1859, 109
          %v3043 = vpop.permute.xlu0 %3042
          %3044 = vrot.lane.b32.xlu0 %v1860, 109
          %v3045 = vpop.permute.xlu0 %3044
          %v3046 = vsel %vm1601, %v3035, %v3037
          %v3047 = vsel %vm1601, %v3037, %v3039
          %v3048 = vsel %vm1601, %v3041, %v3043
          %v3049 = vsel %vm1601, %v3043, %v3045
          %v3057 = vsel %vm1911, %v3032, 0
          %v3060 = vsel %vm1911, %v3033, 0
          %3062 = vmatprep.subr.bf16.mxu0 %v3047
          %3063 = vmatpush1.bf16.msra.mxu0 %v3046
          %3064 = vmatprep.subr.bf16.mxu0 %v3049
          %3065 = vmatpush1.bf16.msra.mxu0 %v3048
          %3066 = vmatprep.subr.bf16.mxu0 0
          %3067 = vmatpush1.bf16.msra.mxu0 0
          %3068 = vmatprep.subr.bf16.mxu0 0
          %3069 = vmatpush1.bf16.msra.mxu0 0
          %3070 = vmatprep.subr.bf16.mxu0 0
          %3071 = vmatpush1.bf16.msra.mxu0 0
          %3072 = vmatprep.subr.bf16.mxu0 0
          %3073 = vmatpush1.bf16.msra.mxu0 0
          %3074 = vmatprep.subr.bf16.mxu0 0
          %3075 = vmatpush1.bf16.msra.mxu0 0
          %3076 = vmatprep.subr.bf16.mxu0 0
          %3077 = vmatpush1.bf16.msra.mxu0 0
          %3078 = vmatprep.subr.bf16.mxu0 0
          %3079 = vmatpush1.bf16.msra.mxu0 0
          %3080 = vmatprep.subr.bf16.mxu0 0
          %3081 = vmatpush1.bf16.msra.mxu0 0
          %3082 = vmatprep.subr.bf16.mxu0 0
          %3083 = vmatpush1.bf16.msra.mxu0 0
          %3084 = vmatprep.subr.bf16.mxu0 0
          %3085 = vmatpush1.bf16.msra.mxu0 0
          %3086 = vmatprep.subr.bf16.mxu0 0
          %3087 = vmatpush1.bf16.msra.mxu0 0
          %3088 = vmatprep.subr.bf16.mxu0 0
          %3089 = vmatpush1.bf16.msra.mxu0 0
          %3090 = vmatprep.subr.bf16.mxu0 0
          %3091 = vmatpush1.bf16.msra.mxu0 0
          %3092 = vmatprep.subr.bf16.mxu0 0
          %3093 = vmatpush1.bf16.msra.mxu0 0
          %3094 = vmatprep.mubr.bf16.mxu0 0
          %3095 = vmatmul.mubr.bf16.gmra.mrb[0].mxu0 %v3057
          %v3096 = vpop.f32.mrb[0].mxu0
          %v3097 = vadd.f32 0.0, %v3096
          %v3098 = vpop.f32.mrb[0].mxu0
          %v3099 = vadd.f32 0.0, %v3098
          %v3100 = vpop.f32.mrb[0].mxu0
          %v3101 = vadd.f32 0.0, %v3100
          %v3102 = vpop.f32.mrb[0].mxu0
          %v3103 = vadd.f32 0.0, %v3102
          %3104 = vmatprep.mubr.bf16.mxu0 0
          %3105 = vmatmul.mubr.bf16.gmra.mrb[0].mxu0 %v3060
          %v3106 = vpop.f32.mrb[0].mxu0
          %v3107 = vadd.f32 0.0, %v3106
          %v3108 = vpop.f32.mrb[0].mxu0
          %v3109 = vadd.f32 0.0, %v3108
          %v3110 = vpop.f32.mrb[0].mxu0
          %v3111 = vadd.f32 0.0, %v3110
          %v3112 = vpop.f32.mrb[0].mxu0
          %v3113 = vadd.f32 0.0, %v3112
          %3114 = vdwg.mxu0
          %3115 = vmatprep.subr.bf16.mxu0 0
          %3116 = vmatpush1.bf16.msra.mxu0 %v3039
          %3117 = vmatprep.subr.bf16.mxu0 0
          %3118 = vmatpush1.bf16.msra.mxu0 %v3045
          %3119 = vmatprep.subr.bf16.mxu0 0
          %3120 = vmatpush1.bf16.msra.mxu0 0
          %3121 = vmatprep.subr.bf16.mxu0 0
          %3122 = vmatpush1.bf16.msra.mxu0 0
          %3123 = vmatprep.subr.bf16.mxu0 0
          %3124 = vmatpush1.bf16.msra.mxu0 0
          %3125 = vmatprep.subr.bf16.mxu0 0
          %3126 = vmatpush1.bf16.msra.mxu0 0
          %3127 = vmatprep.subr.bf16.mxu0 0
          %3128 = vmatpush1.bf16.msra.mxu0 0
          %3129 = vmatprep.subr.bf16.mxu0 0
          %3130 = vmatpush1.bf16.msra.mxu0 0
          %3131 = vmatprep.subr.bf16.mxu0 0
          %3132 = vmatpush1.bf16.msra.mxu0 0
          %3133 = vmatprep.subr.bf16.mxu0 0
          %3134 = vmatpush1.bf16.msra.mxu0 0
          %3135 = vmatprep.subr.bf16.mxu0 0
          %3136 = vmatpush1.bf16.msra.mxu0 0
          %3137 = vmatprep.subr.bf16.mxu0 0
          %3138 = vmatpush1.bf16.msra.mxu0 0
          %3139 = vmatprep.subr.bf16.mxu0 0
          %3140 = vmatpush1.bf16.msra.mxu0 0
          %3141 = vmatprep.subr.bf16.mxu0 0
          %3142 = vmatpush1.bf16.msra.mxu0 0
          %3143 = vmatprep.subr.bf16.mxu0 0
          %3144 = vmatpush1.bf16.msra.mxu0 0
          %3145 = vmatprep.subr.bf16.mxu0 0
          %3146 = vmatpush1.bf16.msra.mxu0 0
          %3147 = vmatprep.mubr.bf16.mxu0 0
          %3148 = vmatmul.mubr.bf16.gmra.mrb[0].mxu0 %v3057
          %v3149 = vpop.f32.mrb[0].mxu0
          %v3150 = vadd.f32 0.0, %v3149
          %v3151 = vpop.f32.mrb[0].mxu0
          %v3152 = vpop.f32.mrb[0].mxu0
          %v3153 = vadd.f32 0.0, %v3152
          %v3154 = vpop.f32.mrb[0].mxu0
          %3155 = vmatprep.mubr.bf16.mxu0 0
          %3156 = vmatmul.mubr.bf16.gmra.mrb[0].mxu0 %v3060
          %v3157 = vpop.f32.mrb[0].mxu0
          %v3158 = vadd.f32 0.0, %v3157
          %v3159 = vpop.f32.mrb[0].mxu0
          %v3160 = vpop.f32.mrb[0].mxu0
          %v3161 = vadd.f32 0.0, %v3160
          %v3162 = vpop.f32.mrb[0].mxu0
          %3163 = vdwg.mxu0
          %v3164 = vadd.f32 %v3012, %v3097
          %v3165 = vadd.f32 %v3013, %v3099
          %v3166 = vadd.f32 %v3014, %v3150
          %v3167 = vadd.f32 %v3015, %v3101
          %v3168 = vadd.f32 %v3016, %v3103
          %v3169 = vadd.f32 %v3017, %v3153
          %v3170 = vadd.f32 %v3018, %v3107
          %v3171 = vadd.f32 %v3019, %v3109
          %v3172 = vadd.f32 %v3020, %v3158
          %v3173 = vadd.f32 %v3021, %v3111
          %v3174 = vadd.f32 %v3022, %v3113
          %v3175 = vadd.f32 %v3023, %v3161
          %3177 = vset.pattern.permute.xlu0 0
          %3178 = vperm.xlu0 %3177, %v1849
          %v3179 = vpop.permute.xlu0 %3178
          %3182 = vset.pattern.permute.xlu0 0
          %3183 = vperm.xlu0 %3182, %v1850
          %v3184 = vpop.permute.xlu0 %3183
          %3187 = vset.pattern.permute.xlu0 0
          %3188 = vperm.xlu0 %3187, %v1851
          %v3189 = vpop.permute.xlu0 %3188
          %3192 = vset.pattern.permute.xlu0 0
          %3193 = vperm.xlu0 %3192, %v1852
          %v3194 = vpop.permute.xlu0 %3193
          %v3196 = vadd.f32 %v3164, %v3179
          %v3197 = vadd.f32 %v3165, %v3179
          %v3198 = vadd.f32 %v3166, %v3179
          %v3199 = vadd.f32 %v3167, %v3184
          %v3200 = vadd.f32 %v3168, %v3184
          %v3201 = vadd.f32 %v3169, %v3184
          %v3202 = vadd.f32 %v3170, %v3189
          %v3203 = vadd.f32 %v3171, %v3189
          %v3204 = vadd.f32 %v3172, %v3189
          %v3205 = vadd.f32 %v3173, %v3194
          %v3206 = vadd.f32 %v3174, %v3194
          %v3207 = vadd.f32 %v3175, %v3194
          %v3208 = vmul.f32 %v3196, 0.2
          %v3209 = vmul.f32 %v3197, 0.2
          %v3210 = vmul.f32 %v3198, 0.2
          %v3211 = vmul.f32 %v3199, 0.2
          %v3212 = vmul.f32 %v3200, 0.2
          %v3213 = vmul.f32 %v3201, 0.2
          %v3214 = vmul.f32 %v3202, 0.2
          %v3215 = vmul.f32 %v3203, 0.2
          %v3216 = vmul.f32 %v3204, 0.2
          %v3217 = vmul.f32 %v3205, 0.2
          %v3218 = vmul.f32 %v3206, 0.2
          %v3219 = vmul.f32 %v3207, 0.2
          %v3220 = vmax.f32 %v3196, %v3208
          %v3221 = vmax.f32 %v3197, %v3209
          %v3222 = vmax.f32 %v3198, %v3210
          %v3223 = vmax.f32 %v3199, %v3211
          %v3224 = vmax.f32 %v3200, %v3212
          %v3225 = vmax.f32 %v3201, %v3213
          %v3226 = vmax.f32 %v3202, %v3214
          %v3227 = vmax.f32 %v3203, %v3215
          %v3228 = vmax.f32 %v3204, %v3216
          %v3229 = vmax.f32 %v3205, %v3217
          %v3230 = vmax.f32 %v3206, %v3218
          %v3231 = vmax.f32 %v3207, %v3219
          %v3232 = vmul.f32 %v3220, %v1769
          %v3233 = vmul.f32 %v3221, %v1773
          %v3234 = vmul.f32 %v3222, %v1777
          %v3235 = vmul.f32 %v3223, %v1769
          %v3236 = vmul.f32 %v3224, %v1773
          %v3237 = vmul.f32 %v3225, %v1777
          %v3238 = vmul.f32 %v3226, %v1769
          %v3239 = vmul.f32 %v3227, %v1773
          %v3240 = vmul.f32 %v3228, %v1777
          %v3241 = vmul.f32 %v3229, %v1769
          %v3242 = vmul.f32 %v3230, %v1773
          %v3243 = vmul.f32 %v3231, %v1777
          %v3244 = vpack.c.bf16 %v3235, %v3232
          %v3245 = vpack.c.bf16 %v3236, %v3233
          %v3246 = vpack.c.bf16 %v3237, %v3234
          %v3247 = vpack.c.bf16 %v3241, %v3238
          %v3248 = vpack.c.bf16 %v3242, %v3239
          %v3249 = vpack.c.bf16 %v3243, %v3240
          %3250 = vst [vmem:[#allocation3 + $0x8] sm:$0xff] %v3244
          %3251 = vst [vmem:[#allocation3 + $0x10] sm:$0xff] %v3245
          %3252 = vst.msk [vmem:[#allocation3 + $0x18] sm:$0xff] %vm276, %v3246
          %3253 = vst [vmem:[#allocation3 + $0x30] sm:$0xff] %v3247
          %3254 = vst [vmem:[#allocation3 + $0x38] sm:$0xff] %v3248
          %3255 = vst.msk [vmem:[#allocation3 + $0x40] sm:$0xff] %vm276, %v3249
          %s3256 = sadd.s32 %s1835, 1
          %s3257 = smul.u32 %s3256, 12
          %s3258 = smul.addr %s3257, 4
          %s3259 = scalar_lea.vmem [#allocation5], %s3258
          %v3260 = vld [vmem:[%s3259] sm:$0xff]
          %v3261 = vld [vmem:[%s3259 + $0x8] sm:$0xf]
          %v3262 = vld [vmem:[%s3259 + $0xc] sm:$0xff]
          %v3263 = vld [vmem:[%s3259 + $0x14] sm:$0xf]
          %v3264 = vld [vmem:[%s3259 + $0x18] sm:$0xff]
          %v3265 = vld [vmem:[%s3259 + $0x20] sm:$0xf]
          %v3266 = vld [vmem:[%s3259 + $0x24] sm:$0xff]
          %v3267 = vld [vmem:[%s3259 + $0x2c] sm:$0xf]
          %s3268 = smul.u32 %s3256, 32
          %s3269 = scalar_lea.vmem %s5, %s3268
          %v3270 = vld [vmem:[%s3269] sm:$0xff]
          %v3271 = vld [vmem:[%s3269 + $0x8] sm:$0xff]
          %v3272 = vld [vmem:[%s3269 + $0x10] sm:$0xff]
          %v3273 = vld [vmem:[%s3269 + $0x18] sm:$0xff]
          %v3274 = vld [vmem:[#allocation3] sm:$0xff]
          %v3275 = vld [vmem:[#allocation3 + $0x8] sm:$0xff]
          %v3276 = vld [vmem:[#allocation3 + $0x10] sm:$0xff]
          %v3277 = vld [vmem:[#allocation3 + $0x18] sm:$0xff]
          %v3278 = vld [vmem:[#allocation3 + $0x28] sm:$0xff]
          %v3279 = vld [vmem:[#allocation3 + $0x30] sm:$0xff]
          %v3280 = vld [vmem:[#allocation3 + $0x38] sm:$0xff]
          %v3281 = vld [vmem:[#allocation3 + $0x40] sm:$0xff]
          %v3286 = vunpack.c.l.b16 %v3260
          %v3287 = vunpack.c.l.b16 %v3262
          %v3288 = vunpack.c.l.b16 %v3264
          %v3289 = vunpack.c.l.b16 %v3266
          %v3290 = vpack.c.b16 %v3287, %v3286
          %v3291 = vpack.c.b16 %v3289, %v3288
          %3292 = vrot.lane.b32.xlu0 %v3290, 96
          %v3293 = vpop.permute.xlu0 %3292
          %3294 = vrot.lane.b32.xlu0 %v3291, 96
          %v3295 = vpop.permute.xlu0 %3294
          %3304 = vrot.lane.b32.xlu0 %v3274, 18
          %v3305 = vpop.permute.xlu0 %3304
          %3306 = vrot.lane.b32.xlu0 %v3275, 18
          %v3307 = vpop.permute.xlu0 %3306
          %3308 = vrot.lane.b32.xlu0 %v3276, 18
          %v3309 = vpop.permute.xlu0 %3308
          %3310 = vrot.lane.b32.xlu0 %v3277, 18
          %v3311 = vpop.permute.xlu0 %3310
          %3312 = vrot.lane.b32.xlu0 %v3278, 18
          %v3313 = vpop.permute.xlu0 %3312
          %3314 = vrot.lane.b32.xlu0 %v3279, 18
          %v3315 = vpop.permute.xlu0 %3314
          %3316 = vrot.lane.b32.xlu0 %v3280, 18
          %v3317 = vpop.permute.xlu0 %3316
          %3318 = vrot.lane.b32.xlu0 %v3281, 18
          %v3319 = vpop.permute.xlu0 %3318
          %v3320 = vsel %vm363, %v3305, %v3307
          %v3321 = vsel %vm363, %v3307, %v3309
          %v3322 = vsel %vm363, %v3309, %v3311
          %v3323 = vsel %vm363, %v3313, %v3315
          %v3324 = vsel %vm363, %v3315, %v3317
          %v3325 = vsel %vm363, %v3317, %v3319
          %v3333 = vsel %vm1911, %v3293, 0
          %v3336 = vsel %vm1911, %v3295, 0
          %3338 = vmatprep.subr.bf16.mxu0 %v3321
          %3339 = vmatpush1.bf16.msra.mxu0 %v3320
          %3340 = vmatprep.subr.bf16.mxu0 %v3324
          %3341 = vmatpush1.bf16.msra.mxu0 %v3323
          %3342 = vmatprep.subr.bf16.mxu0 0
          %3343 = vmatpush1.bf16.msra.mxu0 0
          %3344 = vmatprep.subr.bf16.mxu0 0
          %3345 = vmatpush1.bf16.msra.mxu0 0
          %3346 = vmatprep.subr.bf16.mxu0 0
          %3347 = vmatpush1.bf16.msra.mxu0 0
          %3348 = vmatprep.subr.bf16.mxu0 0
          %3349 = vmatpush1.bf16.msra.mxu0 0
          %3350 = vmatprep.subr.bf16.mxu0 0
          %3351 = vmatpush1.bf16.msra.mxu0 0
          %3352 = vmatprep.subr.bf16.mxu0 0
          %3353 = vmatpush1.bf16.msra.mxu0 0
          %3354 = vmatprep.subr.bf16.mxu0 0
          %3355 = vmatpush1.bf16.msra.mxu0 0
          %3356 = vmatprep.subr.bf16.mxu0 0
          %3357 = vmatpush1.bf16.msra.mxu0 0
          %3358 = vmatprep.subr.bf16.mxu0 0
          %3359 = vmatpush1.bf16.msra.mxu0 0
          %3360 = vmatprep.subr.bf16.mxu0 0
          %3361 = vmatpush1.bf16.msra.mxu0 0
          %3362 = vmatprep.subr.bf16.mxu0 0
          %3363 = vmatpush1.bf16.msra.mxu0 0
          %3364 = vmatprep.subr.bf16.mxu0 0
          %3365 = vmatpush1.bf16.msra.mxu0 0
          %3366 = vmatprep.subr.bf16.mxu0 0
          %3367 = vmatpush1.bf16.msra.mxu0 0
          %3368 = vmatprep.subr.bf16.mxu0 0
          %3369 = vmatpush1.bf16.msra.mxu0 0
          %3370 = vmatprep.mubr.bf16.mxu0 0
          %3371 = vmatmul.mubr.bf16.gmra.mrb[0].mxu0 %v3333
          %v3372 = vpop.f32.mrb[0].mxu0
          %v3373 = vadd.f32 0.0, %v3372
          %v3374 = vpop.f32.mrb[0].mxu0
          %v3375 = vadd.f32 0.0, %v3374
          %v3376 = vpop.f32.mrb[0].mxu0
          %v3377 = vadd.f32 0.0, %v3376
          %v3378 = vpop.f32.mrb[0].mxu0
          %v3379 = vadd.f32 0.0, %v3378
          %3380 = vmatprep.mubr.bf16.mxu0 0
          %3381 = vmatmul.mubr.bf16.gmra.mrb[0].mxu0 %v3336
          %v3382 = vpop.f32.mrb[0].mxu0
          %v3383 = vadd.f32 0.0, %v3382
          %v3384 = vpop.f32.mrb[0].mxu0
          %v3385 = vadd.f32 0.0, %v3384
          %v3386 = vpop.f32.mrb[0].mxu0
          %v3387 = vadd.f32 0.0, %v3386
          %v3388 = vpop.f32.mrb[0].mxu0
          %v3389 = vadd.f32 0.0, %v3388
          %3390 = vdwg.mxu0
          %3391 = vmatprep.subr.bf16.mxu0 0
          %3392 = vmatpush1.bf16.msra.mxu0 %v3322
          %3393 = vmatprep.subr.bf16.mxu0 0
          %3394 = vmatpush1.bf16.msra.mxu0 %v3325
          %3395 = vmatprep.subr.bf16.mxu0 0
          %3396 = vmatpush1.bf16.msra.mxu0 0
          %3397 = vmatprep.subr.bf16.mxu0 0
          %3398 = vmatpush1.bf16.msra.mxu0 0
          %3399 = vmatprep.subr.bf16.mxu0 0
          %3400 = vmatpush1.bf16.msra.mxu0 0
          %3401 = vmatprep.subr.bf16.mxu0 0
          %3402 = vmatpush1.bf16.msra.mxu0 0
          %3403 = vmatprep.subr.bf16.mxu0 0
          %3404 = vmatpush1.bf16.msra.mxu0 0
          %3405 = vmatprep.subr.bf16.mxu0 0
          %3406 = vmatpush1.bf16.msra.mxu0 0
          %3407 = vmatprep.subr.bf16.mxu0 0
          %3408 = vmatpush1.bf16.msra.mxu0 0
          %3409 = vmatprep.subr.bf16.mxu0 0
          %3410 = vmatpush1.bf16.msra.mxu0 0
          %3411 = vmatprep.subr.bf16.mxu0 0
          %3412 = vmatpush1.bf16.msra.mxu0 0
          %3413 = vmatprep.subr.bf16.mxu0 0
          %3414 = vmatpush1.bf16.msra.mxu0 0
          %3415 = vmatprep.subr.bf16.mxu0 0
          %3416 = vmatpush1.bf16.msra.mxu0 0
          %3417 = vmatprep.subr.bf16.mxu0 0
          %3418 = vmatpush1.bf16.msra.mxu0 0
          %3419 = vmatprep.subr.bf16.mxu0 0
          %3420 = vmatpush1.bf16.msra.mxu0 0
          %3421 = vmatprep.subr.bf16.mxu0 0
          %3422 = vmatpush1.bf16.msra.mxu0 0
          %3423 = vmatprep.mubr.bf16.mxu0 0
          %3424 = vmatmul.mubr.bf16.gmra.mrb[0].mxu0 %v3333
          %v3425 = vpop.f32.mrb[0].mxu0
          %v3426 = vadd.f32 0.0, %v3425
          %v3427 = vpop.f32.mrb[0].mxu0
          %v3428 = vpop.f32.mrb[0].mxu0
          %v3429 = vadd.f32 0.0, %v3428
          %v3430 = vpop.f32.mrb[0].mxu0
          %3431 = vmatprep.mubr.bf16.mxu0 0
          %3432 = vmatmul.mubr.bf16.gmra.mrb[0].mxu0 %v3336
          %v3433 = vpop.f32.mrb[0].mxu0
          %v3434 = vadd.f32 0.0, %v3433
          %v3435 = vpop.f32.mrb[0].mxu0
          %v3436 = vpop.f32.mrb[0].mxu0
          %v3437 = vadd.f32 0.0, %v3436
          %v3438 = vpop.f32.mrb[0].mxu0
          %3439 = vdwg.mxu0
          %3440 = vrot.lane.b32.xlu0 %v3274, 19
          %v3441 = vpop.permute.xlu0 %3440
          %3442 = vrot.lane.b32.xlu0 %v3275, 19
          %v3443 = vpop.permute.xlu0 %3442
          %3444 = vrot.lane.b32.xlu0 %v3276, 19
          %v3445 = vpop.permute.xlu0 %3444
          %3446 = vrot.lane.b32.xlu0 %v3277, 19
          %v3447 = vpop.permute.xlu0 %3446
          %3448 = vrot.lane.b32.xlu0 %v3278, 19
          %v3449 = vpop.permute.xlu0 %3448
          %3450 = vrot.lane.b32.xlu0 %v3279, 19
          %v3451 = vpop.permute.xlu0 %3450
          %3452 = vrot.lane.b32.xlu0 %v3280, 19
          %v3453 = vpop.permute.xlu0 %3452
          %3454 = vrot.lane.b32.xlu0 %v3281, 19
          %v3455 = vpop.permute.xlu0 %3454
          %v3456 = vsel %vm493, %v3441, %v3443
          %v3457 = vsel %vm493, %v3443, %v3445
          %v3458 = vsel %vm493, %v3445, %v3447
          %v3459 = vsel %vm493, %v3449, %v3451
          %v3460 = vsel %vm493, %v3451, %v3453
          %v3461 = vsel %vm493, %v3453, %v3455
          %v3469 = vsel %vm1911, %v3290, 0
          %v3472 = vsel %vm1911, %v3291, 0
          %3474 = vmatprep.subr.bf16.mxu0 %v3457
          %3475 = vmatpush1.bf16.msra.mxu0 %v3456
          %3476 = vmatprep.subr.bf16.mxu0 %v3460
          %3477 = vmatpush1.bf16.msra.mxu0 %v3459
          %3478 = vmatprep.subr.bf16.mxu0 0
          %3479 = vmatpush1.bf16.msra.mxu0 0
          %3480 = vmatprep.subr.bf16.mxu0 0
          %3481 = vmatpush1.bf16.msra.mxu0 0
          %3482 = vmatprep.subr.bf16.mxu0 0
          %3483 = vmatpush1.bf16.msra.mxu0 0
          %3484 = vmatprep.subr.bf16.mxu0 0
          %3485 = vmatpush1.bf16.msra.mxu0 0
          %3486 = vmatprep.subr.bf16.mxu0 0
          %3487 = vmatpush1.bf16.msra.mxu0 0
          %3488 = vmatprep.subr.bf16.mxu0 0
          %3489 = vmatpush1.bf16.msra.mxu0 0
          %3490 = vmatprep.subr.bf16.mxu0 0
          %3491 = vmatpush1.bf16.msra.mxu0 0
          %3492 = vmatprep.subr.bf16.mxu0 0
          %3493 = vmatpush1.bf16.msra.mxu0 0
          %3494 = vmatprep.subr.bf16.mxu0 0
          %3495 = vmatpush1.bf16.msra.mxu0 0
          %3496 = vmatprep.subr.bf16.mxu0 0
          %3497 = vmatpush1.bf16.msra.mxu0 0
          %3498 = vmatprep.subr.bf16.mxu0 0
          %3499 = vmatpush1.bf16.msra.mxu0 0
          %3500 = vmatprep.subr.bf16.mxu0 0
          %3501 = vmatpush1.bf16.msra.mxu0 0
          %3502 = vmatprep.subr.bf16.mxu0 0
          %3503 = vmatpush1.bf16.msra.mxu0 0
          %3504 = vmatprep.subr.bf16.mxu0 0
          %3505 = vmatpush1.bf16.msra.mxu0 0
          %3506 = vmatprep.mubr.bf16.mxu0 0
          %3507 = vmatmul.mubr.bf16.gmra.mrb[0].mxu0 %v3469
          %v3508 = vpop.f32.mrb[0].mxu0
          %v3509 = vadd.f32 %v3373, %v3508
          %v3510 = vpop.f32.mrb[0].mxu0
          %v3511 = vadd.f32 %v3375, %v3510
          %v3512 = vpop.f32.mrb[0].mxu0
          %v3513 = vadd.f32 %v3377, %v3512
          %v3514 = vpop.f32.mrb[0].mxu0
          %v3515 = vadd.f32 %v3379, %v3514
          %3516 = vmatprep.mubr.bf16.mxu0 0
          %3517 = vmatmul.mubr.bf16.gmra.mrb[0].mxu0 %v3472
          %v3518 = vpop.f32.mrb[0].mxu0
          %v3519 = vadd.f32 %v3383, %v3518
          %v3520 = vpop.f32.mrb[0].mxu0
          %v3521 = vadd.f32 %v3385, %v3520
          %v3522 = vpop.f32.mrb[0].mxu0
          %v3523 = vadd.f32 %v3387, %v3522
          %v3524 = vpop.f32.mrb[0].mxu0
          %v3525 = vadd.f32 %v3389, %v3524
          %3526 = vdwg.mxu0
          %3527 = vmatprep.subr.bf16.mxu0 0
          %3528 = vmatpush1.bf16.msra.mxu0 %v3458
          %3529 = vmatprep.subr.bf16.mxu0 0
          %3530 = vmatpush1.bf16.msra.mxu0 %v3461
          %3531 = vmatprep.subr.bf16.mxu0 0
          %3532 = vmatpush1.bf16.msra.mxu0 0
          %3533 = vmatprep.subr.bf16.mxu0 0
          %3534 = vmatpush1.bf16.msra.mxu0 0
          %3535 = vmatprep.subr.bf16.mxu0 0
          %3536 = vmatpush1.bf16.msra.mxu0 0
          %3537 = vmatprep.subr.bf16.mxu0 0
          %3538 = vmatpush1.bf16.msra.mxu0 0
          %3539 = vmatprep.subr.bf16.mxu0 0
          %3540 = vmatpush1.bf16.msra.mxu0 0
          %3541 = vmatprep.subr.bf16.mxu0 0
          %3542 = vmatpush1.bf16.msra.mxu0 0
          %3543 = vmatprep.subr.bf16.mxu0 0
          %3544 = vmatpush1.bf16.msra.mxu0 0
          %3545 = vmatprep.subr.bf16.mxu0 0
          %3546 = vmatpush1.bf16.msra.mxu0 0
          %3547 = vmatprep.subr.bf16.mxu0 0
          %3548 = vmatpush1.bf16.msra.mxu0 0
          %3549 = vmatprep.subr.bf16.mxu0 0
          %3550 = vmatpush1.bf16.msra.mxu0 0
          %3551 = vmatprep.subr.bf16.mxu0 0
          %3552 = vmatpush1.bf16.msra.mxu0 0
          %3553 = vmatprep.subr.bf16.mxu0 0
          %3554 = vmatpush1.bf16.msra.mxu0 0
          %3555 = vmatprep.subr.bf16.mxu0 0
          %3556 = vmatpush1.bf16.msra.mxu0 0
          %3557 = vmatprep.subr.bf16.mxu0 0
          %3558 = vmatpush1.bf16.msra.mxu0 0
          %3559 = vmatprep.mubr.bf16.mxu0 0
          %3560 = vmatmul.mubr.bf16.gmra.mrb[0].mxu0 %v3469
          %v3561 = vpop.f32.mrb[0].mxu0
          %v3562 = vadd.f32 %v3426, %v3561
          %v3563 = vpop.f32.mrb[0].mxu0
          %v3564 = vpop.f32.mrb[0].mxu0
          %v3565 = vadd.f32 %v3429, %v3564
          %v3566 = vpop.f32.mrb[0].mxu0
          %3567 = vmatprep.mubr.bf16.mxu0 0
          %3568 = vmatmul.mubr.bf16.gmra.mrb[0].mxu0 %v3472
          %v3569 = vpop.f32.mrb[0].mxu0
          %v3570 = vadd.f32 %v3434, %v3569
          %v3571 = vpop.f32.mrb[0].mxu0
          %v3572 = vpop.f32.mrb[0].mxu0
          %v3573 = vadd.f32 %v3437, %v3572
          %v3574 = vpop.f32.mrb[0].mxu0
          %3575 = vdwg.mxu0
          %3576 = vrot.lane.b32.xlu0 %v3290, 64
          %v3577 = vpop.permute.xlu0 %3576
          %3578 = vrot.lane.b32.xlu0 %v3291, 64
          %v3579 = vpop.permute.xlu0 %3578
          %3580 = vrot.lane.b32.xlu0 %v3274, 17
          %v3581 = vpop.permute.xlu0 %3580
          %3582 = vrot.lane.b32.xlu0 %v3275, 17
          %v3583 = vpop.permute.xlu0 %3582
          %3584 = vrot.lane.b32.xlu0 %v3276, 17
          %v3585 = vpop.permute.xlu0 %3584
          %3586 = vrot.lane.b32.xlu0 %v3277, 17
          %v3587 = vpop.permute.xlu0 %3586
          %3588 = vrot.lane.b32.xlu0 %v3278, 17
          %v3589 = vpop.permute.xlu0 %3588
          %3590 = vrot.lane.b32.xlu0 %v3279, 17
          %v3591 = vpop.permute.xlu0 %3590
          %3592 = vrot.lane.b32.xlu0 %v3280, 17
          %v3593 = vpop.permute.xlu0 %3592
          %3594 = vrot.lane.b32.xlu0 %v3281, 17
          %v3595 = vpop.permute.xlu0 %3594
          %v3596 = vsel %vm645, %v3581, %v3583
          %v3597 = vsel %vm645, %v3583, %v3585
          %v3598 = vsel %vm645, %v3585, %v3587
          %v3599 = vsel %vm645, %v3589, %v3591
          %v3600 = vsel %vm645, %v3591, %v3593
          %v3601 = vsel %vm645, %v3593, %v3595
          %v3609 = vsel %vm1911, %v3577, 0
          %v3612 = vsel %vm1911, %v3579, 0
          %3614 = vmatprep.subr.bf16.mxu0 %v3597
          %3615 = vmatpush1.bf16.msra.mxu0 %v3596
          %3616 = vmatprep.subr.bf16.mxu0 %v3600
          %3617 = vmatpush1.bf16.msra.mxu0 %v3599
          %3618 = vmatprep.subr.bf16.mxu0 0
          %3619 = vmatpush1.bf16.msra.mxu0 0
          %3620 = vmatprep.subr.bf16.mxu0 0
          %3621 = vmatpush1.bf16.msra.mxu0 0
          %3622 = vmatprep.subr.bf16.mxu0 0
          %3623 = vmatpush1.bf16.msra.mxu0 0
          %3624 = vmatprep.subr.bf16.mxu0 0
          %3625 = vmatpush1.bf16.msra.mxu0 0
          %3626 = vmatprep.subr.bf16.mxu0 0
          %3627 = vmatpush1.bf16.msra.mxu0 0
          %3628 = vmatprep.subr.bf16.mxu0 0
          %3629 = vmatpush1.bf16.msra.mxu0 0
          %3630 = vmatprep.subr.bf16.mxu0 0
          %3631 = vmatpush1.bf16.msra.mxu0 0
          %3632 = vmatprep.subr.bf16.mxu0 0
          %3633 = vmatpush1.bf16.msra.mxu0 0
          %3634 = vmatprep.subr.bf16.mxu0 0
          %3635 = vmatpush1.bf16.msra.mxu0 0
          %3636 = vmatprep.subr.bf16.mxu0 0
          %3637 = vmatpush1.bf16.msra.mxu0 0
          %3638 = vmatprep.subr.bf16.mxu0 0
          %3639 = vmatpush1.bf16.msra.mxu0 0
          %3640 = vmatprep.subr.bf16.mxu0 0
          %3641 = vmatpush1.bf16.msra.mxu0 0
          %3642 = vmatprep.subr.bf16.mxu0 0
          %3643 = vmatpush1.bf16.msra.mxu0 0
          %3644 = vmatprep.subr.bf16.mxu0 0
          %3645 = vmatpush1.bf16.msra.mxu0 0
          %3646 = vmatprep.mubr.bf16.mxu0 0
          %3647 = vmatmul.mubr.bf16.gmra.mrb[0].mxu0 %v3609
          %v3648 = vpop.f32.mrb[0].mxu0
          %v3649 = vadd.f32 0.0, %v3648
          %v3650 = vpop.f32.mrb[0].mxu0
          %v3651 = vadd.f32 0.0, %v3650
          %v3652 = vpop.f32.mrb[0].mxu0
          %v3653 = vadd.f32 0.0, %v3652
          %v3654 = vpop.f32.mrb[0].mxu0
          %v3655 = vadd.f32 0.0, %v3654
          %3656 = vmatprep.mubr.bf16.mxu0 0
          %3657 = vmatmul.mubr.bf16.gmra.mrb[0].mxu0 %v3612
          %v3658 = vpop.f32.mrb[0].mxu0
          %v3659 = vadd.f32 0.0, %v3658
          %v3660 = vpop.f32.mrb[0].mxu0
          %v3661 = vadd.f32 0.0, %v3660
          %v3662 = vpop.f32.mrb[0].mxu0
          %v3663 = vadd.f32 0.0, %v3662
          %v3664 = vpop.f32.mrb[0].mxu0
          %v3665 = vadd.f32 0.0, %v3664
          %3666 = vdwg.mxu0
          %3667 = vmatprep.subr.bf16.mxu0 0
          %3668 = vmatpush1.bf16.msra.mxu0 %v3598
          %3669 = vmatprep.subr.bf16.mxu0 0
          %3670 = vmatpush1.bf16.msra.mxu0 %v3601
          %3671 = vmatprep.subr.bf16.mxu0 0
          %3672 = vmatpush1.bf16.msra.mxu0 0
          %3673 = vmatprep.subr.bf16.mxu0 0
          %3674 = vmatpush1.bf16.msra.mxu0 0
          %3675 = vmatprep.subr.bf16.mxu0 0
          %3676 = vmatpush1.bf16.msra.mxu0 0
          %3677 = vmatprep.subr.bf16.mxu0 0
          %3678 = vmatpush1.bf16.msra.mxu0 0
          %3679 = vmatprep.subr.bf16.mxu0 0
          %3680 = vmatpush1.bf16.msra.mxu0 0
          %3681 = vmatprep.subr.bf16.mxu0 0
          %3682 = vmatpush1.bf16.msra.mxu0 0
          %3683 = vmatprep.subr.bf16.mxu0 0
          %3684 = vmatpush1.bf16.msra.mxu0 0
          %3685 = vmatprep.subr.bf16.mxu0 0
          %3686 = vmatpush1.bf16.msra.mxu0 0
          %3687 = vmatprep.subr.bf16.mxu0 0
          %3688 = vmatpush1.bf16.msra.mxu0 0
          %3689 = vmatprep.subr.bf16.mxu0 0
          %3690 = vmatpush1.bf16.msra.mxu0 0
          %3691 = vmatprep.subr.bf16.mxu0 0
          %3692 = vmatpush1.bf16.msra.mxu0 0
          %3693 = vmatprep.subr.bf16.mxu0 0
          %3694 = vmatpush1.bf16.msra.mxu0 0
          %3695 = vmatprep.subr.bf16.mxu0 0
          %3696 = vmatpush1.bf16.msra.mxu0 0
          %3697 = vmatprep.subr.bf16.mxu0 0
          %3698 = vmatpush1.bf16.msra.mxu0 0
          %3699 = vmatprep.mubr.bf16.mxu0 0
          %3700 = vmatmul.mubr.bf16.gmra.mrb[0].mxu0 %v3609
          %v3701 = vpop.f32.mrb[0].mxu0
          %v3702 = vadd.f32 0.0, %v3701
          %v3703 = vpop.f32.mrb[0].mxu0
          %v3704 = vpop.f32.mrb[0].mxu0
          %v3705 = vadd.f32 0.0, %v3704
          %v3706 = vpop.f32.mrb[0].mxu0
          %3707 = vmatprep.mubr.bf16.mxu0 0
          %3708 = vmatmul.mubr.bf16.gmra.mrb[0].mxu0 %v3612
          %v3709 = vpop.f32.mrb[0].mxu0
          %v3710 = vadd.f32 0.0, %v3709
          %v3711 = vpop.f32.mrb[0].mxu0
          %v3712 = vpop.f32.mrb[0].mxu0
          %v3713 = vadd.f32 0.0, %v3712
          %v3714 = vpop.f32.mrb[0].mxu0
          %3715 = vdwg.mxu0
          %v3716 = vadd.f32 %v3509, %v3649
          %v3717 = vadd.f32 %v3511, %v3651
          %v3718 = vadd.f32 %v3562, %v3702
          %v3719 = vadd.f32 %v3513, %v3653
          %v3720 = vadd.f32 %v3515, %v3655
          %v3721 = vadd.f32 %v3565, %v3705
          %v3722 = vadd.f32 %v3519, %v3659
          %v3723 = vadd.f32 %v3521, %v3661
          %v3724 = vadd.f32 %v3570, %v3710
          %v3725 = vadd.f32 %v3523, %v3663
          %v3726 = vadd.f32 %v3525, %v3665
          %v3727 = vadd.f32 %v3573, %v3713
          %3728 = vrot.lane.b32.xlu0 %v3290, 32
          %v3729 = vpop.permute.xlu0 %3728
          %3730 = vrot.lane.b32.xlu0 %v3291, 32
          %v3731 = vpop.permute.xlu0 %3730
          %3732 = vrot.lane.b32.xlu0 %v3274, 1
          %v3733 = vpop.permute.xlu0 %3732
          %3734 = vrot.lane.b32.xlu0 %v3275, 1
          %v3735 = vpop.permute.xlu0 %3734
          %3736 = vrot.lane.b32.xlu0 %v3276, 1
          %v3737 = vpop.permute.xlu0 %3736
          %3738 = vrot.lane.b32.xlu0 %v3277, 1
          %v3739 = vpop.permute.xlu0 %3738
          %3740 = vrot.lane.b32.xlu0 %v3278, 1
          %v3741 = vpop.permute.xlu0 %3740
          %3742 = vrot.lane.b32.xlu0 %v3279, 1
          %v3743 = vpop.permute.xlu0 %3742
          %3744 = vrot.lane.b32.xlu0 %v3280, 1
          %v3745 = vpop.permute.xlu0 %3744
          %3746 = vrot.lane.b32.xlu0 %v3281, 1
          %v3747 = vpop.permute.xlu0 %3746
          %v3748 = vsel %vm809, %v3733, %v3735
          %v3749 = vsel %vm809, %v3735, %v3737
          %v3750 = vsel %vm809, %v3737, %v3739
          %v3751 = vsel %vm809, %v3741, %v3743
          %v3752 = vsel %vm809, %v3743, %v3745
          %v3753 = vsel %vm809, %v3745, %v3747
          %v3761 = vsel %vm1911, %v3729, 0
          %v3764 = vsel %vm1911, %v3731, 0
          %3766 = vmatprep.subr.bf16.mxu0 %v3749
          %3767 = vmatpush1.bf16.msra.mxu0 %v3748
          %3768 = vmatprep.subr.bf16.mxu0 %v3752
          %3769 = vmatpush1.bf16.msra.mxu0 %v3751
          %3770 = vmatprep.subr.bf16.mxu0 0
          %3771 = vmatpush1.bf16.msra.mxu0 0
          %3772 = vmatprep.subr.bf16.mxu0 0
          %3773 = vmatpush1.bf16.msra.mxu0 0
          %3774 = vmatprep.subr.bf16.mxu0 0
          %3775 = vmatpush1.bf16.msra.mxu0 0
          %3776 = vmatprep.subr.bf16.mxu0 0
          %3777 = vmatpush1.bf16.msra.mxu0 0
          %3778 = vmatprep.subr.bf16.mxu0 0
          %3779 = vmatpush1.bf16.msra.mxu0 0
          %3780 = vmatprep.subr.bf16.mxu0 0
          %3781 = vmatpush1.bf16.msra.mxu0 0
          %3782 = vmatprep.subr.bf16.mxu0 0
          %3783 = vmatpush1.bf16.msra.mxu0 0
          %3784 = vmatprep.subr.bf16.mxu0 0
          %3785 = vmatpush1.bf16.msra.mxu0 0
          %3786 = vmatprep.subr.bf16.mxu0 0
          %3787 = vmatpush1.bf16.msra.mxu0 0
          %3788 = vmatprep.subr.bf16.mxu0 0
          %3789 = vmatpush1.bf16.msra.mxu0 0
          %3790 = vmatprep.subr.bf16.mxu0 0
          %3791 = vmatpush1.bf16.msra.mxu0 0
          %3792 = vmatprep.subr.bf16.mxu0 0
          %3793 = vmatpush1.bf16.msra.mxu0 0
          %3794 = vmatprep.subr.bf16.mxu0 0
          %3795 = vmatpush1.bf16.msra.mxu0 0
          %3796 = vmatprep.subr.bf16.mxu0 0
          %3797 = vmatpush1.bf16.msra.mxu0 0
          %3798 = vmatprep.mubr.bf16.mxu0 0
          %3799 = vmatmul.mubr.bf16.gmra.mrb[0].mxu0 %v3761
          %v3800 = vpop.f32.mrb[0].mxu0
          %v3801 = vadd.f32 0.0, %v3800
          %v3802 = vpop.f32.mrb[0].mxu0
          %v3803 = vadd.f32 0.0, %v3802
          %v3804 = vpop.f32.mrb[0].mxu0
          %v3805 = vadd.f32 0.0, %v3804
          %v3806 = vpop.f32.mrb[0].mxu0
          %v3807 = vadd.f32 0.0, %v3806
          %3808 = vmatprep.mubr.bf16.mxu0 0
          %3809 = vmatmul.mubr.bf16.gmra.mrb[0].mxu0 %v3764
          %v3810 = vpop.f32.mrb[0].mxu0
          %v3811 = vadd.f32 0.0, %v3810
          %v3812 = vpop.f32.mrb[0].mxu0
          %v3813 = vadd.f32 0.0, %v3812
          %v3814 = vpop.f32.mrb[0].mxu0
          %v3815 = vadd.f32 0.0, %v3814
          %v3816 = vpop.f32.mrb[0].mxu0
          %v3817 = vadd.f32 0.0, %v3816
          %3818 = vdwg.mxu0
          %3819 = vmatprep.subr.bf16.mxu0 0
          %3820 = vmatpush1.bf16.msra.mxu0 %v3750
          %3821 = vmatprep.subr.bf16.mxu0 0
          %3822 = vmatpush1.bf16.msra.mxu0 %v3753
          %3823 = vmatprep.subr.bf16.mxu0 0
          %3824 = vmatpush1.bf16.msra.mxu0 0
          %3825 = vmatprep.subr.bf16.mxu0 0
          %3826 = vmatpush1.bf16.msra.mxu0 0
          %3827 = vmatprep.subr.bf16.mxu0 0
          %3828 = vmatpush1.bf16.msra.mxu0 0
          %3829 = vmatprep.subr.bf16.mxu0 0
          %3830 = vmatpush1.bf16.msra.mxu0 0
          %3831 = vmatprep.subr.bf16.mxu0 0
          %3832 = vmatpush1.bf16.msra.mxu0 0
          %3833 = vmatprep.subr.bf16.mxu0 0
          %3834 = vmatpush1.bf16.msra.mxu0 0
          %3835 = vmatprep.subr.bf16.mxu0 0
          %3836 = vmatpush1.bf16.msra.mxu0 0
          %3837 = vmatprep.subr.bf16.mxu0 0
          %3838 = vmatpush1.bf16.msra.mxu0 0
          %3839 = vmatprep.subr.bf16.mxu0 0
          %3840 = vmatpush1.bf16.msra.mxu0 0
          %3841 = vmatprep.subr.bf16.mxu0 0
          %3842 = vmatpush1.bf16.msra.mxu0 0
          %3843 = vmatprep.subr.bf16.mxu0 0
          %3844 = vmatpush1.bf16.msra.mxu0 0
          %3845 = vmatprep.subr.bf16.mxu0 0
          %3846 = vmatpush1.bf16.msra.mxu0 0
          %3847 = vmatprep.subr.bf16.mxu0 0
          %3848 = vmatpush1.bf16.msra.mxu0 0
          %3849 = vmatprep.subr.bf16.mxu0 0
          %3850 = vmatpush1.bf16.msra.mxu0 0
          %3851 = vmatprep.mubr.bf16.mxu0 0
          %3852 = vmatmul.mubr.bf16.gmra.mrb[0].mxu0 %v3761
          %v3853 = vpop.f32.mrb[0].mxu0
          %v3854 = vadd.f32 0.0, %v3853
          %v3855 = vpop.f32.mrb[0].mxu0
          %v3856 = vpop.f32.mrb[0].mxu0
          %v3857 = vadd.f32 0.0, %v3856
          %v3858 = vpop.f32.mrb[0].mxu0
          %3859 = vmatprep.mubr.bf16.mxu0 0
          %3860 = vmatmul.mubr.bf16.gmra.mrb[0].mxu0 %v3764
          %v3861 = vpop.f32.mrb[0].mxu0
          %v3862 = vadd.f32 0.0, %v3861
          %v3863 = vpop.f32.mrb[0].mxu0
          %v3864 = vpop.f32.mrb[0].mxu0
          %v3865 = vadd.f32 0.0, %v3864
          %v3866 = vpop.f32.mrb[0].mxu0
          %3867 = vdwg.mxu0
          %v3868 = vadd.f32 %v3716, %v3801
          %v3869 = vadd.f32 %v3717, %v3803
          %v3870 = vadd.f32 %v3718, %v3854
          %v3871 = vadd.f32 %v3719, %v3805
          %v3872 = vadd.f32 %v3720, %v3807
          %v3873 = vadd.f32 %v3721, %v3857
          %v3874 = vadd.f32 %v3722, %v3811
          %v3875 = vadd.f32 %v3723, %v3813
          %v3876 = vadd.f32 %v3724, %v3862
          %v3877 = vadd.f32 %v3725, %v3815
          %v3878 = vadd.f32 %v3726, %v3817
          %v3879 = vadd.f32 %v3727, %v3865
          %v3880 = vunpack.c.h.b16 %v3260
          %v3881 = vunpack.c.h.b16 %v3262
          %v3882 = vunpack.c.h.b16 %v3264
          %v3883 = vunpack.c.h.b16 %v3266
          %v3884 = vpack.c.b16 %v3881, %v3880
          %v3885 = vpack.c.b16 %v3883, %v3882
          %v3887 = vsel %vm1911, %v3884, 0
          %v3890 = vsel %vm1911, %v3885, 0
          %3892 = vmatprep.subr.bf16.mxu0 %v3276
          %3893 = vmatpush1.bf16.msra.mxu0 %v3275
          %3894 = vmatprep.subr.bf16.mxu0 %v3280
          %3895 = vmatpush1.bf16.msra.mxu0 %v3279
          %3896 = vmatprep.subr.bf16.mxu0 0
          %3897 = vmatpush1.bf16.msra.mxu0 0
          %3898 = vmatprep.subr.bf16.mxu0 0
          %3899 = vmatpush1.bf16.msra.mxu0 0
          %3900 = vmatprep.subr.bf16.mxu0 0
          %3901 = vmatpush1.bf16.msra.mxu0 0
          %3902 = vmatprep.subr.bf16.mxu0 0
          %3903 = vmatpush1.bf16.msra.mxu0 0
          %3904 = vmatprep.subr.bf16.mxu0 0
          %3905 = vmatpush1.bf16.msra.mxu0 0
          %3906 = vmatprep.subr.bf16.mxu0 0
          %3907 = vmatpush1.bf16.msra.mxu0 0
          %3908 = vmatprep.subr.bf16.mxu0 0
          %3909 = vmatpush1.bf16.msra.mxu0 0
          %3910 = vmatprep.subr.bf16.mxu0 0
          %3911 = vmatpush1.bf16.msra.mxu0 0
          %3912 = vmatprep.subr.bf16.mxu0 0
          %3913 = vmatpush1.bf16.msra.mxu0 0
          %3914 = vmatprep.subr.bf16.mxu0 0
          %3915 = vmatpush1.bf16.msra.mxu0 0
          %3916 = vmatprep.subr.bf16.mxu0 0
          %3917 = vmatpush1.bf16.msra.mxu0 0
          %3918 = vmatprep.subr.bf16.mxu0 0
          %3919 = vmatpush1.bf16.msra.mxu0 0
          %3920 = vmatprep.subr.bf16.mxu0 0
          %3921 = vmatpush1.bf16.msra.mxu0 0
          %3922 = vmatprep.subr.bf16.mxu0 0
          %3923 = vmatpush1.bf16.msra.mxu0 0
          %3924 = vmatprep.mubr.bf16.mxu0 0
          %3925 = vmatmul.mubr.bf16.gmra.mrb[0].mxu0 %v3887
          %v3926 = vpop.f32.mrb[0].mxu0
          %v3927 = vadd.f32 0.0, %v3926
          %v3928 = vpop.f32.mrb[0].mxu0
          %v3929 = vadd.f32 0.0, %v3928
          %v3930 = vpop.f32.mrb[0].mxu0
          %v3931 = vadd.f32 0.0, %v3930
          %v3932 = vpop.f32.mrb[0].mxu0
          %v3933 = vadd.f32 0.0, %v3932
          %3934 = vmatprep.mubr.bf16.mxu0 0
          %3935 = vmatmul.mubr.bf16.gmra.mrb[0].mxu0 %v3890
          %v3936 = vpop.f32.mrb[0].mxu0
          %v3937 = vadd.f32 0.0, %v3936
          %v3938 = vpop.f32.mrb[0].mxu0
          %v3939 = vadd.f32 0.0, %v3938
          %v3940 = vpop.f32.mrb[0].mxu0
          %v3941 = vadd.f32 0.0, %v3940
          %v3942 = vpop.f32.mrb[0].mxu0
          %v3943 = vadd.f32 0.0, %v3942
          %3944 = vdwg.mxu0
          %3945 = vmatprep.subr.bf16.mxu0 0
          %3946 = vmatpush1.bf16.msra.mxu0 %v3277
          %3947 = vmatprep.subr.bf16.mxu0 0
          %3948 = vmatpush1.bf16.msra.mxu0 %v3281
          %3949 = vmatprep.subr.bf16.mxu0 0
          %3950 = vmatpush1.bf16.msra.mxu0 0
          %3951 = vmatprep.subr.bf16.mxu0 0
          %3952 = vmatpush1.bf16.msra.mxu0 0
          %3953 = vmatprep.subr.bf16.mxu0 0
          %3954 = vmatpush1.bf16.msra.mxu0 0
          %3955 = vmatprep.subr.bf16.mxu0 0
          %3956 = vmatpush1.bf16.msra.mxu0 0
          %3957 = vmatprep.subr.bf16.mxu0 0
          %3958 = vmatpush1.bf16.msra.mxu0 0
          %3959 = vmatprep.subr.bf16.mxu0 0
          %3960 = vmatpush1.bf16.msra.mxu0 0
          %3961 = vmatprep.subr.bf16.mxu0 0
          %3962 = vmatpush1.bf16.msra.mxu0 0
          %3963 = vmatprep.subr.bf16.mxu0 0
          %3964 = vmatpush1.bf16.msra.mxu0 0
          %3965 = vmatprep.subr.bf16.mxu0 0
          %3966 = vmatpush1.bf16.msra.mxu0 0
          %3967 = vmatprep.subr.bf16.mxu0 0
          %3968 = vmatpush1.bf16.msra.mxu0 0
          %3969 = vmatprep.subr.bf16.mxu0 0
          %3970 = vmatpush1.bf16.msra.mxu0 0
          %3971 = vmatprep.subr.bf16.mxu0 0
          %3972 = vmatpush1.bf16.msra.mxu0 0
          %3973 = vmatprep.subr.bf16.mxu0 0
          %3974 = vmatpush1.bf16.msra.mxu0 0
          %3975 = vmatprep.subr.bf16.mxu0 0
          %3976 = vmatpush1.bf16.msra.mxu0 0
          %3977 = vmatprep.mubr.bf16.mxu0 0
          %3978 = vmatmul.mubr.bf16.gmra.mrb[0].mxu0 %v3887
          %v3979 = vpop.f32.mrb[0].mxu0
          %v3980 = vadd.f32 0.0, %v3979
          %v3981 = vpop.f32.mrb[0].mxu0
          %v3982 = vpop.f32.mrb[0].mxu0
          %v3983 = vadd.f32 0.0, %v3982
          %v3984 = vpop.f32.mrb[0].mxu0
          %3985 = vmatprep.mubr.bf16.mxu0 0
          %3986 = vmatmul.mubr.bf16.gmra.mrb[0].mxu0 %v3890
          %v3987 = vpop.f32.mrb[0].mxu0
          %v3988 = vadd.f32 0.0, %v3987
          %v3989 = vpop.f32.mrb[0].mxu0
          %v3990 = vpop.f32.mrb[0].mxu0
          %v3991 = vadd.f32 0.0, %v3990
          %v3992 = vpop.f32.mrb[0].mxu0
          %3993 = vdwg.mxu0
          %v3994 = vadd.f32 %v3868, %v3927
          %v3995 = vadd.f32 %v3869, %v3929
          %v3996 = vadd.f32 %v3870, %v3980
          %v3997 = vadd.f32 %v3871, %v3931
          %v3998 = vadd.f32 %v3872, %v3933
          %v3999 = vadd.f32 %v3873, %v3983
          %v4000 = vadd.f32 %v3874, %v3937
          %v4001 = vadd.f32 %v3875, %v3939
          %v4002 = vadd.f32 %v3876, %v3988
          %v4003 = vadd.f32 %v3877, %v3941
          %v4004 = vadd.f32 %v3878, %v3943
          %v4005 = vadd.f32 %v3879, %v3991
          %4006 = vrot.lane.b32.xlu0 %v3884, 96
          %v4007 = vpop.permute.xlu0 %4006
          %4008 = vrot.lane.b32.xlu0 %v3885, 96
          %v4009 = vpop.permute.xlu0 %4008
          %4010 = vrot.lane.b32.xlu0 %v3275, 127
          %v4011 = vpop.permute.xlu0 %4010
          %4012 = vrot.lane.b32.xlu0 %v3276, 127
          %v4013 = vpop.permute.xlu0 %4012
          %4014 = vrot.lane.b32.xlu0 %v3277, 127
          %v4015 = vpop.permute.xlu0 %4014
          %4016 = vrot.lane.b32.xlu0 %v3279, 127
          %v4017 = vpop.permute.xlu0 %4016
          %4018 = vrot.lane.b32.xlu0 %v3280, 127
          %v4019 = vpop.permute.xlu0 %4018
          %4020 = vrot.lane.b32.xlu0 %v3281, 127
          %v4021 = vpop.permute.xlu0 %4020
          %v4022 = vsel %vm1121, %v4011, %v4013
          %v4023 = vsel %vm1121, %v4013, %v4015
          %v4024 = vsel %vm1121, %v4017, %v4019
          %v4025 = vsel %vm1121, %v4019, %v4021
          %v4033 = vsel %vm1911, %v4007, 0
          %v4036 = vsel %vm1911, %v4009, 0
          %4038 = vmatprep.subr.bf16.mxu0 %v4023
          %4039 = vmatpush1.bf16.msra.mxu0 %v4022
          %4040 = vmatprep.subr.bf16.mxu0 %v4025
          %4041 = vmatpush1.bf16.msra.mxu0 %v4024
          %4042 = vmatprep.subr.bf16.mxu0 0
          %4043 = vmatpush1.bf16.msra.mxu0 0
          %4044 = vmatprep.subr.bf16.mxu0 0
          %4045 = vmatpush1.bf16.msra.mxu0 0
          %4046 = vmatprep.subr.bf16.mxu0 0
          %4047 = vmatpush1.bf16.msra.mxu0 0
          %4048 = vmatprep.subr.bf16.mxu0 0
          %4049 = vmatpush1.bf16.msra.mxu0 0
          %4050 = vmatprep.subr.bf16.mxu0 0
          %4051 = vmatpush1.bf16.msra.mxu0 0
          %4052 = vmatprep.subr.bf16.mxu0 0
          %4053 = vmatpush1.bf16.msra.mxu0 0
          %4054 = vmatprep.subr.bf16.mxu0 0
          %4055 = vmatpush1.bf16.msra.mxu0 0
          %4056 = vmatprep.subr.bf16.mxu0 0
          %4057 = vmatpush1.bf16.msra.mxu0 0
          %4058 = vmatprep.subr.bf16.mxu0 0
          %4059 = vmatpush1.bf16.msra.mxu0 0
          %4060 = vmatprep.subr.bf16.mxu0 0
          %4061 = vmatpush1.bf16.msra.mxu0 0
          %4062 = vmatprep.subr.bf16.mxu0 0
          %4063 = vmatpush1.bf16.msra.mxu0 0
          %4064 = vmatprep.subr.bf16.mxu0 0
          %4065 = vmatpush1.bf16.msra.mxu0 0
          %4066 = vmatprep.subr.bf16.mxu0 0
          %4067 = vmatpush1.bf16.msra.mxu0 0
          %4068 = vmatprep.subr.bf16.mxu0 0
          %4069 = vmatpush1.bf16.msra.mxu0 0
          %4070 = vmatprep.mubr.bf16.mxu0 0
          %4071 = vmatmul.mubr.bf16.gmra.mrb[0].mxu0 %v4033
          %v4072 = vpop.f32.mrb[0].mxu0
          %v4073 = vadd.f32 0.0, %v4072
          %v4074 = vpop.f32.mrb[0].mxu0
          %v4075 = vadd.f32 0.0, %v4074
          %v4076 = vpop.f32.mrb[0].mxu0
          %v4077 = vadd.f32 0.0, %v4076
          %v4078 = vpop.f32.mrb[0].mxu0
          %v4079 = vadd.f32 0.0, %v4078
          %4080 = vmatprep.mubr.bf16.mxu0 0
          %4081 = vmatmul.mubr.bf16.gmra.mrb[0].mxu0 %v4036
          %v4082 = vpop.f32.mrb[0].mxu0
          %v4083 = vadd.f32 0.0, %v4082
          %v4084 = vpop.f32.mrb[0].mxu0
          %v4085 = vadd.f32 0.0, %v4084
          %v4086 = vpop.f32.mrb[0].mxu0
          %v4087 = vadd.f32 0.0, %v4086
          %v4088 = vpop.f32.mrb[0].mxu0
          %v4089 = vadd.f32 0.0, %v4088
          %4090 = vdwg.mxu0
          %4091 = vmatprep.subr.bf16.mxu0 0
          %4092 = vmatpush1.bf16.msra.mxu0 %v4015
          %4093 = vmatprep.subr.bf16.mxu0 0
          %4094 = vmatpush1.bf16.msra.mxu0 %v4021
          %4095 = vmatprep.subr.bf16.mxu0 0
          %4096 = vmatpush1.bf16.msra.mxu0 0
          %4097 = vmatprep.subr.bf16.mxu0 0
          %4098 = vmatpush1.bf16.msra.mxu0 0
          %4099 = vmatprep.subr.bf16.mxu0 0
          %4100 = vmatpush1.bf16.msra.mxu0 0
          %4101 = vmatprep.subr.bf16.mxu0 0
          %4102 = vmatpush1.bf16.msra.mxu0 0
          %4103 = vmatprep.subr.bf16.mxu0 0
          %4104 = vmatpush1.bf16.msra.mxu0 0
          %4105 = vmatprep.subr.bf16.mxu0 0
          %4106 = vmatpush1.bf16.msra.mxu0 0
          %4107 = vmatprep.subr.bf16.mxu0 0
          %4108 = vmatpush1.bf16.msra.mxu0 0
          %4109 = vmatprep.subr.bf16.mxu0 0
          %4110 = vmatpush1.bf16.msra.mxu0 0
          %4111 = vmatprep.subr.bf16.mxu0 0
          %4112 = vmatpush1.bf16.msra.mxu0 0
          %4113 = vmatprep.subr.bf16.mxu0 0
          %4114 = vmatpush1.bf16.msra.mxu0 0
          %4115 = vmatprep.subr.bf16.mxu0 0
          %4116 = vmatpush1.bf16.msra.mxu0 0
          %4117 = vmatprep.subr.bf16.mxu0 0
          %4118 = vmatpush1.bf16.msra.mxu0 0
          %4119 = vmatprep.subr.bf16.mxu0 0
          %4120 = vmatpush1.bf16.msra.mxu0 0
          %4121 = vmatprep.subr.bf16.mxu0 0
          %4122 = vmatpush1.bf16.msra.mxu0 0
          %4123 = vmatprep.mubr.bf16.mxu0 0
          %4124 = vmatmul.mubr.bf16.gmra.mrb[0].mxu0 %v4033
          %v4125 = vpop.f32.mrb[0].mxu0
          %v4126 = vadd.f32 0.0, %v4125
          %v4127 = vpop.f32.mrb[0].mxu0
          %v4128 = vpop.f32.mrb[0].mxu0
          %v4129 = vadd.f32 0.0, %v4128
          %v4130 = vpop.f32.mrb[0].mxu0
          %4131 = vmatprep.mubr.bf16.mxu0 0
          %4132 = vmatmul.mubr.bf16.gmra.mrb[0].mxu0 %v4036
          %v4133 = vpop.f32.mrb[0].mxu0
          %v4134 = vadd.f32 0.0, %v4133
          %v4135 = vpop.f32.mrb[0].mxu0
          %v4136 = vpop.f32.mrb[0].mxu0
          %v4137 = vadd.f32 0.0, %v4136
          %v4138 = vpop.f32.mrb[0].mxu0
          %4139 = vdwg.mxu0
          %v4140 = vadd.f32 %v3994, %v4073
          %v4141 = vadd.f32 %v3995, %v4075
          %v4142 = vadd.f32 %v3996, %v4126
          %v4143 = vadd.f32 %v3997, %v4077
          %v4144 = vadd.f32 %v3998, %v4079
          %v4145 = vadd.f32 %v3999, %v4129
          %v4146 = vadd.f32 %v4000, %v4083
          %v4147 = vadd.f32 %v4001, %v4085
          %v4148 = vadd.f32 %v4002, %v4134
          %v4149 = vadd.f32 %v4003, %v4087
          %v4150 = vadd.f32 %v4004, %v4089
          %v4151 = vadd.f32 %v4005, %v4137
          %4152 = vrot.lane.b32.xlu0 %v3884, 64
          %v4153 = vpop.permute.xlu0 %4152
          %4154 = vrot.lane.b32.xlu0 %v3885, 64
          %v4155 = vpop.permute.xlu0 %4154
          %4156 = vrot.lane.b32.xlu0 %v3275, 111
          %v4157 = vpop.permute.xlu0 %4156
          %4158 = vrot.lane.b32.xlu0 %v3276, 111
          %v4159 = vpop.permute.xlu0 %4158
          %4160 = vrot.lane.b32.xlu0 %v3277, 111
          %v4161 = vpop.permute.xlu0 %4160
          %4162 = vrot.lane.b32.xlu0 %v3279, 111
          %v4163 = vpop.permute.xlu0 %4162
          %4164 = vrot.lane.b32.xlu0 %v3280, 111
          %v4165 = vpop.permute.xlu0 %4164
          %4166 = vrot.lane.b32.xlu0 %v3281, 111
          %v4167 = vpop.permute.xlu0 %4166
          %v4168 = vsel %vm1281, %v4157, %v4159
          %v4169 = vsel %vm1281, %v4159, %v4161
          %v4170 = vsel %vm1281, %v4163, %v4165
          %v4171 = vsel %vm1281, %v4165, %v4167
          %v4179 = vsel %vm1911, %v4153, 0
          %v4182 = vsel %vm1911, %v4155, 0
          %4184 = vmatprep.subr.bf16.mxu0 %v4169
          %4185 = vmatpush1.bf16.msra.mxu0 %v4168
          %4186 = vmatprep.subr.bf16.mxu0 %v4171
          %4187 = vmatpush1.bf16.msra.mxu0 %v4170
          %4188 = vmatprep.subr.bf16.mxu0 0
          %4189 = vmatpush1.bf16.msra.mxu0 0
          %4190 = vmatprep.subr.bf16.mxu0 0
          %4191 = vmatpush1.bf16.msra.mxu0 0
          %4192 = vmatprep.subr.bf16.mxu0 0
          %4193 = vmatpush1.bf16.msra.mxu0 0
          %4194 = vmatprep.subr.bf16.mxu0 0
          %4195 = vmatpush1.bf16.msra.mxu0 0
          %4196 = vmatprep.subr.bf16.mxu0 0
          %4197 = vmatpush1.bf16.msra.mxu0 0
          %4198 = vmatprep.subr.bf16.mxu0 0
          %4199 = vmatpush1.bf16.msra.mxu0 0
          %4200 = vmatprep.subr.bf16.mxu0 0
          %4201 = vmatpush1.bf16.msra.mxu0 0
          %4202 = vmatprep.subr.bf16.mxu0 0
          %4203 = vmatpush1.bf16.msra.mxu0 0
          %4204 = vmatprep.subr.bf16.mxu0 0
          %4205 = vmatpush1.bf16.msra.mxu0 0
          %4206 = vmatprep.subr.bf16.mxu0 0
          %4207 = vmatpush1.bf16.msra.mxu0 0
          %4208 = vmatprep.subr.bf16.mxu0 0
          %4209 = vmatpush1.bf16.msra.mxu0 0
          %4210 = vmatprep.subr.bf16.mxu0 0
          %4211 = vmatpush1.bf16.msra.mxu0 0
          %4212 = vmatprep.subr.bf16.mxu0 0
          %4213 = vmatpush1.bf16.msra.mxu0 0
          %4214 = vmatprep.subr.bf16.mxu0 0
          %4215 = vmatpush1.bf16.msra.mxu0 0
          %4216 = vmatprep.mubr.bf16.mxu0 0
          %4217 = vmatmul.mubr.bf16.gmra.mrb[0].mxu0 %v4179
          %v4218 = vpop.f32.mrb[0].mxu0
          %v4219 = vadd.f32 0.0, %v4218
          %v4220 = vpop.f32.mrb[0].mxu0
          %v4221 = vadd.f32 0.0, %v4220
          %v4222 = vpop.f32.mrb[0].mxu0
          %v4223 = vadd.f32 0.0, %v4222
          %v4224 = vpop.f32.mrb[0].mxu0
          %v4225 = vadd.f32 0.0, %v4224
          %4226 = vmatprep.mubr.bf16.mxu0 0
          %4227 = vmatmul.mubr.bf16.gmra.mrb[0].mxu0 %v4182
          %v4228 = vpop.f32.mrb[0].mxu0
          %v4229 = vadd.f32 0.0, %v4228
          %v4230 = vpop.f32.mrb[0].mxu0
          %v4231 = vadd.f32 0.0, %v4230
          %v4232 = vpop.f32.mrb[0].mxu0
          %v4233 = vadd.f32 0.0, %v4232
          %v4234 = vpop.f32.mrb[0].mxu0
          %v4235 = vadd.f32 0.0, %v4234
          %4236 = vdwg.mxu0
          %4237 = vmatprep.subr.bf16.mxu0 0
          %4238 = vmatpush1.bf16.msra.mxu0 %v4161
          %4239 = vmatprep.subr.bf16.mxu0 0
          %4240 = vmatpush1.bf16.msra.mxu0 %v4167
          %4241 = vmatprep.subr.bf16.mxu0 0
          %4242 = vmatpush1.bf16.msra.mxu0 0
          %4243 = vmatprep.subr.bf16.mxu0 0
          %4244 = vmatpush1.bf16.msra.mxu0 0
          %4245 = vmatprep.subr.bf16.mxu0 0
          %4246 = vmatpush1.bf16.msra.mxu0 0
          %4247 = vmatprep.subr.bf16.mxu0 0
          %4248 = vmatpush1.bf16.msra.mxu0 0
          %4249 = vmatprep.subr.bf16.mxu0 0
          %4250 = vmatpush1.bf16.msra.mxu0 0
          %4251 = vmatprep.subr.bf16.mxu0 0
          %4252 = vmatpush1.bf16.msra.mxu0 0
          %4253 = vmatprep.subr.bf16.mxu0 0
          %4254 = vmatpush1.bf16.msra.mxu0 0
          %4255 = vmatprep.subr.bf16.mxu0 0
          %4256 = vmatpush1.bf16.msra.mxu0 0
          %4257 = vmatprep.subr.bf16.mxu0 0
          %4258 = vmatpush1.bf16.msra.mxu0 0
          %4259 = vmatprep.subr.bf16.mxu0 0
          %4260 = vmatpush1.bf16.msra.mxu0 0
          %4261 = vmatprep.subr.bf16.mxu0 0
          %4262 = vmatpush1.bf16.msra.mxu0 0
          %4263 = vmatprep.subr.bf16.mxu0 0
          %4264 = vmatpush1.bf16.msra.mxu0 0
          %4265 = vmatprep.subr.bf16.mxu0 0
          %4266 = vmatpush1.bf16.msra.mxu0 0
          %4267 = vmatprep.subr.bf16.mxu0 0
          %4268 = vmatpush1.bf16.msra.mxu0 0
          %4269 = vmatprep.mubr.bf16.mxu0 0
          %4270 = vmatmul.mubr.bf16.gmra.mrb[0].mxu0 %v4179
          %v4271 = vpop.f32.mrb[0].mxu0
          %v4272 = vadd.f32 0.0, %v4271
          %v4273 = vpop.f32.mrb[0].mxu0
          %v4274 = vpop.f32.mrb[0].mxu0
          %v4275 = vadd.f32 0.0, %v4274
          %v4276 = vpop.f32.mrb[0].mxu0
          %4277 = vmatprep.mubr.bf16.mxu0 0
          %4278 = vmatmul.mubr.bf16.gmra.mrb[0].mxu0 %v4182
          %v4279 = vpop.f32.mrb[0].mxu0
          %v4280 = vadd.f32 0.0, %v4279
          %v4281 = vpop.f32.mrb[0].mxu0
          %v4282 = vpop.f32.mrb[0].mxu0
          %v4283 = vadd.f32 0.0, %v4282
          %v4284 = vpop.f32.mrb[0].mxu0
          %4285 = vdwg.mxu0
          %v4286 = vadd.f32 %v4140, %v4219
          %v4287 = vadd.f32 %v4141, %v4221
          %v4288 = vadd.f32 %v4142, %v4272
          %v4289 = vadd.f32 %v4143, %v4223
          %v4290 = vadd.f32 %v4144, %v4225
          %v4291 = vadd.f32 %v4145, %v4275
          %v4292 = vadd.f32 %v4146, %v4229
          %v4293 = vadd.f32 %v4147, %v4231
          %v4294 = vadd.f32 %v4148, %v4280
          %v4295 = vadd.f32 %v4149, %v4233
          %v4296 = vadd.f32 %v4150, %v4235
          %v4297 = vadd.f32 %v4151, %v4283
          %4298 = vrot.lane.b32.xlu0 %v3884, 32
          %v4299 = vpop.permute.xlu0 %4298
          %4300 = vrot.lane.b32.xlu0 %v3885, 32
          %v4301 = vpop.permute.xlu0 %4300
          %4302 = vrot.lane.b32.xlu0 %v3275, 110
          %v4303 = vpop.permute.xlu0 %4302
          %4304 = vrot.lane.b32.xlu0 %v3276, 110
          %v4305 = vpop.permute.xlu0 %4304
          %4306 = vrot.lane.b32.xlu0 %v3277, 110
          %v4307 = vpop.permute.xlu0 %4306
          %4308 = vrot.lane.b32.xlu0 %v3279, 110
          %v4309 = vpop.permute.xlu0 %4308
          %4310 = vrot.lane.b32.xlu0 %v3280, 110
          %v4311 = vpop.permute.xlu0 %4310
          %4312 = vrot.lane.b32.xlu0 %v3281, 110
          %v4313 = vpop.permute.xlu0 %4312
          %v4314 = vsel %vm1441, %v4303, %v4305
          %v4315 = vsel %vm1441, %v4305, %v4307
          %v4316 = vsel %vm1441, %v4309, %v4311
          %v4317 = vsel %vm1441, %v4311, %v4313
          %v4325 = vsel %vm1911, %v4299, 0
          %v4328 = vsel %vm1911, %v4301, 0
          %4330 = vmatprep.subr.bf16.mxu0 %v4315
          %4331 = vmatpush1.bf16.msra.mxu0 %v4314
          %4332 = vmatprep.subr.bf16.mxu0 %v4317
          %4333 = vmatpush1.bf16.msra.mxu0 %v4316
          %4334 = vmatprep.subr.bf16.mxu0 0
          %4335 = vmatpush1.bf16.msra.mxu0 0
          %4336 = vmatprep.subr.bf16.mxu0 0
          %4337 = vmatpush1.bf16.msra.mxu0 0
          %4338 = vmatprep.subr.bf16.mxu0 0
          %4339 = vmatpush1.bf16.msra.mxu0 0
          %4340 = vmatprep.subr.bf16.mxu0 0
          %4341 = vmatpush1.bf16.msra.mxu0 0
          %4342 = vmatprep.subr.bf16.mxu0 0
          %4343 = vmatpush1.bf16.msra.mxu0 0
          %4344 = vmatprep.subr.bf16.mxu0 0
          %4345 = vmatpush1.bf16.msra.mxu0 0
          %4346 = vmatprep.subr.bf16.mxu0 0
          %4347 = vmatpush1.bf16.msra.mxu0 0
          %4348 = vmatprep.subr.bf16.mxu0 0
          %4349 = vmatpush1.bf16.msra.mxu0 0
          %4350 = vmatprep.subr.bf16.mxu0 0
          %4351 = vmatpush1.bf16.msra.mxu0 0
          %4352 = vmatprep.subr.bf16.mxu0 0
          %4353 = vmatpush1.bf16.msra.mxu0 0
          %4354 = vmatprep.subr.bf16.mxu0 0
          %4355 = vmatpush1.bf16.msra.mxu0 0
          %4356 = vmatprep.subr.bf16.mxu0 0
          %4357 = vmatpush1.bf16.msra.mxu0 0
          %4358 = vmatprep.subr.bf16.mxu0 0
          %4359 = vmatpush1.bf16.msra.mxu0 0
          %4360 = vmatprep.subr.bf16.mxu0 0
          %4361 = vmatpush1.bf16.msra.mxu0 0
          %4362 = vmatprep.mubr.bf16.mxu0 0
          %4363 = vmatmul.mubr.bf16.gmra.mrb[0].mxu0 %v4325
          %v4364 = vpop.f32.mrb[0].mxu0
          %v4365 = vadd.f32 0.0, %v4364
          %v4366 = vpop.f32.mrb[0].mxu0
          %v4367 = vadd.f32 0.0, %v4366
          %v4368 = vpop.f32.mrb[0].mxu0
          %v4369 = vadd.f32 0.0, %v4368
          %v4370 = vpop.f32.mrb[0].mxu0
          %v4371 = vadd.f32 0.0, %v4370
          %4372 = vmatprep.mubr.bf16.mxu0 0
          %4373 = vmatmul.mubr.bf16.gmra.mrb[0].mxu0 %v4328
          %v4374 = vpop.f32.mrb[0].mxu0
          %v4375 = vadd.f32 0.0, %v4374
          %v4376 = vpop.f32.mrb[0].mxu0
          %v4377 = vadd.f32 0.0, %v4376
          %v4378 = vpop.f32.mrb[0].mxu0
          %v4379 = vadd.f32 0.0, %v4378
          %v4380 = vpop.f32.mrb[0].mxu0
          %v4381 = vadd.f32 0.0, %v4380
          %4382 = vdwg.mxu0
          %4383 = vmatprep.subr.bf16.mxu0 0
          %4384 = vmatpush1.bf16.msra.mxu0 %v4307
          %4385 = vmatprep.subr.bf16.mxu0 0
          %4386 = vmatpush1.bf16.msra.mxu0 %v4313
          %4387 = vmatprep.subr.bf16.mxu0 0
          %4388 = vmatpush1.bf16.msra.mxu0 0
          %4389 = vmatprep.subr.bf16.mxu0 0
          %4390 = vmatpush1.bf16.msra.mxu0 0
          %4391 = vmatprep.subr.bf16.mxu0 0
          %4392 = vmatpush1.bf16.msra.mxu0 0
          %4393 = vmatprep.subr.bf16.mxu0 0
          %4394 = vmatpush1.bf16.msra.mxu0 0
          %4395 = vmatprep.subr.bf16.mxu0 0
          %4396 = vmatpush1.bf16.msra.mxu0 0
          %4397 = vmatprep.subr.bf16.mxu0 0
          %4398 = vmatpush1.bf16.msra.mxu0 0
          %4399 = vmatprep.subr.bf16.mxu0 0
          %4400 = vmatpush1.bf16.msra.mxu0 0
          %4401 = vmatprep.subr.bf16.mxu0 0
          %4402 = vmatpush1.bf16.msra.mxu0 0
          %4403 = vmatprep.subr.bf16.mxu0 0
          %4404 = vmatpush1.bf16.msra.mxu0 0
          %4405 = vmatprep.subr.bf16.mxu0 0
          %4406 = vmatpush1.bf16.msra.mxu0 0
          %4407 = vmatprep.subr.bf16.mxu0 0
          %4408 = vmatpush1.bf16.msra.mxu0 0
          %4409 = vmatprep.subr.bf16.mxu0 0
          %4410 = vmatpush1.bf16.msra.mxu0 0
          %4411 = vmatprep.subr.bf16.mxu0 0
          %4412 = vmatpush1.bf16.msra.mxu0 0
          %4413 = vmatprep.subr.bf16.mxu0 0
          %4414 = vmatpush1.bf16.msra.mxu0 0
          %4415 = vmatprep.mubr.bf16.mxu0 0
          %4416 = vmatmul.mubr.bf16.gmra.mrb[0].mxu0 %v4325
          %v4417 = vpop.f32.mrb[0].mxu0
          %v4418 = vadd.f32 0.0, %v4417
          %v4419 = vpop.f32.mrb[0].mxu0
          %v4420 = vpop.f32.mrb[0].mxu0
          %v4421 = vadd.f32 0.0, %v4420
          %v4422 = vpop.f32.mrb[0].mxu0
          %4423 = vmatprep.mubr.bf16.mxu0 0
          %4424 = vmatmul.mubr.bf16.gmra.mrb[0].mxu0 %v4328
          %v4425 = vpop.f32.mrb[0].mxu0
          %v4426 = vadd.f32 0.0, %v4425
          %v4427 = vpop.f32.mrb[0].mxu0
          %v4428 = vpop.f32.mrb[0].mxu0
          %v4429 = vadd.f32 0.0, %v4428
          %v4430 = vpop.f32.mrb[0].mxu0
          %4431 = vdwg.mxu0
          %v4432 = vadd.f32 %v4286, %v4365
          %v4433 = vadd.f32 %v4287, %v4367
          %v4434 = vadd.f32 %v4288, %v4418
          %v4435 = vadd.f32 %v4289, %v4369
          %v4436 = vadd.f32 %v4290, %v4371
          %v4437 = vadd.f32 %v4291, %v4421
          %v4438 = vadd.f32 %v4292, %v4375
          %v4439 = vadd.f32 %v4293, %v4377
          %v4440 = vadd.f32 %v4294, %v4426
          %v4441 = vadd.f32 %v4295, %v4379
          %v4442 = vadd.f32 %v4296, %v4381
          %v4443 = vadd.f32 %v4297, %v4429
          %v4448 = vunpack.c.l.b16 %v3261
          %v4449 = vunpack.c.l.b16 %v3263
          %v4450 = vunpack.c.l.b16 %v3265
          %v4451 = vunpack.c.l.b16 %v3267
          %v4452 = vpack.c.b16 %v4449, %v4448
          %v4453 = vpack.c.b16 %v4451, %v4450
          %4454 = vrot.lane.b32.xlu0 %v3275, 109
          %v4455 = vpop.permute.xlu0 %4454
          %4456 = vrot.lane.b32.xlu0 %v3276, 109
          %v4457 = vpop.permute.xlu0 %4456
          %4458 = vrot.lane.b32.xlu0 %v3277, 109
          %v4459 = vpop.permute.xlu0 %4458
          %4460 = vrot.lane.b32.xlu0 %v3279, 109
          %v4461 = vpop.permute.xlu0 %4460
          %4462 = vrot.lane.b32.xlu0 %v3280, 109
          %v4463 = vpop.permute.xlu0 %4462
          %4464 = vrot.lane.b32.xlu0 %v3281, 109
          %v4465 = vpop.permute.xlu0 %4464
          %v4466 = vsel %vm1601, %v4455, %v4457
          %v4467 = vsel %vm1601, %v4457, %v4459
          %v4468 = vsel %vm1601, %v4461, %v4463
          %v4469 = vsel %vm1601, %v4463, %v4465
          %v4477 = vsel %vm1911, %v4452, 0
          %v4480 = vsel %vm1911, %v4453, 0
          %4482 = vmatprep.subr.bf16.mxu0 %v4467
          %4483 = vmatpush1.bf16.msra.mxu0 %v4466
          %4484 = vmatprep.subr.bf16.mxu0 %v4469
          %4485 = vmatpush1.bf16.msra.mxu0 %v4468
          %4486 = vmatprep.subr.bf16.mxu0 0
          %4487 = vmatpush1.bf16.msra.mxu0 0
          %4488 = vmatprep.subr.bf16.mxu0 0
          %4489 = vmatpush1.bf16.msra.mxu0 0
          %4490 = vmatprep.subr.bf16.mxu0 0
          %4491 = vmatpush1.bf16.msra.mxu0 0
          %4492 = vmatprep.subr.bf16.mxu0 0
          %4493 = vmatpush1.bf16.msra.mxu0 0
          %4494 = vmatprep.subr.bf16.mxu0 0
          %4495 = vmatpush1.bf16.msra.mxu0 0
          %4496 = vmatprep.subr.bf16.mxu0 0
          %4497 = vmatpush1.bf16.msra.mxu0 0
          %4498 = vmatprep.subr.bf16.mxu0 0
          %4499 = vmatpush1.bf16.msra.mxu0 0
          %4500 = vmatprep.subr.bf16.mxu0 0
          %4501 = vmatpush1.bf16.msra.mxu0 0
          %4502 = vmatprep.subr.bf16.mxu0 0
          %4503 = vmatpush1.bf16.msra.mxu0 0
          %4504 = vmatprep.subr.bf16.mxu0 0
          %4505 = vmatpush1.bf16.msra.mxu0 0
          %4506 = vmatprep.subr.bf16.mxu0 0
          %4507 = vmatpush1.bf16.msra.mxu0 0
          %4508 = vmatprep.subr.bf16.mxu0 0
          %4509 = vmatpush1.bf16.msra.mxu0 0
          %4510 = vmatprep.subr.bf16.mxu0 0
          %4511 = vmatpush1.bf16.msra.mxu0 0
          %4512 = vmatprep.subr.bf16.mxu0 0
          %4513 = vmatpush1.bf16.msra.mxu0 0
          %4514 = vmatprep.mubr.bf16.mxu0 0
          %4515 = vmatmul.mubr.bf16.gmra.mrb[0].mxu0 %v4477
          %v4516 = vpop.f32.mrb[0].mxu0
          %v4517 = vadd.f32 0.0, %v4516
          %v4518 = vpop.f32.mrb[0].mxu0
          %v4519 = vadd.f32 0.0, %v4518
          %v4520 = vpop.f32.mrb[0].mxu0
          %v4521 = vadd.f32 0.0, %v4520
          %v4522 = vpop.f32.mrb[0].mxu0
          %v4523 = vadd.f32 0.0, %v4522
          %4524 = vmatprep.mubr.bf16.mxu0 0
          %4525 = vmatmul.mubr.bf16.gmra.mrb[0].mxu0 %v4480
          %v4526 = vpop.f32.mrb[0].mxu0
          %v4527 = vadd.f32 0.0, %v4526
          %v4528 = vpop.f32.mrb[0].mxu0
          %v4529 = vadd.f32 0.0, %v4528
          %v4530 = vpop.f32.mrb[0].mxu0
          %v4531 = vadd.f32 0.0, %v4530
          %v4532 = vpop.f32.mrb[0].mxu0
          %v4533 = vadd.f32 0.0, %v4532
          %4534 = vdwg.mxu0
          %4535 = vmatprep.subr.bf16.mxu0 0
          %4536 = vmatpush1.bf16.msra.mxu0 %v4459
          %4537 = vmatprep.subr.bf16.mxu0 0
          %4538 = vmatpush1.bf16.msra.mxu0 %v4465
          %4539 = vmatprep.subr.bf16.mxu0 0
          %4540 = vmatpush1.bf16.msra.mxu0 0
          %4541 = vmatprep.subr.bf16.mxu0 0
          %4542 = vmatpush1.bf16.msra.mxu0 0
          %4543 = vmatprep.subr.bf16.mxu0 0
          %4544 = vmatpush1.bf16.msra.mxu0 0
          %4545 = vmatprep.subr.bf16.mxu0 0
          %4546 = vmatpush1.bf16.msra.mxu0 0
          %4547 = vmatprep.subr.bf16.mxu0 0
          %4548 = vmatpush1.bf16.msra.mxu0 0
          %4549 = vmatprep.subr.bf16.mxu0 0
          %4550 = vmatpush1.bf16.msra.mxu0 0
          %4551 = vmatprep.subr.bf16.mxu0 0
          %4552 = vmatpush1.bf16.msra.mxu0 0
          %4553 = vmatprep.subr.bf16.mxu0 0
          %4554 = vmatpush1.bf16.msra.mxu0 0
          %4555 = vmatprep.subr.bf16.mxu0 0
          %4556 = vmatpush1.bf16.msra.mxu0 0
          %4557 = vmatprep.subr.bf16.mxu0 0
          %4558 = vmatpush1.bf16.msra.mxu0 0
          %4559 = vmatprep.subr.bf16.mxu0 0
          %4560 = vmatpush1.bf16.msra.mxu0 0
          %4561 = vmatprep.subr.bf16.mxu0 0
          %4562 = vmatpush1.bf16.msra.mxu0 0
          %4563 = vmatprep.subr.bf16.mxu0 0
          %4564 = vmatpush1.bf16.msra.mxu0 0
          %4565 = vmatprep.subr.bf16.mxu0 0
          %4566 = vmatpush1.bf16.msra.mxu0 0
          %4567 = vmatprep.mubr.bf16.mxu0 0
          %4568 = vmatmul.mubr.bf16.gmra.mrb[0].mxu0 %v4477
          %v4569 = vpop.f32.mrb[0].mxu0
          %v4570 = vadd.f32 0.0, %v4569
          %v4571 = vpop.f32.mrb[0].mxu0
          %v4572 = vpop.f32.mrb[0].mxu0
          %v4573 = vadd.f32 0.0, %v4572
          %v4574 = vpop.f32.mrb[0].mxu0
          %4575 = vmatprep.mubr.bf16.mxu0 0
          %4576 = vmatmul.mubr.bf16.gmra.mrb[0].mxu0 %v4480
          %v4577 = vpop.f32.mrb[0].mxu0
          %v4578 = vadd.f32 0.0, %v4577
          %v4579 = vpop.f32.mrb[0].mxu0
          %v4580 = vpop.f32.mrb[0].mxu0
          %v4581 = vadd.f32 0.0, %v4580
          %v4582 = vpop.f32.mrb[0].mxu0
          %4583 = vdwg.mxu0
          %v4584 = vadd.f32 %v4432, %v4517
          %v4585 = vadd.f32 %v4433, %v4519
          %v4586 = vadd.f32 %v4434, %v4570
          %v4587 = vadd.f32 %v4435, %v4521
          %v4588 = vadd.f32 %v4436, %v4523
          %v4589 = vadd.f32 %v4437, %v4573
          %v4590 = vadd.f32 %v4438, %v4527
          %v4591 = vadd.f32 %v4439, %v4529
          %v4592 = vadd.f32 %v4440, %v4578
          %v4593 = vadd.f32 %v4441, %v4531
          %v4594 = vadd.f32 %v4442, %v4533
          %v4595 = vadd.f32 %v4443, %v4581
          %4597 = vset.pattern.permute.xlu0 0
          %4598 = vperm.xlu0 %4597, %v3270
          %v4599 = vpop.permute.xlu0 %4598
          %4602 = vset.pattern.permute.xlu0 0
          %4603 = vperm.xlu0 %4602, %v3271
          %v4604 = vpop.permute.xlu0 %4603
          %4607 = vset.pattern.permute.xlu0 0
          %4608 = vperm.xlu0 %4607, %v3272
          %v4609 = vpop.permute.xlu0 %4608
          %4612 = vset.pattern.permute.xlu0 0
          %4613 = vperm.xlu0 %4612, %v3273
          %v4614 = vpop.permute.xlu0 %4613
          %v4616 = vadd.f32 %v4584, %v4599
          %v4617 = vadd.f32 %v4585, %v4599
          %v4618 = vadd.f32 %v4586, %v4599
          %v4619 = vadd.f32 %v4587, %v4604
          %v4620 = vadd.f32 %v4588, %v4604
          %v4621 = vadd.f32 %v4589, %v4604
          %v4622 = vadd.f32 %v4590, %v4609
          %v4623 = vadd.f32 %v4591, %v4609
          %v4624 = vadd.f32 %v4592, %v4609
          %v4625 = vadd.f32 %v4593, %v4614
          %v4626 = vadd.f32 %v4594, %v4614
          %v4627 = vadd.f32 %v4595, %v4614
          %v4628 = vadd.f32 %v1811, %v4616
          %v4629 = vadd.f32 %v1812, %v4617
          %v4630 = vadd.f32 %v1813, %v4618
          %v4631 = vadd.f32 %v1814, %v4619
          %v4632 = vadd.f32 %v1815, %v4620
          %v4633 = vadd.f32 %v1816, %v4621
          %v4634 = vadd.f32 %v1817, %v4622
          %v4635 = vadd.f32 %v1818, %v4623
          %v4636 = vadd.f32 %v1819, %v4624
          %v4637 = vadd.f32 %v1820, %v4625
          %v4638 = vadd.f32 %v1821, %v4626
          %v4639 = vadd.f32 %v1822, %v4627
          %v4640 = vmul.f32 %v4628, %v1769
          %v4641 = vmul.f32 %v4629, %v1773
          %v4642 = vmul.f32 %v4630, %v1777
          %v4643 = vmul.f32 %v4631, %v1769
          %v4644 = vmul.f32 %v4632, %v1773
          %v4645 = vmul.f32 %v4633, %v1777
          %v4646 = vmul.f32 %v4634, %v1769
          %v4647 = vmul.f32 %v4635, %v1773
          %v4648 = vmul.f32 %v4636, %v1777
          %v4649 = vmul.f32 %v4637, %v1769
          %v4650 = vmul.f32 %v4638, %v1773
          %v4651 = vmul.f32 %v4639, %v1777
          %4652 = vst [vmem:[#allocation4] sm:$0xff] %v4640
          %4653 = vst [vmem:[#allocation4 + $0x8] sm:$0xff] %v4641
          %4654 = vst.msk [vmem:[#allocation4 + $0x10] sm:$0xff] %vm276, %v4642
          %4655 = vst [vmem:[#allocation4 + $0x18] sm:$0xff] %v4643
          %4656 = vst [vmem:[#allocation4 + $0x20] sm:$0xff] %v4644
          %4657 = vst.msk [vmem:[#allocation4 + $0x28] sm:$0xff] %vm276, %v4645
          %4658 = vst [vmem:[#allocation4 + $0x30] sm:$0xff] %v4646
          %4659 = vst [vmem:[#allocation4 + $0x38] sm:$0xff] %v4647
          %4660 = vst.msk [vmem:[#allocation4 + $0x40] sm:$0xff] %vm276, %v4648
          %4661 = vst [vmem:[#allocation4 + $0x48] sm:$0xff] %v4649
          %4662 = vst [vmem:[#allocation4 + $0x50] sm:$0xff] %v4650
          %4663 = vst.msk [vmem:[#allocation4 + $0x58] sm:$0xff] %vm276, %v4651
        $region53: #{tpu_custom_call.1} parent=43 // loop_footer
          %s1810 = sadd.s32 1, %s1806
        $region54: #{tpu_custom_call.1} parent=43 // loop_footer_branch
          %1805 = sbr.rel target = $region50
        $region55: #{tpu_custom_call.1} parent=43 // loop_exit
          _
        %v4664 = vld [vmem:[#allocation4] sm:$0xff]
        %v4665 = vld [vmem:[#allocation4 + $0x8] sm:$0xff]
        %v4666 = vld [vmem:[#allocation4 + $0x10] sm:$0xff]
        %v4667 = vld [vmem:[#allocation4 + $0x18] sm:$0xff]
        %v4668 = vld [vmem:[#allocation4 + $0x20] sm:$0xff]
        %v4669 = vld [vmem:[#allocation4 + $0x28] sm:$0xff]
        %v4670 = vld [vmem:[#allocation4 + $0x30] sm:$0xff]
        %v4671 = vld [vmem:[#allocation4 + $0x38] sm:$0xff]
        %v4672 = vld [vmem:[#allocation4 + $0x40] sm:$0xff]
        %v4673 = vld [vmem:[#allocation4 + $0x48] sm:$0xff]
        %v4674 = vld [vmem:[#allocation4 + $0x50] sm:$0xff]
        %v4675 = vld [vmem:[#allocation4 + $0x58] sm:$0xff]
        %4676 = vst [vmem:[%s259] sm:$0xff] %v4664
        %4677 = vst [vmem:[%s259 + $0x8] sm:$0xff] %v4665
        %4678 = vst.msk [vmem:[%s259 + $0x10] sm:$0xff] %vm276, %v4666
        %4679 = vst [vmem:[%s259 + $0x18] sm:$0xff] %v4667
        %4680 = vst [vmem:[%s259 + $0x20] sm:$0xff] %v4668
        %4681 = vst.msk [vmem:[%s259 + $0x28] sm:$0xff] %vm276, %v4669
        %4682 = vst [vmem:[%s259 + $0x30] sm:$0xff] %v4670
        %4683 = vst [vmem:[%s259 + $0x38] sm:$0xff] %v4671
        %4684 = vst.msk [vmem:[%s259 + $0x40] sm:$0xff] %vm276, %v4672
        %4685 = vst [vmem:[%s259 + $0x48] sm:$0xff] %v4673
        %4686 = vst [vmem:[%s259 + $0x50] sm:$0xff] %v4674
        %4687 = vst.msk [vmem:[%s259 + $0x58] sm:$0xff] %vm276, %v4675
        %s4688 = sand.u32 %s160, 1
        %s4689 = scalar_lea.sflag [#allocation7], %s4688
        %s4690 = sand.u32 %s160, 1
        %s4691 = smul.addr %s4690, 96
        %s4692 = scalar_lea.vmem [#allocation8], %s4691
        // Predicated region
        $region56: #{tpu_custom_call.1} parent=43 // pred_check
          %p4693 = pneg %p170
        $region57: #{tpu_custom_call.1} parent=43 // pred_check_branch
          %4695 = sbr.rel (%p4693) target = $region59
        $region58: #{tpu_custom_call.1} parent=43 // pred_region
          %s4697 = ssub.s32 1536, 1536
          %4698 = vsyncadd %s4689, %s4697
          %s4699 = smul.addr %s21, 12
          %s4700 = smul.addr %s4699, 128
          %s4701 = scalar_lea.hbm %s6, %s4700
          %s4702 = sshll.u32 %s4692, 4
          %s4703 = int_to_ptr.vmem [resolvable:$true] %s4702
          %4708 = dma.vmem_to_hbm [thread:$0]  %s4703, 1536, %s4701, %s4689, 384, 384, 24
        $region59: #{tpu_custom_call.1} parent=43 // pred_fallthru
          _
      $region44: #{tpu_custom_call.1} parent=5 // pred_fallthru
        _
      %p4709 = scmp.le.s32.totalorder 2, %s16
      // Predicated region
      $region60: #{tpu_custom_call.1} parent=5 // pred_check
        %p4710 = pneg %p4709
      $region61: #{tpu_custom_call.1} parent=5 // pred_check_branch
        %4712 = sbr.rel (%p4710) target = $region63
      $region62: #{tpu_custom_call.1} parent=5 // pred_region
        %s4713 = ssub.s32 %s16, 2
        // Predicated region
        $region64: #{tpu_custom_call.1} parent=62 // pred_check
          %p4714 = pneg %p176
        $region65: #{tpu_custom_call.1} parent=62 // pred_check_branch
          %4716 = sbr.rel (%p4714) target = $region67
        $region66: #{tpu_custom_call.1} parent=62 // pred_region
          %s4717 = sand.u32 %s161, 1
          %s4718 = scalar_lea.sflag [#allocation7], %s4717
          %s4719 = sand.u32 %s161, 1
          %s4720 = smul.addr %s4719, 96
          %s4721 = scalar_lea.vmem [#allocation8], %s4720
          %4722 = dma.done %s4718, 1536
        $region67: #{tpu_custom_call.1} parent=62 // pred_fallthru
          _
      $region63: #{tpu_custom_call.1} parent=5 // pred_fallthru
        _
    $region6: #{tpu_custom_call.1} parent=1 // loop_footer
      %s20 = sadd.s32 1, %s16
    $region7: #{tpu_custom_call.1} parent=1 // loop_footer_branch
      %15 = sbr.rel target = $region3
    $region8: #{tpu_custom_call.1} parent=1 // loop_exit
      _
    %4723 = vsyncpa [#allocation6], 1
    %s4724 = scalar_lea.sflag [#allocation6], 1
    %4725 = vsyncpa %s4724, 1
    %4726 = vsyncpa [#allocation7], 1
    %s4727 = scalar_lea.sflag [#allocation7], 1
    %4728 = vsyncpa %s4727, 1

</llo_original>
